<compile_context>
chip_gen: v7x
topology: tpu7x:2x2x1
jax: 0.10.0
libtpu: 0.0.40
codegen_flags: <defaults>
</compile_context>

<pallas_src>
import jax
import jax.numpy as jnp
from jax.experimental import pallas as pl
from jax.experimental.pallas import tpu as pltpu

_LANES = 128
_SUBLANES = 8


def _fused_lstm_kernel(x_ref, wih_ref, b_ref, whh_ref, fcw_ref, fcb_ref, out_ref):
    # x_ref:   (T*Bp, I)  time-major rows (t*Bp + n), batch zero-padded to Bp
    # wih_ref: (4, I, H)  per-gate W_ih^T, PyTorch gate order [i, f, g, o]
    # b_ref:   (4, 1, H)  per-gate folded bias (b_ih + b_hh)
    # whh_ref: (4, H, H)  per-gate W_hh^T
    # fcw_ref: (H, 128)   fc weight in lane 0, zeros elsewhere (lane-dense FC/output)
    # fcb_ref: (1, 1)     fc bias
    # out_ref: (Bp, 128)  dense output slab; real result in [:B, 0]
    Bp = out_ref.shape[0]
    H = whh_ref.shape[-1]
    T = x_ref.shape[0] // Bp

    x = x_ref[...]

    # Hoisted input projection: 4 per-gate matmuls over all T*Bp rows, done once,
    # entirely off the serial chain.  Each gate lands at lanes 0:H.
    xw = [
        jnp.dot(x, wih_ref[g], preferred_element_type=jnp.float32) + b_ref[g]
        for g in range(4)
    ]  # each (T*Bp, H)
    whh = [whh_ref[g] for g in range(4)]  # each (H, H), loaded once

    h = jnp.zeros((Bp, H), jnp.float32)
    c = jnp.zeros((Bp, H), jnp.float32)

    # Fully unrolled serial recurrence; only h @ W_hh_g + gate math is on the chain.
    # Gate tiles are lane-aligned with c/h, so no lane movement per step.
    for t in range(T):
        lo, hi = t * Bp, (t + 1) * Bp  # sublane-tile-aligned static slice (Bp == 8)
        gi = xw[0][lo:hi, :] + jnp.dot(h, whh[0], preferred_element_type=jnp.float32)
        gf = xw[1][lo:hi, :] + jnp.dot(h, whh[1], preferred_element_type=jnp.float32)
        gg = xw[2][lo:hi, :] + jnp.dot(h, whh[2], preferred_element_type=jnp.float32)
        go = xw[3][lo:hi, :] + jnp.dot(h, whh[3], preferred_element_type=jnp.float32)

        i_g = jax.nn.sigmoid(gi)
        f_g = jax.nn.sigmoid(gf)
        g_g = jnp.tanh(gg)
        o_g = jax.nn.sigmoid(go)

        c = f_g * c + i_g * g_g
        h = o_g * jnp.tanh(c)

    # Fused fc (H -> 1): padded (H, 128) weight makes the FC matmul produce the full
    # dense output tile directly -> unmasked store, single dense writeback DMA.
    out_ref[...] = (
        jnp.dot(h, fcw_ref[...], preferred_element_type=jnp.float32) + fcb_ref[...]
    )


def pack_params(w_ih, w_hh, b_ih, b_hh, fc_w, fc_b):
    """Repackage PyTorch-shaped parameters into the kernel's per-gate layout."""
    H = w_hh.shape[1]
    b = b_ih + b_hh
    wih_stack = jnp.stack([w_ih[g * H:(g + 1) * H, :].T for g in range(4)])  # (4, I, H)
    whh_stack = jnp.stack([w_hh[g * H:(g + 1) * H, :].T for g in range(4)])  # (4, H, H)
    b_stack = jnp.stack([b[g * H:(g + 1) * H].reshape(1, H) for g in range(4)])  # (4,1,H)
    fcw_pad = jnp.zeros((H, _LANES), jnp.float32).at[:, 0].set(fc_w[0])      # (H, 128)
    fcb = fc_b.reshape(1, 1)                                                 # (1, 1)
    return (wih_stack, b_stack, whh_stack, fcw_pad, fcb)


def multi_feature_lstm_forward(x, params):
    """x: (B, T, I) float32 (batch_first, as in PyTorch).  Returns (B, 1) float32."""
    wih_stack, b_stack, whh_stack, fcw_pad, fcb = params
    B, T, I = x.shape

    # Pad batch to a full sublane tile so every in-kernel op/store is dense.
    Bp = ((B + _SUBLANES - 1) // _SUBLANES) * _SUBLANES
    x_pad = jnp.pad(x, ((0, Bp - B), (0, 0), (0, 0)))
    x_flat = jnp.transpose(x_pad, (1, 0, 2)).reshape(T * Bp, I)  # time-major rows

    vmem = pl.BlockSpec(memory_space=pltpu.MemorySpace.VMEM)
    out = pl.pallas_call(
        _fused_lstm_kernel,
        out_shape=jax.ShapeDtypeStruct((Bp, _LANES), jnp.float32),
        in_specs=[vmem] * 6,
        out_specs=vmem,
    )(x_flat, wih_stack, b_stack, whh_stack, fcw_pad, fcb)

    return out[:B, :1]


def reference_forward(x, w_ih, w_hh, b_ih, b_hh, fc_w, fc_b):
    """Pure-JAX reference of the same LSTM+Linear forward (PyTorch semantics)."""
    B, T, _ = x.shape
    H = w_hh.shape[1]
    h = jnp.zeros((B, H), jnp.float32)
    c = jnp.zeros((B, H), jnp.float32)
    for t in range(T):
        gates = x[:, t, :] @ w_ih.T + h @ w_hh.T + b_ih + b_hh
        i_g = jax.nn.sigmoid(gates[:, 0 * H:1 * H])
        f_g = jax.nn.sigmoid(gates[:, 1 * H:2 * H])
        g_g = jnp.tanh(gates[:, 2 * H:3 * H])
        o_g = jax.nn.sigmoid(gates[:, 3 * H:4 * H])
        c = f_g * c + i_g * g_g
        h = o_g * jnp.tanh(c)
    return h @ fc_w.T + fc_b


if __name__ == "__main__":
    key = jax.random.PRNGKey(0)
    k_x, k_p = jax.random.split(key)

    B, T, I, H = 2, 8, 3, 16
    x = jax.random.normal(k_x, (B, T, I), jnp.float32)

    # Deterministic synthetic parameters with PyTorch-equivalent shapes.
    k1, k2, k3, k4, k5, k6 = jax.random.split(k_p, 6)
    scale = 1.0 / jnp.sqrt(H)
    w_ih = jax.random.uniform(k1, (4 * H, I), jnp.float32, -scale, scale)
    w_hh = jax.random.uniform(k2, (4 * H, H), jnp.float32, -scale, scale)
    b_ih = jax.random.uniform(k3, (4 * H,), jnp.float32, -scale, scale)
    b_hh = jax.random.uniform(k4, (4 * H,), jnp.float32, -scale, scale)
    fc_w = jax.random.uniform(k5, (1, H), jnp.float32, -scale, scale)
    fc_b = jax.random.uniform(k6, (1,), jnp.float32, -scale, scale)

    params = pack_params(w_ih, w_hh, b_ih, b_hh, fc_w, fc_b)

    out = jax.jit(multi_feature_lstm_forward)(x, params)
    out = jax.block_until_ready(out)

    ref = reference_forward(x, w_ih, w_hh, b_ih, b_hh, fc_w, fc_b)
    assert out.shape == (B, 1)
    assert jnp.allclose(out, ref, atol=1e-5, rtol=1e-5)

    print("KERNEL_OK")
</pallas_src>

<mosaic_0001>
module attributes {stable_mosaic.version = 11 : i64} {
  func.func @_fused_lstm_kernel(%arg0: memref<64x3xf32, #tpu.memory_space<vmem>>, %arg1: memref<4x3x16xf32, #tpu.memory_space<vmem>>, %arg2: memref<4x1x16xf32, #tpu.memory_space<vmem>>, %arg3: memref<4x16x16xf32, #tpu.memory_space<vmem>>, %arg4: memref<16x128xf32, #tpu.memory_space<vmem>>, %arg5: memref<1x1xf32, #tpu.memory_space<vmem>>, %arg6: memref<8x128xf32, #tpu.memory_space<vmem>>) attributes {dimension_semantics = [], scalar_prefetch = 0 : i64, scratch_operands = 0 : i64, tpu.core_type = #tpu.core_type<tc>} {
    %c0 = arith.constant 0 : index
    %c0_0 = arith.constant 0 : index
    %0 = vector.load %arg0[%c0, %c0_0] : memref<64x3xf32, #tpu.memory_space<vmem>>, vector<64x3xf32>
    %c0_1 = arith.constant 0 : index
    %c0_2 = arith.constant 0 : index
    %c0_3 = arith.constant 0 : index
    %1 = vector.load %arg1[%c0_1, %c0_2, %c0_3] : memref<4x3x16xf32, #tpu.memory_space<vmem>>, vector<1x3x16xf32>
    %2 = vector.shape_cast %1 : vector<1x3x16xf32> to vector<3x16xf32>
    %cst = arith.constant dense<0.000000e+00> : vector<64x16xf32>
    %3 = tpu.matmul %0, %2, %cst {dimension_numbers = #tpu.dot_dimension_numbers<[1], [0], [0], [1], [0, 0, 1, 1], [], []>} : vector<64x3xf32>, vector<3x16xf32>, vector<64x16xf32> -> vector<64x16xf32>
    %c0_4 = arith.constant 0 : index
    %c0_5 = arith.constant 0 : index
    %c0_6 = arith.constant 0 : index
    %4 = vector.load %arg2[%c0_4, %c0_5, %c0_6] : memref<4x1x16xf32, #tpu.memory_space<vmem>>, vector<1x1x16xf32>
    %5 = vector.shape_cast %4 : vector<1x1x16xf32> to vector<1x16xf32>
    %6 = vector.broadcast %5 : vector<1x16xf32> to vector<64x16xf32>
    %7 = arith.addf %3, %6 : vector<64x16xf32>
    %c1 = arith.constant 1 : index
    %c0_7 = arith.constant 0 : index
    %c0_8 = arith.constant 0 : index
    %8 = vector.load %arg1[%c1, %c0_7, %c0_8] : memref<4x3x16xf32, #tpu.memory_space<vmem>>, vector<1x3x16xf32>
    %9 = vector.shape_cast %8 : vector<1x3x16xf32> to vector<3x16xf32>
    %cst_9 = arith.constant dense<0.000000e+00> : vector<64x16xf32>
    %10 = tpu.matmul %0, %9, %cst_9 {dimension_numbers = #tpu.dot_dimension_numbers<[1], [0], [0], [1], [0, 0, 1, 1], [], []>} : vector<64x3xf32>, vector<3x16xf32>, vector<64x16xf32> -> vector<64x16xf32>
    %c1_10 = arith.constant 1 : index
    %c0_11 = arith.constant 0 : index
    %c0_12 = arith.constant 0 : index
    %11 = vector.load %arg2[%c1_10, %c0_11, %c0_12] : memref<4x1x16xf32, #tpu.memory_space<vmem>>, vector<1x1x16xf32>
    %12 = vector.shape_cast %11 : vector<1x1x16xf32> to vector<1x16xf32>
    %13 = vector.broadcast %12 : vector<1x16xf32> to vector<64x16xf32>
    %14 = arith.addf %10, %13 : vector<64x16xf32>
    %c2 = arith.constant 2 : index
    %c0_13 = arith.constant 0 : index
    %c0_14 = arith.constant 0 : index
    %15 = vector.load %arg1[%c2, %c0_13, %c0_14] : memref<4x3x16xf32, #tpu.memory_space<vmem>>, vector<1x3x16xf32>
    %16 = vector.shape_cast %15 : vector<1x3x16xf32> to vector<3x16xf32>
    %cst_15 = arith.constant dense<0.000000e+00> : vector<64x16xf32>
    %17 = tpu.matmul %0, %16, %cst_15 {dimension_numbers = #tpu.dot_dimension_numbers<[1], [0], [0], [1], [0, 0, 1, 1], [], []>} : vector<64x3xf32>, vector<3x16xf32>, vector<64x16xf32> -> vector<64x16xf32>
    %c2_16 = arith.constant 2 : index
    %c0_17 = arith.constant 0 : index
    %c0_18 = arith.constant 0 : index
    %18 = vector.load %arg2[%c2_16, %c0_17, %c0_18] : memref<4x1x16xf32, #tpu.memory_space<vmem>>, vector<1x1x16xf32>
    %19 = vector.shape_cast %18 : vector<1x1x16xf32> to vector<1x16xf32>
    %20 = vector.broadcast %19 : vector<1x16xf32> to vector<64x16xf32>
    %21 = arith.addf %17, %20 : vector<64x16xf32>
    %c3 = arith.constant 3 : index
    %c0_19 = arith.constant 0 : index
    %c0_20 = arith.constant 0 : index
    %22 = vector.load %arg1[%c3, %c0_19, %c0_20] : memref<4x3x16xf32, #tpu.memory_space<vmem>>, vector<1x3x16xf32>
    %23 = vector.shape_cast %22 : vector<1x3x16xf32> to vector<3x16xf32>
    %cst_21 = arith.constant dense<0.000000e+00> : vector<64x16xf32>
    %24 = tpu.matmul %0, %23, %cst_21 {dimension_numbers = #tpu.dot_dimension_numbers<[1], [0], [0], [1], [0, 0, 1, 1], [], []>} : vector<64x3xf32>, vector<3x16xf32>, vector<64x16xf32> -> vector<64x16xf32>
    %c3_22 = arith.constant 3 : index
    %c0_23 = arith.constant 0 : index
    %c0_24 = arith.constant 0 : index
    %25 = vector.load %arg2[%c3_22, %c0_23, %c0_24] : memref<4x1x16xf32, #tpu.memory_space<vmem>>, vector<1x1x16xf32>
    %26 = vector.shape_cast %25 : vector<1x1x16xf32> to vector<1x16xf32>
    %27 = vector.broadcast %26 : vector<1x16xf32> to vector<64x16xf32>
    %28 = arith.addf %24, %27 : vector<64x16xf32>
    %c0_25 = arith.constant 0 : index
    %c0_26 = arith.constant 0 : index
    %c0_27 = arith.constant 0 : index
    %29 = vector.load %arg3[%c0_25, %c0_26, %c0_27] : memref<4x16x16xf32, #tpu.memory_space<vmem>>, vector<1x16x16xf32>
    %30 = vector.shape_cast %29 : vector<1x16x16xf32> to vector<16x16xf32>
    %c1_28 = arith.constant 1 : index
    %c0_29 = arith.constant 0 : index
    %c0_30 = arith.constant 0 : index
    %31 = vector.load %arg3[%c1_28, %c0_29, %c0_30] : memref<4x16x16xf32, #tpu.memory_space<vmem>>, vector<1x16x16xf32>
    %32 = vector.shape_cast %31 : vector<1x16x16xf32> to vector<16x16xf32>
    %c2_31 = arith.constant 2 : index
    %c0_32 = arith.constant 0 : index
    %c0_33 = arith.constant 0 : index
    %33 = vector.load %arg3[%c2_31, %c0_32, %c0_33] : memref<4x16x16xf32, #tpu.memory_space<vmem>>, vector<1x16x16xf32>
    %34 = vector.shape_cast %33 : vector<1x16x16xf32> to vector<16x16xf32>
    %c3_34 = arith.constant 3 : index
    %c0_35 = arith.constant 0 : index
    %c0_36 = arith.constant 0 : index
    %35 = vector.load %arg3[%c3_34, %c0_35, %c0_36] : memref<4x16x16xf32, #tpu.memory_space<vmem>>, vector<1x16x16xf32>
    %36 = vector.shape_cast %35 : vector<1x16x16xf32> to vector<16x16xf32>
    %cst_37 = arith.constant 0.000000e+00 : f32
    %37 = vector.broadcast %cst_37 : f32 to vector<8x16xf32>
    %cst_38 = arith.constant 0.000000e+00 : f32
    %38 = vector.broadcast %cst_38 : f32 to vector<8x16xf32>
    %39 = vector.extract_strided_slice %7 {offsets = [0, 0], sizes = [8, 16], strides = [1, 1]} : vector<64x16xf32> to vector<8x16xf32>
    %cst_39 = arith.constant dense<0.000000e+00> : vector<8x16xf32>
    %40 = tpu.matmul %37, %30, %cst_39 {dimension_numbers = #tpu.dot_dimension_numbers<[1], [0], [0], [1], [0, 0, 1, 1], [], []>} : vector<8x16xf32>, vector<16x16xf32>, vector<8x16xf32> -> vector<8x16xf32>
    %41 = arith.addf %39, %40 : vector<8x16xf32>
    %42 = vector.extract_strided_slice %14 {offsets = [0, 0], sizes = [8, 16], strides = [1, 1]} : vector<64x16xf32> to vector<8x16xf32>
    %cst_40 = arith.constant dense<0.000000e+00> : vector<8x16xf32>
    %43 = tpu.matmul %37, %32, %cst_40 {dimension_numbers = #tpu.dot_dimension_numbers<[1], [0], [0], [1], [0, 0, 1, 1], [], []>} : vector<8x16xf32>, vector<16x16xf32>, vector<8x16xf32> -> vector<8x16xf32>
    %44 = arith.addf %42, %43 : vector<8x16xf32>
    %45 = vector.extract_strided_slice %21 {offsets = [0, 0], sizes = [8, 16], strides = [1, 1]} : vector<64x16xf32> to vector<8x16xf32>
    %cst_41 = arith.constant dense<0.000000e+00> : vector<8x16xf32>
    %46 = tpu.matmul %37, %34, %cst_41 {dimension_numbers = #tpu.dot_dimension_numbers<[1], [0], [0], [1], [0, 0, 1, 1], [], []>} : vector<8x16xf32>, vector<16x16xf32>, vector<8x16xf32> -> vector<8x16xf32>
    %47 = arith.addf %45, %46 : vector<8x16xf32>
    %48 = vector.extract_strided_slice %28 {offsets = [0, 0], sizes = [8, 16], strides = [1, 1]} : vector<64x16xf32> to vector<8x16xf32>
    %cst_42 = arith.constant dense<0.000000e+00> : vector<8x16xf32>
    %49 = tpu.matmul %37, %36, %cst_42 {dimension_numbers = #tpu.dot_dimension_numbers<[1], [0], [0], [1], [0, 0, 1, 1], [], []>} : vector<8x16xf32>, vector<16x16xf32>, vector<8x16xf32> -> vector<8x16xf32>
    %50 = arith.addf %48, %49 : vector<8x16xf32>
    %51 = arith.negf %41 : vector<8x16xf32>
    %52 = math.exp %51 : vector<8x16xf32>
    %cst_43 = arith.constant 1.000000e+00 : f32
    %53 = vector.broadcast %cst_43 : f32 to vector<8x16xf32>
    %54 = arith.addf %53, %52 : vector<8x16xf32>
    %55 = arith.divf %53, %54 : vector<8x16xf32>
    %56 = arith.negf %44 : vector<8x16xf32>
    %57 = math.exp %56 : vector<8x16xf32>
    %cst_44 = arith.constant 1.000000e+00 : f32
    %58 = vector.broadcast %cst_44 : f32 to vector<8x16xf32>
    %59 = arith.addf %58, %57 : vector<8x16xf32>
    %60 = arith.divf %58, %59 : vector<8x16xf32>
    %61 = math.tanh %47 : vector<8x16xf32>
    %62 = arith.negf %50 : vector<8x16xf32>
    %63 = math.exp %62 : vector<8x16xf32>
    %cst_45 = arith.constant 1.000000e+00 : f32
    %64 = vector.broadcast %cst_45 : f32 to vector<8x16xf32>
    %65 = arith.addf %64, %63 : vector<8x16xf32>
    %66 = arith.divf %64, %65 : vector<8x16xf32>
    %67 = arith.mulf %60, %38 : vector<8x16xf32>
    %68 = arith.mulf %55, %61 : vector<8x16xf32>
    %69 = arith.addf %67, %68 : vector<8x16xf32>
    %70 = math.tanh %69 : vector<8x16xf32>
    %71 = arith.mulf %66, %70 : vector<8x16xf32>
    %72 = vector.extract_strided_slice %7 {offsets = [8, 0], sizes = [8, 16], strides = [1, 1]} : vector<64x16xf32> to vector<8x16xf32>
    %cst_46 = arith.constant dense<0.000000e+00> : vector<8x16xf32>
    %73 = tpu.matmul %71, %30, %cst_46 {dimension_numbers = #tpu.dot_dimension_numbers<[1], [0], [0], [1], [0, 0, 1, 1], [], []>} : vector<8x16xf32>, vector<16x16xf32>, vector<8x16xf32> -> vector<8x16xf32>
    %74 = arith.addf %72, %73 : vector<8x16xf32>
    %75 = vector.extract_strided_slice %14 {offsets = [8, 0], sizes = [8, 16], strides = [1, 1]} : vector<64x16xf32> to vector<8x16xf32>
    %cst_47 = arith.constant dense<0.000000e+00> : vector<8x16xf32>
    %76 = tpu.matmul %71, %32, %cst_47 {dimension_numbers = #tpu.dot_dimension_numbers<[1], [0], [0], [1], [0, 0, 1, 1], [], []>} : vector<8x16xf32>, vector<16x16xf32>, vector<8x16xf32> -> vector<8x16xf32>
    %77 = arith.addf %75, %76 : vector<8x16xf32>
    %78 = vector.extract_strided_slice %21 {offsets = [8, 0], sizes = [8, 16], strides = [1, 1]} : vector<64x16xf32> to vector<8x16xf32>
    %cst_48 = arith.constant dense<0.000000e+00> : vector<8x16xf32>
    %79 = tpu.matmul %71, %34, %cst_48 {dimension_numbers = #tpu.dot_dimension_numbers<[1], [0], [0], [1], [0, 0, 1, 1], [], []>} : vector<8x16xf32>, vector<16x16xf32>, vector<8x16xf32> -> vector<8x16xf32>
    %80 = arith.addf %78, %79 : vector<8x16xf32>
    %81 = vector.extract_strided_slice %28 {offsets = [8, 0], sizes = [8, 16], strides = [1, 1]} : vector<64x16xf32> to vector<8x16xf32>
    %cst_49 = arith.constant dense<0.000000e+00> : vector<8x16xf32>
    %82 = tpu.matmul %71, %36, %cst_49 {dimension_numbers = #tpu.dot_dimension_numbers<[1], [0], [0], [1], [0, 0, 1, 1], [], []>} : vector<8x16xf32>, vector<16x16xf32>, vector<8x16xf32> -> vector<8x16xf32>
    %83 = arith.addf %81, %82 : vector<8x16xf32>
    %84 = arith.negf %74 : vector<8x16xf32>
    %85 = math.exp %84 : vector<8x16xf32>
    %cst_50 = arith.constant 1.000000e+00 : f32
    %86 = vector.broadcast %cst_50 : f32 to vector<8x16xf32>
    %87 = arith.addf %86, %85 : vector<8x16xf32>
    %88 = arith.divf %86, %87 : vector<8x16xf32>
    %89 = arith.negf %77 : vector<8x16xf32>
    %90 = math.exp %89 : vector<8x16xf32>
    %cst_51 = arith.constant 1.000000e+00 : f32
    %91 = vector.broadcast %cst_51 : f32 to vector<8x16xf32>
    %92 = arith.addf %91, %90 : vector<8x16xf32>
    %93 = arith.divf %91, %92 : vector<8x16xf32>
    %94 = math.tanh %80 : vector<8x16xf32>
    %95 = arith.negf %83 : vector<8x16xf32>
    %96 = math.exp %95 : vector<8x16xf32>
    %cst_52 = arith.constant 1.000000e+00 : f32
    %97 = vector.broadcast %cst_52 : f32 to vector<8x16xf32>
    %98 = arith.addf %97, %96 : vector<8x16xf32>
    %99 = arith.divf %97, %98 : vector<8x16xf32>
    %100 = arith.mulf %93, %69 : vector<8x16xf32>
    %101 = arith.mulf %88, %94 : vector<8x16xf32>
    %102 = arith.addf %100, %101 : vector<8x16xf32>
    %103 = math.tanh %102 : vector<8x16xf32>
    %104 = arith.mulf %99, %103 : vector<8x16xf32>
    %105 = vector.extract_strided_slice %7 {offsets = [16, 0], sizes = [8, 16], strides = [1, 1]} : vector<64x16xf32> to vector<8x16xf32>
    %cst_53 = arith.constant dense<0.000000e+00> : vector<8x16xf32>
    %106 = tpu.matmul %104, %30, %cst_53 {dimension_numbers = #tpu.dot_dimension_numbers<[1], [0], [0], [1], [0, 0, 1, 1], [], []>} : vector<8x16xf32>, vector<16x16xf32>, vector<8x16xf32> -> vector<8x16xf32>
    %107 = arith.addf %105, %106 : vector<8x16xf32>
    %108 = vector.extract_strided_slice %14 {offsets = [16, 0], sizes = [8, 16], strides = [1, 1]} : vector<64x16xf32> to vector<8x16xf32>
    %cst_54 = arith.constant dense<0.000000e+00> : vector<8x16xf32>
    %109 = tpu.matmul %104, %32, %cst_54 {dimension_numbers = #tpu.dot_dimension_numbers<[1], [0], [0], [1], [0, 0, 1, 1], [], []>} : vector<8x16xf32>, vector<16x16xf32>, vector<8x16xf32> -> vector<8x16xf32>
    %110 = arith.addf %108, %109 : vector<8x16xf32>
    %111 = vector.extract_strided_slice %21 {offsets = [16, 0], sizes = [8, 16], strides = [1, 1]} : vector<64x16xf32> to vector<8x16xf32>
    %cst_55 = arith.constant dense<0.000000e+00> : vector<8x16xf32>
    %112 = tpu.matmul %104, %34, %cst_55 {dimension_numbers = #tpu.dot_dimension_numbers<[1], [0], [0], [1], [0, 0, 1, 1], [], []>} : vector<8x16xf32>, vector<16x16xf32>, vector<8x16xf32> -> vector<8x16xf32>
    %113 = arith.addf %111, %112 : vector<8x16xf32>
    %114 = vector.extract_strided_slice %28 {offsets = [16, 0], sizes = [8, 16], strides = [1, 1]} : vector<64x16xf32> to vector<8x16xf32>
    %cst_56 = arith.constant dense<0.000000e+00> : vector<8x16xf32>
    %115 = tpu.matmul %104, %36, %cst_56 {dimension_numbers = #tpu.dot_dimension_numbers<[1], [0], [0], [1], [0, 0, 1, 1], [], []>} : vector<8x16xf32>, vector<16x16xf32>, vector<8x16xf32> -> vector<8x16xf32>
    %116 = arith.addf %114, %115 : vector<8x16xf32>
    %117 = arith.negf %107 : vector<8x16xf32>
    %118 = math.exp %117 : vector<8x16xf32>
    %cst_57 = arith.constant 1.000000e+00 : f32
    %119 = vector.broadcast %cst_57 : f32 to vector<8x16xf32>
    %120 = arith.addf %119, %118 : vector<8x16xf32>
    %121 = arith.divf %119, %120 : vector<8x16xf32>
    %122 = arith.negf %110 : vector<8x16xf32>
    %123 = math.exp %122 : vector<8x16xf32>
    %cst_58 = arith.constant 1.000000e+00 : f32
    %124 = vector.broadcast %cst_58 : f32 to vector<8x16xf32>
    %125 = arith.addf %124, %123 : vector<8x16xf32>
    %126 = arith.divf %124, %125 : vector<8x16xf32>
    %127 = math.tanh %113 : vector<8x16xf32>
    %128 = arith.negf %116 : vector<8x16xf32>
    %129 = math.exp %128 : vector<8x16xf32>
    %cst_59 = arith.constant 1.000000e+00 : f32
    %130 = vector.broadcast %cst_59 : f32 to vector<8x16xf32>
    %131 = arith.addf %130, %129 : vector<8x16xf32>
    %132 = arith.divf %130, %131 : vector<8x16xf32>
    %133 = arith.mulf %126, %102 : vector<8x16xf32>
    %134 = arith.mulf %121, %127 : vector<8x16xf32>
    %135 = arith.addf %133, %134 : vector<8x16xf32>
    %136 = math.tanh %135 : vector<8x16xf32>
    %137 = arith.mulf %132, %136 : vector<8x16xf32>
    %138 = vector.extract_strided_slice %7 {offsets = [24, 0], sizes = [8, 16], strides = [1, 1]} : vector<64x16xf32> to vector<8x16xf32>
    %cst_60 = arith.constant dense<0.000000e+00> : vector<8x16xf32>
    %139 = tpu.matmul %137, %30, %cst_60 {dimension_numbers = #tpu.dot_dimension_numbers<[1], [0], [0], [1], [0, 0, 1, 1], [], []>} : vector<8x16xf32>, vector<16x16xf32>, vector<8x16xf32> -> vector<8x16xf32>
    %140 = arith.addf %138, %139 : vector<8x16xf32>
    %141 = vector.extract_strided_slice %14 {offsets = [24, 0], sizes = [8, 16], strides = [1, 1]} : vector<64x16xf32> to vector<8x16xf32>
    %cst_61 = arith.constant dense<0.000000e+00> : vector<8x16xf32>
    %142 = tpu.matmul %137, %32, %cst_61 {dimension_numbers = #tpu.dot_dimension_numbers<[1], [0], [0], [1], [0, 0, 1, 1], [], []>} : vector<8x16xf32>, vector<16x16xf32>, vector<8x16xf32> -> vector<8x16xf32>
    %143 = arith.addf %141, %142 : vector<8x16xf32>
    %144 = vector.extract_strided_slice %21 {offsets = [24, 0], sizes = [8, 16], strides = [1, 1]} : vector<64x16xf32> to vector<8x16xf32>
    %cst_62 = arith.constant dense<0.000000e+00> : vector<8x16xf32>
    %145 = tpu.matmul %137, %34, %cst_62 {dimension_numbers = #tpu.dot_dimension_numbers<[1], [0], [0], [1], [0, 0, 1, 1], [], []>} : vector<8x16xf32>, vector<16x16xf32>, vector<8x16xf32> -> vector<8x16xf32>
    %146 = arith.addf %144, %145 : vector<8x16xf32>
    %147 = vector.extract_strided_slice %28 {offsets = [24, 0], sizes = [8, 16], strides = [1, 1]} : vector<64x16xf32> to vector<8x16xf32>
    %cst_63 = arith.constant dense<0.000000e+00> : vector<8x16xf32>
    %148 = tpu.matmul %137, %36, %cst_63 {dimension_numbers = #tpu.dot_dimension_numbers<[1], [0], [0], [1], [0, 0, 1, 1], [], []>} : vector<8x16xf32>, vector<16x16xf32>, vector<8x16xf32> -> vector<8x16xf32>
    %149 = arith.addf %147, %148 : vector<8x16xf32>
    %150 = arith.negf %140 : vector<8x16xf32>
    %151 = math.exp %150 : vector<8x16xf32>
    %cst_64 = arith.constant 1.000000e+00 : f32
    %152 = vector.broadcast %cst_64 : f32 to vector<8x16xf32>
    %153 = arith.addf %152, %151 : vector<8x16xf32>
    %154 = arith.divf %152, %153 : vector<8x16xf32>
    %155 = arith.negf %143 : vector<8x16xf32>
    %156 = math.exp %155 : vector<8x16xf32>
    %cst_65 = arith.constant 1.000000e+00 : f32
    %157 = vector.broadcast %cst_65 : f32 to vector<8x16xf32>
    %158 = arith.addf %157, %156 : vector<8x16xf32>
    %159 = arith.divf %157, %158 : vector<8x16xf32>
    %160 = math.tanh %146 : vector<8x16xf32>
    %161 = arith.negf %149 : vector<8x16xf32>
    %162 = math.exp %161 : vector<8x16xf32>
    %cst_66 = arith.constant 1.000000e+00 : f32
    %163 = vector.broadcast %cst_66 : f32 to vector<8x16xf32>
    %164 = arith.addf %163, %162 : vector<8x16xf32>
    %165 = arith.divf %163, %164 : vector<8x16xf32>
    %166 = arith.mulf %159, %135 : vector<8x16xf32>
    %167 = arith.mulf %154, %160 : vector<8x16xf32>
    %168 = arith.addf %166, %167 : vector<8x16xf32>
    %169 = math.tanh %168 : vector<8x16xf32>
    %170 = arith.mulf %165, %169 : vector<8x16xf32>
    %171 = vector.extract_strided_slice %7 {offsets = [32, 0], sizes = [8, 16], strides = [1, 1]} : vector<64x16xf32> to vector<8x16xf32>
    %cst_67 = arith.constant dense<0.000000e+00> : vector<8x16xf32>
    %172 = tpu.matmul %170, %30, %cst_67 {dimension_numbers = #tpu.dot_dimension_numbers<[1], [0], [0], [1], [0, 0, 1, 1], [], []>} : vector<8x16xf32>, vector<16x16xf32>, vector<8x16xf32> -> vector<8x16xf32>
    %173 = arith.addf %171, %172 : vector<8x16xf32>
    %174 = vector.extract_strided_slice %14 {offsets = [32, 0], sizes = [8, 16], strides = [1, 1]} : vector<64x16xf32> to vector<8x16xf32>
    %cst_68 = arith.constant dense<0.000000e+00> : vector<8x16xf32>
    %175 = tpu.matmul %170, %32, %cst_68 {dimension_numbers = #tpu.dot_dimension_numbers<[1], [0], [0], [1], [0, 0, 1, 1], [], []>} : vector<8x16xf32>, vector<16x16xf32>, vector<8x16xf32> -> vector<8x16xf32>
    %176 = arith.addf %174, %175 : vector<8x16xf32>
    %177 = vector.extract_strided_slice %21 {offsets = [32, 0], sizes = [8, 16], strides = [1, 1]} : vector<64x16xf32> to vector<8x16xf32>
    %cst_69 = arith.constant dense<0.000000e+00> : vector<8x16xf32>
    %178 = tpu.matmul %170, %34, %cst_69 {dimension_numbers = #tpu.dot_dimension_numbers<[1], [0], [0], [1], [0, 0, 1, 1], [], []>} : vector<8x16xf32>, vector<16x16xf32>, vector<8x16xf32> -> vector<8x16xf32>
    %179 = arith.addf %177, %178 : vector<8x16xf32>
    %180 = vector.extract_strided_slice %28 {offsets = [32, 0], sizes = [8, 16], strides = [1, 1]} : vector<64x16xf32> to vector<8x16xf32>
    %cst_70 = arith.constant dense<0.000000e+00> : vector<8x16xf32>
    %181 = tpu.matmul %170, %36, %cst_70 {dimension_numbers = #tpu.dot_dimension_numbers<[1], [0], [0], [1], [0, 0, 1, 1], [], []>} : vector<8x16xf32>, vector<16x16xf32>, vector<8x16xf32> -> vector<8x16xf32>
    %182 = arith.addf %180, %181 : vector<8x16xf32>
    %183 = arith.negf %173 : vector<8x16xf32>
    %184 = math.exp %183 : vector<8x16xf32>
    %cst_71 = arith.constant 1.000000e+00 : f32
    %185 = vector.broadcast %cst_71 : f32 to vector<8x16xf32>
    %186 = arith.addf %185, %184 : vector<8x16xf32>
    %187 = arith.divf %185, %186 : vector<8x16xf32>
    %188 = arith.negf %176 : vector<8x16xf32>
    %189 = math.exp %188 : vector<8x16xf32>
    %cst_72 = arith.constant 1.000000e+00 : f32
    %190 = vector.broadcast %cst_72 : f32 to vector<8x16xf32>
    %191 = arith.addf %190, %189 : vector<8x16xf32>
    %192 = arith.divf %190, %191 : vector<8x16xf32>
    %193 = math.tanh %179 : vector<8x16xf32>
    %194 = arith.negf %182 : vector<8x16xf32>
    %195 = math.exp %194 : vector<8x16xf32>
    %cst_73 = arith.constant 1.000000e+00 : f32
    %196 = vector.broadcast %cst_73 : f32 to vector<8x16xf32>
    %197 = arith.addf %196, %195 : vector<8x16xf32>
    %198 = arith.divf %196, %197 : vector<8x16xf32>
    %199 = arith.mulf %192, %168 : vector<8x16xf32>
    %200 = arith.mulf %187, %193 : vector<8x16xf32>
    %201 = arith.addf %199, %200 : vector<8x16xf32>
    %202 = math.tanh %201 : vector<8x16xf32>
    %203 = arith.mulf %198, %202 : vector<8x16xf32>
    %204 = vector.extract_strided_slice %7 {offsets = [40, 0], sizes = [8, 16], strides = [1, 1]} : vector<64x16xf32> to vector<8x16xf32>
    %cst_74 = arith.constant dense<0.000000e+00> : vector<8x16xf32>
    %205 = tpu.matmul %203, %30, %cst_74 {dimension_numbers = #tpu.dot_dimension_numbers<[1], [0], [0], [1], [0, 0, 1, 1], [], []>} : vector<8x16xf32>, vector<16x16xf32>, vector<8x16xf32> -> vector<8x16xf32>
    %206 = arith.addf %204, %205 : vector<8x16xf32>
    %207 = vector.extract_strided_slice %14 {offsets = [40, 0], sizes = [8, 16], strides = [1, 1]} : vector<64x16xf32> to vector<8x16xf32>
    %cst_75 = arith.constant dense<0.000000e+00> : vector<8x16xf32>
    %208 = tpu.matmul %203, %32, %cst_75 {dimension_numbers = #tpu.dot_dimension_numbers<[1], [0], [0], [1], [0, 0, 1, 1], [], []>} : vector<8x16xf32>, vector<16x16xf32>, vector<8x16xf32> -> vector<8x16xf32>
    %209 = arith.addf %207, %208 : vector<8x16xf32>
    %210 = vector.extract_strided_slice %21 {offsets = [40, 0], sizes = [8, 16], strides = [1, 1]} : vector<64x16xf32> to vector<8x16xf32>
    %cst_76 = arith.constant dense<0.000000e+00> : vector<8x16xf32>
    %211 = tpu.matmul %203, %34, %cst_76 {dimension_numbers = #tpu.dot_dimension_numbers<[1], [0], [0], [1], [0, 0, 1, 1], [], []>} : vector<8x16xf32>, vector<16x16xf32>, vector<8x16xf32> -> vector<8x16xf32>
    %212 = arith.addf %210, %211 : vector<8x16xf32>
    %213 = vector.extract_strided_slice %28 {offsets = [40, 0], sizes = [8, 16], strides = [1, 1]} : vector<64x16xf32> to vector<8x16xf32>
    %cst_77 = arith.constant dense<0.000000e+00> : vector<8x16xf32>
    %214 = tpu.matmul %203, %36, %cst_77 {dimension_numbers = #tpu.dot_dimension_numbers<[1], [0], [0], [1], [0, 0, 1, 1], [], []>} : vector<8x16xf32>, vector<16x16xf32>, vector<8x16xf32> -> vector<8x16xf32>
    %215 = arith.addf %213, %214 : vector<8x16xf32>
    %216 = arith.negf %206 : vector<8x16xf32>
    %217 = math.exp %216 : vector<8x16xf32>
    %cst_78 = arith.constant 1.000000e+00 : f32
    %218 = vector.broadcast %cst_78 : f32 to vector<8x16xf32>
    %219 = arith.addf %218, %217 : vector<8x16xf32>
    %220 = arith.divf %218, %219 : vector<8x16xf32>
    %221 = arith.negf %209 : vector<8x16xf32>
    %222 = math.exp %221 : vector<8x16xf32>
    %cst_79 = arith.constant 1.000000e+00 : f32
    %223 = vector.broadcast %cst_79 : f32 to vector<8x16xf32>
    %224 = arith.addf %223, %222 : vector<8x16xf32>
    %225 = arith.divf %223, %224 : vector<8x16xf32>
    %226 = math.tanh %212 : vector<8x16xf32>
    %227 = arith.negf %215 : vector<8x16xf32>
    %228 = math.exp %227 : vector<8x16xf32>
    %cst_80 = arith.constant 1.000000e+00 : f32
    %229 = vector.broadcast %cst_80 : f32 to vector<8x16xf32>
    %230 = arith.addf %229, %228 : vector<8x16xf32>
    %231 = arith.divf %229, %230 : vector<8x16xf32>
    %232 = arith.mulf %225, %201 : vector<8x16xf32>
    %233 = arith.mulf %220, %226 : vector<8x16xf32>
    %234 = arith.addf %232, %233 : vector<8x16xf32>
    %235 = math.tanh %234 : vector<8x16xf32>
    %236 = arith.mulf %231, %235 : vector<8x16xf32>
    %237 = vector.extract_strided_slice %7 {offsets = [48, 0], sizes = [8, 16], strides = [1, 1]} : vector<64x16xf32> to vector<8x16xf32>
    %cst_81 = arith.constant dense<0.000000e+00> : vector<8x16xf32>
    %238 = tpu.matmul %236, %30, %cst_81 {dimension_numbers = #tpu.dot_dimension_numbers<[1], [0], [0], [1], [0, 0, 1, 1], [], []>} : vector<8x16xf32>, vector<16x16xf32>, vector<8x16xf32> -> vector<8x16xf32>
    %239 = arith.addf %237, %238 : vector<8x16xf32>
    %240 = vector.extract_strided_slice %14 {offsets = [48, 0], sizes = [8, 16], strides = [1, 1]} : vector<64x16xf32> to vector<8x16xf32>
    %cst_82 = arith.constant dense<0.000000e+00> : vector<8x16xf32>
    %241 = tpu.matmul %236, %32, %cst_82 {dimension_numbers = #tpu.dot_dimension_numbers<[1], [0], [0], [1], [0, 0, 1, 1], [], []>} : vector<8x16xf32>, vector<16x16xf32>, vector<8x16xf32> -> vector<8x16xf32>
    %242 = arith.addf %240, %241 : vector<8x16xf32>
    %243 = vector.extract_strided_slice %21 {offsets = [48, 0], sizes = [8, 16], strides = [1, 1]} : vector<64x16xf32> to vector<8x16xf32>
    %cst_83 = arith.constant dense<0.000000e+00> : vector<8x16xf32>
    %244 = tpu.matmul %236, %34, %cst_83 {dimension_numbers = #tpu.dot_dimension_numbers<[1], [0], [0], [1], [0, 0, 1, 1], [], []>} : vector<8x16xf32>, vector<16x16xf32>, vector<8x16xf32> -> vector<8x16xf32>
    %245 = arith.addf %243, %244 : vector<8x16xf32>
    %246 = vector.extract_strided_slice %28 {offsets = [48, 0], sizes = [8, 16], strides = [1, 1]} : vector<64x16xf32> to vector<8x16xf32>
    %cst_84 = arith.constant dense<0.000000e+00> : vector<8x16xf32>
    %247 = tpu.matmul %236, %36, %cst_84 {dimension_numbers = #tpu.dot_dimension_numbers<[1], [0], [0], [1], [0, 0, 1, 1], [], []>} : vector<8x16xf32>, vector<16x16xf32>, vector<8x16xf32> -> vector<8x16xf32>
    %248 = arith.addf %246, %247 : vector<8x16xf32>
    %249 = arith.negf %239 : vector<8x16xf32>
    %250 = math.exp %249 : vector<8x16xf32>
    %cst_85 = arith.constant 1.000000e+00 : f32
    %251 = vector.broadcast %cst_85 : f32 to vector<8x16xf32>
    %252 = arith.addf %251, %250 : vector<8x16xf32>
    %253 = arith.divf %251, %252 : vector<8x16xf32>
    %254 = arith.negf %242 : vector<8x16xf32>
    %255 = math.exp %254 : vector<8x16xf32>
    %cst_86 = arith.constant 1.000000e+00 : f32
    %256 = vector.broadcast %cst_86 : f32 to vector<8x16xf32>
    %257 = arith.addf %256, %255 : vector<8x16xf32>
    %258 = arith.divf %256, %257 : vector<8x16xf32>
    %259 = math.tanh %245 : vector<8x16xf32>
    %260 = arith.negf %248 : vector<8x16xf32>
    %261 = math.exp %260 : vector<8x16xf32>
    %cst_87 = arith.constant 1.000000e+00 : f32
    %262 = vector.broadcast %cst_87 : f32 to vector<8x16xf32>
    %263 = arith.addf %262, %261 : vector<8x16xf32>
    %264 = arith.divf %262, %263 : vector<8x16xf32>
    %265 = arith.mulf %258, %234 : vector<8x16xf32>
    %266 = arith.mulf %253, %259 : vector<8x16xf32>
    %267 = arith.addf %265, %266 : vector<8x16xf32>
    %268 = math.tanh %267 : vector<8x16xf32>
    %269 = arith.mulf %264, %268 : vector<8x16xf32>
    %270 = vector.extract_strided_slice %7 {offsets = [56, 0], sizes = [8, 16], strides = [1, 1]} : vector<64x16xf32> to vector<8x16xf32>
    %cst_88 = arith.constant dense<0.000000e+00> : vector<8x16xf32>
    %271 = tpu.matmul %269, %30, %cst_88 {dimension_numbers = #tpu.dot_dimension_numbers<[1], [0], [0], [1], [0, 0, 1, 1], [], []>} : vector<8x16xf32>, vector<16x16xf32>, vector<8x16xf32> -> vector<8x16xf32>
    %272 = arith.addf %270, %271 : vector<8x16xf32>
    %273 = vector.extract_strided_slice %14 {offsets = [56, 0], sizes = [8, 16], strides = [1, 1]} : vector<64x16xf32> to vector<8x16xf32>
    %cst_89 = arith.constant dense<0.000000e+00> : vector<8x16xf32>
    %274 = tpu.matmul %269, %32, %cst_89 {dimension_numbers = #tpu.dot_dimension_numbers<[1], [0], [0], [1], [0, 0, 1, 1], [], []>} : vector<8x16xf32>, vector<16x16xf32>, vector<8x16xf32> -> vector<8x16xf32>
    %275 = arith.addf %273, %274 : vector<8x16xf32>
    %276 = vector.extract_strided_slice %21 {offsets = [56, 0], sizes = [8, 16], strides = [1, 1]} : vector<64x16xf32> to vector<8x16xf32>
    %cst_90 = arith.constant dense<0.000000e+00> : vector<8x16xf32>
    %277 = tpu.matmul %269, %34, %cst_90 {dimension_numbers = #tpu.dot_dimension_numbers<[1], [0], [0], [1], [0, 0, 1, 1], [], []>} : vector<8x16xf32>, vector<16x16xf32>, vector<8x16xf32> -> vector<8x16xf32>
    %278 = arith.addf %276, %277 : vector<8x16xf32>
    %279 = vector.extract_strided_slice %28 {offsets = [56, 0], sizes = [8, 16], strides = [1, 1]} : vector<64x16xf32> to vector<8x16xf32>
    %cst_91 = arith.constant dense<0.000000e+00> : vector<8x16xf32>
    %280 = tpu.matmul %269, %36, %cst_91 {dimension_numbers = #tpu.dot_dimension_numbers<[1], [0], [0], [1], [0, 0, 1, 1], [], []>} : vector<8x16xf32>, vector<16x16xf32>, vector<8x16xf32> -> vector<8x16xf32>
    %281 = arith.addf %279, %280 : vector<8x16xf32>
    %282 = arith.negf %272 : vector<8x16xf32>
    %283 = math.exp %282 : vector<8x16xf32>
    %cst_92 = arith.constant 1.000000e+00 : f32
    %284 = vector.broadcast %cst_92 : f32 to vector<8x16xf32>
    %285 = arith.addf %284, %283 : vector<8x16xf32>
    %286 = arith.divf %284, %285 : vector<8x16xf32>
    %287 = arith.negf %275 : vector<8x16xf32>
    %288 = math.exp %287 : vector<8x16xf32>
    %cst_93 = arith.constant 1.000000e+00 : f32
    %289 = vector.broadcast %cst_93 : f32 to vector<8x16xf32>
    %290 = arith.addf %289, %288 : vector<8x16xf32>
    %291 = arith.divf %289, %290 : vector<8x16xf32>
    %292 = math.tanh %278 : vector<8x16xf32>
    %293 = arith.negf %281 : vector<8x16xf32>
    %294 = math.exp %293 : vector<8x16xf32>
    %cst_94 = arith.constant 1.000000e+00 : f32
    %295 = vector.broadcast %cst_94 : f32 to vector<8x16xf32>
    %296 = arith.addf %295, %294 : vector<8x16xf32>
    %297 = arith.divf %295, %296 : vector<8x16xf32>
    %298 = arith.mulf %291, %267 : vector<8x16xf32>
    %299 = arith.mulf %286, %292 : vector<8x16xf32>
    %300 = arith.addf %298, %299 : vector<8x16xf32>
    %301 = math.tanh %300 : vector<8x16xf32>
    %302 = arith.mulf %297, %301 : vector<8x16xf32>
    %c0_95 = arith.constant 0 : index
    %c0_96 = arith.constant 0 : index
    %303 = vector.load %arg4[%c0_95, %c0_96] : memref<16x128xf32, #tpu.memory_space<vmem>>, vector<16x128xf32>
    %cst_97 = arith.constant dense<0.000000e+00> : vector<8x128xf32>
    %304 = tpu.matmul %302, %303, %cst_97 {dimension_numbers = #tpu.dot_dimension_numbers<[1], [0], [0], [1], [0, 0, 1, 1], [], []>} : vector<8x16xf32>, vector<16x128xf32>, vector<8x128xf32> -> vector<8x128xf32>
    %c0_98 = arith.constant 0 : index
    %c0_99 = arith.constant 0 : index
    %305 = vector.load %arg5[%c0_98, %c0_99] : memref<1x1xf32, #tpu.memory_space<vmem>>, vector<1x1xf32>
    %306 = vector.broadcast %305 : vector<1x1xf32> to vector<8x128xf32>
    %307 = arith.addf %304, %306 : vector<8x128xf32>
    %c0_100 = arith.constant 0 : index
    %c0_101 = arith.constant 0 : index
    %308 = vector.load %arg6[%c0_100, %c0_101] : memref<8x128xf32, #tpu.memory_space<vmem>>, vector<8x128xf32>
    tpu.vector_store %arg6[%c0_100, %c0_101], %307 {strides = array<i32>} : memref<8x128xf32, #tpu.memory_space<vmem>>, vector<8x128xf32>,
    return
  }
}

</mosaic_0001>

<llo_original>
// kernel: multi_feature_lstm_forward.1
$region0: #{multi_feature_lstm_forward.1}
  #allocation0 [shape = 'u32[]', space=smem, size = 0x4, offset = 0x4, fixed_abs, tag = 'smem constant byte address 0x4 - core index']
  #allocation1 [shape = 'u32[144,128]{1,0:T(1,128)}', space=vmem, size = 0x12000, scoped, tag = 'internal scratch']
  #allocation2 [shape = 'f32[1,1]{1,0:T(1,128)S(1)}', space=vmem, size = 0x200, scoped, tag = 'scoped memory for multi_feature_lstm_forward.1']
  %s0 = inlined_call_operand.vmem [shape: f32[64,3], index: 0, kind: input, shape index: {}]
  %s1 = inlined_call_operand.vmem [shape: f32[4,3,16], index: 1, kind: input, shape index: {}]
  %s2 = inlined_call_operand.vmem [shape: f32[4,1,16], index: 2, kind: input, shape index: {}]
  %s3 = inlined_call_operand.vmem [shape: f32[4,16,16], index: 3, kind: input, shape index: {}]
  %s4 = inlined_call_operand.vmem [shape: f32[16,128], index: 4, kind: input, shape index: {}]
  %s5 = inlined_call_operand.<no memory space> [shape: f32[1,1], index: 5, kind: input, shape index: {}]
  %s6 = inlined_call_operand.vmem [shape: f32[8,128], index: 6, kind: output, shape index: {}]
  %s7 = sld [smem:[#allocation0]]
  $region34: #{multi_feature_lstm_forward.1} parent=0
    _
  %s9 = ssub.s32 1, %s7
  %s10 = scalar_select 0, %s9, %s7
  %v11 = vstv %s5
  %12 = vst [vmem:[#allocation2] sm:$0x1] %v11
  // Predicated region
  $region2: #{multi_feature_lstm_forward.1} parent=0 // pred_check
    _
  $region3: #{multi_feature_lstm_forward.1} parent=0 // pred_check_branch
    %14 = sbr.rel (0) target = $region5
  $region4: #{multi_feature_lstm_forward.1} parent=0 // pred_region
    _
  $region5: #{multi_feature_lstm_forward.1} parent=0 // pred_fallthru
    _
  // Predicated region
  $region6: #{multi_feature_lstm_forward.1} parent=0 // pred_check
    _
  $region7: #{multi_feature_lstm_forward.1} parent=0 // pred_check_branch
    %16 = sbr.rel (0) target = $region9
  $region8: #{multi_feature_lstm_forward.1} parent=0 // pred_region
    _
  $region9: #{multi_feature_lstm_forward.1} parent=0 // pred_fallthru
    _
  // Predicated region
  $region10: #{multi_feature_lstm_forward.1} parent=0 // pred_check
    _
  $region11: #{multi_feature_lstm_forward.1} parent=0 // pred_check_branch
    %18 = sbr.rel (0) target = $region13
  $region12: #{multi_feature_lstm_forward.1} parent=0 // pred_region
    _
  $region13: #{multi_feature_lstm_forward.1} parent=0 // pred_fallthru
    _
  // Predicated region
  $region14: #{multi_feature_lstm_forward.1} parent=0 // pred_check
    _
  $region15: #{multi_feature_lstm_forward.1} parent=0 // pred_check_branch
    %20 = sbr.rel (0) target = $region17
  $region16: #{multi_feature_lstm_forward.1} parent=0 // pred_region
    _
  $region17: #{multi_feature_lstm_forward.1} parent=0 // pred_fallthru
    _
  // Predicated region
  $region18: #{multi_feature_lstm_forward.1} parent=0 // pred_check
    _
  $region19: #{multi_feature_lstm_forward.1} parent=0 // pred_check_branch
    %22 = sbr.rel (0) target = $region21
  $region20: #{multi_feature_lstm_forward.1} parent=0 // pred_region
    _
  $region21: #{multi_feature_lstm_forward.1} parent=0 // pred_fallthru
    _
  // Predicated region
  $region22: #{multi_feature_lstm_forward.1} parent=0 // pred_check
    _
  $region23: #{multi_feature_lstm_forward.1} parent=0 // pred_check_branch
    %24 = sbr.rel (0) target = $region25
  $region24: #{multi_feature_lstm_forward.1} parent=0 // pred_region
    _
  $region25: #{multi_feature_lstm_forward.1} parent=0 // pred_fallthru
    _
  %v25 = vld [vmem:[%s0] sm:$0xff]
  %v26 = vld [vmem:[%s0 + $0x8] sm:$0xff]
  %v27 = vld [vmem:[%s0 + $0x10] sm:$0xff]
  %v28 = vld [vmem:[%s0 + $0x18] sm:$0xff]
  %v29 = vld [vmem:[%s0 + $0x20] sm:$0xff]
  %v30 = vld [vmem:[%s0 + $0x28] sm:$0xff]
  %v31 = vld [vmem:[%s0 + $0x30] sm:$0xff]
  %v32 = vld [vmem:[%s0 + $0x38] sm:$0xff]
  %v33 = vld [vmem:[%s1] sm:$0x7]
  %v34 = vld [vmem:[%s2] sm:$0x1]
  %v36 = vlaneseq
  %v37 = vshrl.u32 %v36, 7
  %v38 = vsub.s32 0, %v37
  %v39 = vrot.slane %v34, %v38
  %vm41 = vcmask 23552
  %v43 = vsel %vm41, %v25, 0
  %v46 = vsel %vm41, %v26, 0
  %v49 = vsel %vm41, %v27, 0
  %v52 = vsel %vm41, %v28, 0
  %v55 = vsel %vm41, %v29, 0
  %v58 = vsel %vm41, %v30, 0
  %v61 = vsel %vm41, %v31, 0
  %v64 = vsel %vm41, %v32, 0
  %vm66 = vcmask 1042432
  %v68 = vsel %vm66, %v33, 0
  %70 = vmatprep.subr.mxu0 0.0
  %71 = vmatpush1.msra.mxu0 %v68
  %72 = vmatprep.subr.mxu0 0.0
  %73 = vmatpush1.msra.mxu0 0.0
  %74 = vmatprep.subr.mxu0 0.0
  %75 = vmatpush1.msra.mxu0 0.0
  %76 = vmatprep.subr.mxu0 0.0
  %77 = vmatpush1.msra.mxu0 0.0
  %78 = vmatprep.subr.mxu0 0.0
  %79 = vmatpush1.msra.mxu0 0.0
  %80 = vmatprep.subr.mxu0 0.0
  %81 = vmatpush1.msra.mxu0 0.0
  %82 = vmatprep.subr.mxu0 0.0
  %83 = vmatpush1.msra.mxu0 0.0
  %84 = vmatprep.subr.mxu0 0.0
  %85 = vmatpush1.msra.mxu0 0.0
  %86 = vmatprep.subr.mxu0 0.0
  %87 = vmatpush1.msra.mxu0 0.0
  %88 = vmatprep.subr.mxu0 0.0
  %89 = vmatpush1.msra.mxu0 0.0
  %90 = vmatprep.subr.mxu0 0.0
  %91 = vmatpush1.msra.mxu0 0.0
  %92 = vmatprep.subr.mxu0 0.0
  %93 = vmatpush1.msra.mxu0 0.0
  %94 = vmatprep.subr.mxu0 0.0
  %95 = vmatpush1.msra.mxu0 0.0
  %96 = vmatprep.subr.mxu0 0.0
  %97 = vmatpush1.msra.mxu0 0.0
  %98 = vmatprep.subr.mxu0 0.0
  %99 = vmatpush1.msra.mxu0 0.0
  %100 = vmatprep.subr.mxu0 0.0
  %101 = vmatpush1.msra.mxu0 0.0
  %102 = vmatprep.subr.mxu0 0.0
  %103 = vmatpush1.msra.mxu0 0.0
  %104 = vmatprep.subr.mxu0 0.0
  %105 = vmatpush1.msra.mxu0 0.0
  %106 = vmatprep.subr.mxu0 0.0
  %107 = vmatpush1.msra.mxu0 0.0
  %108 = vmatprep.subr.mxu0 0.0
  %109 = vmatpush1.msra.mxu0 0.0
  %110 = vmatprep.subr.mxu0 0.0
  %111 = vmatpush1.msra.mxu0 0.0
  %112 = vmatprep.subr.mxu0 0.0
  %113 = vmatpush1.msra.mxu0 0.0
  %114 = vmatprep.subr.mxu0 0.0
  %115 = vmatpush1.msra.mxu0 0.0
  %116 = vmatprep.subr.mxu0 0.0
  %117 = vmatpush1.msra.mxu0 0.0
  %118 = vmatprep.subr.mxu0 0.0
  %119 = vmatpush1.msra.mxu0 0.0
  %120 = vmatprep.subr.mxu0 0.0
  %121 = vmatpush1.msra.mxu0 0.0
  %122 = vmatprep.subr.mxu0 0.0
  %123 = vmatpush1.msra.mxu0 0.0
  %124 = vmatprep.subr.mxu0 0.0
  %125 = vmatpush1.msra.mxu0 0.0
  %126 = vmatprep.subr.mxu0 0.0
  %127 = vmatpush1.msra.mxu0 0.0
  %128 = vmatprep.subr.mxu0 0.0
  %129 = vmatpush1.msra.mxu0 0.0
  %130 = vmatprep.subr.mxu0 0.0
  %131 = vmatpush1.msra.mxu0 0.0
  %132 = vmatprep.subr.mxu0 0.0
  %133 = vmatpush1.msra.mxu0 0.0
  %134 = vmatprep.mubr.f32.mxu0 0.0
  %135 = vmatmul.mubr.f32.gmra.mrb[0].mxu0 %v43
  %v136 = vpop.f32.mrb[0].mxu0
  %v137 = vadd.f32 %v39, %v136
  %v138 = vpop.f32.mrb[0].mxu0
  %139 = vmatprep.mubr.f32.mxu0 0.0
  %140 = vmatmul.mubr.f32.gmra.mrb[0].mxu0 %v46
  %v141 = vpop.f32.mrb[0].mxu0
  %v142 = vadd.f32 %v39, %v141
  %v143 = vpop.f32.mrb[0].mxu0
  %144 = vmatprep.mubr.f32.mxu0 0.0
  %145 = vmatmul.mubr.f32.gmra.mrb[0].mxu0 %v49
  %v146 = vpop.f32.mrb[0].mxu0
  %v147 = vadd.f32 %v39, %v146
  %v148 = vpop.f32.mrb[0].mxu0
  %149 = vmatprep.mubr.f32.mxu0 0.0
  %150 = vmatmul.mubr.f32.gmra.mrb[0].mxu0 %v52
  %v151 = vpop.f32.mrb[0].mxu0
  %v152 = vadd.f32 %v39, %v151
  %v153 = vpop.f32.mrb[0].mxu0
  %154 = vmatprep.mubr.f32.mxu0 0.0
  %155 = vmatmul.mubr.f32.gmra.mrb[0].mxu0 %v55
  %v156 = vpop.f32.mrb[0].mxu0
  %v157 = vadd.f32 %v39, %v156
  %v158 = vpop.f32.mrb[0].mxu0
  %159 = vmatprep.mubr.f32.mxu0 0.0
  %160 = vmatmul.mubr.f32.gmra.mrb[0].mxu0 %v58
  %v161 = vpop.f32.mrb[0].mxu0
  %v162 = vadd.f32 %v39, %v161
  %v163 = vpop.f32.mrb[0].mxu0
  %164 = vmatprep.mubr.f32.mxu0 0.0
  %165 = vmatmul.mubr.f32.gmra.mrb[0].mxu0 %v61
  %v166 = vpop.f32.mrb[0].mxu0
  %v167 = vadd.f32 %v39, %v166
  %v168 = vpop.f32.mrb[0].mxu0
  %169 = vmatprep.mubr.f32.mxu0 0.0
  %170 = vmatmul.mubr.f32.gmra.mrb[0].mxu0 %v64
  %v171 = vpop.f32.mrb[0].mxu0
  %v172 = vadd.f32 %v39, %v171
  %v173 = vpop.f32.mrb[0].mxu0
  %174 = vdwg.mxu0
  %s175 = scalar_lea.vmem %s1, 4
  %v176 = vld [vmem:[%s175] sm:$0x7]
  %s177 = scalar_lea.vmem %s2, 1
  %v178 = vld [vmem:[%s177] sm:$0x1]
  %v180 = vlaneseq
  %v181 = vshrl.u32 %v180, 7
  %v182 = vsub.s32 0, %v181
  %v183 = vrot.slane %v178, %v182
  %v186 = vsel %vm66, %v176, 0
  %188 = vmatprep.subr.mxu0 0.0
  %189 = vmatpush1.msra.mxu0 %v186
  %190 = vmatprep.subr.mxu0 0.0
  %191 = vmatpush1.msra.mxu0 0.0
  %192 = vmatprep.subr.mxu0 0.0
  %193 = vmatpush1.msra.mxu0 0.0
  %194 = vmatprep.subr.mxu0 0.0
  %195 = vmatpush1.msra.mxu0 0.0
  %196 = vmatprep.subr.mxu0 0.0
  %197 = vmatpush1.msra.mxu0 0.0
  %198 = vmatprep.subr.mxu0 0.0
  %199 = vmatpush1.msra.mxu0 0.0
  %200 = vmatprep.subr.mxu0 0.0
  %201 = vmatpush1.msra.mxu0 0.0
  %202 = vmatprep.subr.mxu0 0.0
  %203 = vmatpush1.msra.mxu0 0.0
  %204 = vmatprep.subr.mxu0 0.0
  %205 = vmatpush1.msra.mxu0 0.0
  %206 = vmatprep.subr.mxu0 0.0
  %207 = vmatpush1.msra.mxu0 0.0
  %208 = vmatprep.subr.mxu0 0.0
  %209 = vmatpush1.msra.mxu0 0.0
  %210 = vmatprep.subr.mxu0 0.0
  %211 = vmatpush1.msra.mxu0 0.0
  %212 = vmatprep.subr.mxu0 0.0
  %213 = vmatpush1.msra.mxu0 0.0
  %214 = vmatprep.subr.mxu0 0.0
  %215 = vmatpush1.msra.mxu0 0.0
  %216 = vmatprep.subr.mxu0 0.0
  %217 = vmatpush1.msra.mxu0 0.0
  %218 = vmatprep.subr.mxu0 0.0
  %219 = vmatpush1.msra.mxu0 0.0
  %220 = vmatprep.subr.mxu0 0.0
  %221 = vmatpush1.msra.mxu0 0.0
  %222 = vmatprep.subr.mxu0 0.0
  %223 = vmatpush1.msra.mxu0 0.0
  %224 = vmatprep.subr.mxu0 0.0
  %225 = vmatpush1.msra.mxu0 0.0
  %226 = vmatprep.subr.mxu0 0.0
  %227 = vmatpush1.msra.mxu0 0.0
  %228 = vmatprep.subr.mxu0 0.0
  %229 = vmatpush1.msra.mxu0 0.0
  %230 = vmatprep.subr.mxu0 0.0
  %231 = vmatpush1.msra.mxu0 0.0
  %232 = vmatprep.subr.mxu0 0.0
  %233 = vmatpush1.msra.mxu0 0.0
  %234 = vmatprep.subr.mxu0 0.0
  %235 = vmatpush1.msra.mxu0 0.0
  %236 = vmatprep.subr.mxu0 0.0
  %237 = vmatpush1.msra.mxu0 0.0
  %238 = vmatprep.subr.mxu0 0.0
  %239 = vmatpush1.msra.mxu0 0.0
  %240 = vmatprep.subr.mxu0 0.0
  %241 = vmatpush1.msra.mxu0 0.0
  %242 = vmatprep.subr.mxu0 0.0
  %243 = vmatpush1.msra.mxu0 0.0
  %244 = vmatprep.subr.mxu0 0.0
  %245 = vmatpush1.msra.mxu0 0.0
  %246 = vmatprep.subr.mxu0 0.0
  %247 = vmatpush1.msra.mxu0 0.0
  %248 = vmatprep.subr.mxu0 0.0
  %249 = vmatpush1.msra.mxu0 0.0
  %250 = vmatprep.subr.mxu0 0.0
  %251 = vmatpush1.msra.mxu0 0.0
  %252 = vmatprep.mubr.f32.mxu0 0.0
  %253 = vmatmul.mubr.f32.gmra.mrb[0].mxu0 %v43
  %v254 = vpop.f32.mrb[0].mxu0
  %v255 = vadd.f32 %v183, %v254
  %v256 = vpop.f32.mrb[0].mxu0
  %257 = vmatprep.mubr.f32.mxu0 0.0
  %258 = vmatmul.mubr.f32.gmra.mrb[0].mxu0 %v46
  %v259 = vpop.f32.mrb[0].mxu0
  %v260 = vadd.f32 %v183, %v259
  %v261 = vpop.f32.mrb[0].mxu0
  %262 = vmatprep.mubr.f32.mxu0 0.0
  %263 = vmatmul.mubr.f32.gmra.mrb[0].mxu0 %v49
  %v264 = vpop.f32.mrb[0].mxu0
  %v265 = vadd.f32 %v183, %v264
  %v266 = vpop.f32.mrb[0].mxu0
  %267 = vmatprep.mubr.f32.mxu0 0.0
  %268 = vmatmul.mubr.f32.gmra.mrb[0].mxu0 %v52
  %v269 = vpop.f32.mrb[0].mxu0
  %v270 = vadd.f32 %v183, %v269
  %v271 = vpop.f32.mrb[0].mxu0
  %272 = vmatprep.mubr.f32.mxu0 0.0
  %273 = vmatmul.mubr.f32.gmra.mrb[0].mxu0 %v55
  %v274 = vpop.f32.mrb[0].mxu0
  %v275 = vadd.f32 %v183, %v274
  %v276 = vpop.f32.mrb[0].mxu0
  %277 = vmatprep.mubr.f32.mxu0 0.0
  %278 = vmatmul.mubr.f32.gmra.mrb[0].mxu0 %v58
  %v279 = vpop.f32.mrb[0].mxu0
  %v280 = vadd.f32 %v183, %v279
  %v281 = vpop.f32.mrb[0].mxu0
  %282 = vmatprep.mubr.f32.mxu0 0.0
  %283 = vmatmul.mubr.f32.gmra.mrb[0].mxu0 %v61
  %v284 = vpop.f32.mrb[0].mxu0
  %v285 = vadd.f32 %v183, %v284
  %v286 = vpop.f32.mrb[0].mxu0
  %287 = vmatprep.mubr.f32.mxu0 0.0
  %288 = vmatmul.mubr.f32.gmra.mrb[0].mxu0 %v64
  %v289 = vpop.f32.mrb[0].mxu0
  %v290 = vadd.f32 %v183, %v289
  %v291 = vpop.f32.mrb[0].mxu0
  %292 = vdwg.mxu0
  %s293 = scalar_lea.vmem %s1, 8
  %v294 = vld [vmem:[%s293] sm:$0x7]
  %s295 = scalar_lea.vmem %s2, 2
  %v296 = vld [vmem:[%s295] sm:$0x1]
  %v298 = vlaneseq
  %v299 = vshrl.u32 %v298, 7
  %v300 = vsub.s32 0, %v299
  %v301 = vrot.slane %v296, %v300
  %v304 = vsel %vm66, %v294, 0
  %306 = vmatprep.subr.mxu0 0.0
  %307 = vmatpush1.msra.mxu0 %v304
  %308 = vmatprep.subr.mxu0 0.0
  %309 = vmatpush1.msra.mxu0 0.0
  %310 = vmatprep.subr.mxu0 0.0
  %311 = vmatpush1.msra.mxu0 0.0
  %312 = vmatprep.subr.mxu0 0.0
  %313 = vmatpush1.msra.mxu0 0.0
  %314 = vmatprep.subr.mxu0 0.0
  %315 = vmatpush1.msra.mxu0 0.0
  %316 = vmatprep.subr.mxu0 0.0
  %317 = vmatpush1.msra.mxu0 0.0
  %318 = vmatprep.subr.mxu0 0.0
  %319 = vmatpush1.msra.mxu0 0.0
  %320 = vmatprep.subr.mxu0 0.0
  %321 = vmatpush1.msra.mxu0 0.0
  %322 = vmatprep.subr.mxu0 0.0
  %323 = vmatpush1.msra.mxu0 0.0
  %324 = vmatprep.subr.mxu0 0.0
  %325 = vmatpush1.msra.mxu0 0.0
  %326 = vmatprep.subr.mxu0 0.0
  %327 = vmatpush1.msra.mxu0 0.0
  %328 = vmatprep.subr.mxu0 0.0
  %329 = vmatpush1.msra.mxu0 0.0
  %330 = vmatprep.subr.mxu0 0.0
  %331 = vmatpush1.msra.mxu0 0.0
  %332 = vmatprep.subr.mxu0 0.0
  %333 = vmatpush1.msra.mxu0 0.0
  %334 = vmatprep.subr.mxu0 0.0
  %335 = vmatpush1.msra.mxu0 0.0
  %336 = vmatprep.subr.mxu0 0.0
  %337 = vmatpush1.msra.mxu0 0.0
  %338 = vmatprep.subr.mxu0 0.0
  %339 = vmatpush1.msra.mxu0 0.0
  %340 = vmatprep.subr.mxu0 0.0
  %341 = vmatpush1.msra.mxu0 0.0
  %342 = vmatprep.subr.mxu0 0.0
  %343 = vmatpush1.msra.mxu0 0.0
  %344 = vmatprep.subr.mxu0 0.0
  %345 = vmatpush1.msra.mxu0 0.0
  %346 = vmatprep.subr.mxu0 0.0
  %347 = vmatpush1.msra.mxu0 0.0
  %348 = vmatprep.subr.mxu0 0.0
  %349 = vmatpush1.msra.mxu0 0.0
  %350 = vmatprep.subr.mxu0 0.0
  %351 = vmatpush1.msra.mxu0 0.0
  %352 = vmatprep.subr.mxu0 0.0
  %353 = vmatpush1.msra.mxu0 0.0
  %354 = vmatprep.subr.mxu0 0.0
  %355 = vmatpush1.msra.mxu0 0.0
  %356 = vmatprep.subr.mxu0 0.0
  %357 = vmatpush1.msra.mxu0 0.0
  %358 = vmatprep.subr.mxu0 0.0
  %359 = vmatpush1.msra.mxu0 0.0
  %360 = vmatprep.subr.mxu0 0.0
  %361 = vmatpush1.msra.mxu0 0.0
  %362 = vmatprep.subr.mxu0 0.0
  %363 = vmatpush1.msra.mxu0 0.0
  %364 = vmatprep.subr.mxu0 0.0
  %365 = vmatpush1.msra.mxu0 0.0
  %366 = vmatprep.subr.mxu0 0.0
  %367 = vmatpush1.msra.mxu0 0.0
  %368 = vmatprep.subr.mxu0 0.0
  %369 = vmatpush1.msra.mxu0 0.0
  %370 = vmatprep.mubr.f32.mxu0 0.0
  %371 = vmatmul.mubr.f32.gmra.mrb[0].mxu0 %v43
  %v372 = vpop.f32.mrb[0].mxu0
  %v373 = vadd.f32 %v301, %v372
  %v374 = vpop.f32.mrb[0].mxu0
  %375 = vmatprep.mubr.f32.mxu0 0.0
  %376 = vmatmul.mubr.f32.gmra.mrb[0].mxu0 %v46
  %v377 = vpop.f32.mrb[0].mxu0
  %v378 = vadd.f32 %v301, %v377
  %v379 = vpop.f32.mrb[0].mxu0
  %380 = vmatprep.mubr.f32.mxu0 0.0
  %381 = vmatmul.mubr.f32.gmra.mrb[0].mxu0 %v49
  %v382 = vpop.f32.mrb[0].mxu0
  %v383 = vadd.f32 %v301, %v382
  %v384 = vpop.f32.mrb[0].mxu0
  %385 = vmatprep.mubr.f32.mxu0 0.0
  %386 = vmatmul.mubr.f32.gmra.mrb[0].mxu0 %v52
  %v387 = vpop.f32.mrb[0].mxu0
  %v388 = vadd.f32 %v301, %v387
  %v389 = vpop.f32.mrb[0].mxu0
  %390 = vmatprep.mubr.f32.mxu0 0.0
  %391 = vmatmul.mubr.f32.gmra.mrb[0].mxu0 %v55
  %v392 = vpop.f32.mrb[0].mxu0
  %v393 = vadd.f32 %v301, %v392
  %v394 = vpop.f32.mrb[0].mxu0
  %395 = vmatprep.mubr.f32.mxu0 0.0
  %396 = vmatmul.mubr.f32.gmra.mrb[0].mxu0 %v58
  %v397 = vpop.f32.mrb[0].mxu0
  %v398 = vadd.f32 %v301, %v397
  %v399 = vpop.f32.mrb[0].mxu0
  %400 = vmatprep.mubr.f32.mxu0 0.0
  %401 = vmatmul.mubr.f32.gmra.mrb[0].mxu0 %v61
  %v402 = vpop.f32.mrb[0].mxu0
  %v403 = vadd.f32 %v301, %v402
  %v404 = vpop.f32.mrb[0].mxu0
  %405 = vmatprep.mubr.f32.mxu0 0.0
  %406 = vmatmul.mubr.f32.gmra.mrb[0].mxu0 %v64
  %v407 = vpop.f32.mrb[0].mxu0
  %v408 = vadd.f32 %v301, %v407
  %v409 = vpop.f32.mrb[0].mxu0
  %410 = vdwg.mxu0
  %s411 = scalar_lea.vmem %s1, 12
  %v412 = vld [vmem:[%s411] sm:$0x7]
  %s413 = scalar_lea.vmem %s2, 3
  %v414 = vld [vmem:[%s413] sm:$0x1]
  %v416 = vlaneseq
  %v417 = vshrl.u32 %v416, 7
  %v418 = vsub.s32 0, %v417
  %v419 = vrot.slane %v414, %v418
  %v422 = vsel %vm66, %v412, 0
  %424 = vmatprep.subr.mxu0 0.0
  %425 = vmatpush1.msra.mxu0 %v422
  %426 = vmatprep.subr.mxu0 0.0
  %427 = vmatpush1.msra.mxu0 0.0
  %428 = vmatprep.subr.mxu0 0.0
  %429 = vmatpush1.msra.mxu0 0.0
  %430 = vmatprep.subr.mxu0 0.0
  %431 = vmatpush1.msra.mxu0 0.0
  %432 = vmatprep.subr.mxu0 0.0
  %433 = vmatpush1.msra.mxu0 0.0
  %434 = vmatprep.subr.mxu0 0.0
  %435 = vmatpush1.msra.mxu0 0.0
  %436 = vmatprep.subr.mxu0 0.0
  %437 = vmatpush1.msra.mxu0 0.0
  %438 = vmatprep.subr.mxu0 0.0
  %439 = vmatpush1.msra.mxu0 0.0
  %440 = vmatprep.subr.mxu0 0.0
  %441 = vmatpush1.msra.mxu0 0.0
  %442 = vmatprep.subr.mxu0 0.0
  %443 = vmatpush1.msra.mxu0 0.0
  %444 = vmatprep.subr.mxu0 0.0
  %445 = vmatpush1.msra.mxu0 0.0
  %446 = vmatprep.subr.mxu0 0.0
  %447 = vmatpush1.msra.mxu0 0.0
  %448 = vmatprep.subr.mxu0 0.0
  %449 = vmatpush1.msra.mxu0 0.0
  %450 = vmatprep.subr.mxu0 0.0
  %451 = vmatpush1.msra.mxu0 0.0
  %452 = vmatprep.subr.mxu0 0.0
  %453 = vmatpush1.msra.mxu0 0.0
  %454 = vmatprep.subr.mxu0 0.0
  %455 = vmatpush1.msra.mxu0 0.0
  %456 = vmatprep.subr.mxu0 0.0
  %457 = vmatpush1.msra.mxu0 0.0
  %458 = vmatprep.subr.mxu0 0.0
  %459 = vmatpush1.msra.mxu0 0.0
  %460 = vmatprep.subr.mxu0 0.0
  %461 = vmatpush1.msra.mxu0 0.0
  %462 = vmatprep.subr.mxu0 0.0
  %463 = vmatpush1.msra.mxu0 0.0
  %464 = vmatprep.subr.mxu0 0.0
  %465 = vmatpush1.msra.mxu0 0.0
  %466 = vmatprep.subr.mxu0 0.0
  %467 = vmatpush1.msra.mxu0 0.0
  %468 = vmatprep.subr.mxu0 0.0
  %469 = vmatpush1.msra.mxu0 0.0
  %470 = vmatprep.subr.mxu0 0.0
  %471 = vmatpush1.msra.mxu0 0.0
  %472 = vmatprep.subr.mxu0 0.0
  %473 = vmatpush1.msra.mxu0 0.0
  %474 = vmatprep.subr.mxu0 0.0
  %475 = vmatpush1.msra.mxu0 0.0
  %476 = vmatprep.subr.mxu0 0.0
  %477 = vmatpush1.msra.mxu0 0.0
  %478 = vmatprep.subr.mxu0 0.0
  %479 = vmatpush1.msra.mxu0 0.0
  %480 = vmatprep.subr.mxu0 0.0
  %481 = vmatpush1.msra.mxu0 0.0
  %482 = vmatprep.subr.mxu0 0.0
  %483 = vmatpush1.msra.mxu0 0.0
  %484 = vmatprep.subr.mxu0 0.0
  %485 = vmatpush1.msra.mxu0 0.0
  %486 = vmatprep.subr.mxu0 0.0
  %487 = vmatpush1.msra.mxu0 0.0
  %488 = vmatprep.mubr.f32.mxu0 0.0
  %489 = vmatmul.mubr.f32.gmra.mrb[0].mxu0 %v43
  %v490 = vpop.f32.mrb[0].mxu0
  %v491 = vadd.f32 %v419, %v490
  %v492 = vpop.f32.mrb[0].mxu0
  %493 = vmatprep.mubr.f32.mxu0 0.0
  %494 = vmatmul.mubr.f32.gmra.mrb[0].mxu0 %v46
  %v495 = vpop.f32.mrb[0].mxu0
  %v496 = vadd.f32 %v419, %v495
  %v497 = vpop.f32.mrb[0].mxu0
  %498 = vmatprep.mubr.f32.mxu0 0.0
  %499 = vmatmul.mubr.f32.gmra.mrb[0].mxu0 %v49
  %v500 = vpop.f32.mrb[0].mxu0
  %v501 = vadd.f32 %v419, %v500
  %v502 = vpop.f32.mrb[0].mxu0
  %503 = vmatprep.mubr.f32.mxu0 0.0
  %504 = vmatmul.mubr.f32.gmra.mrb[0].mxu0 %v52
  %v505 = vpop.f32.mrb[0].mxu0
  %v506 = vadd.f32 %v419, %v505
  %v507 = vpop.f32.mrb[0].mxu0
  %508 = vmatprep.mubr.f32.mxu0 0.0
  %509 = vmatmul.mubr.f32.gmra.mrb[0].mxu0 %v55
  %v510 = vpop.f32.mrb[0].mxu0
  %v511 = vadd.f32 %v419, %v510
  %v512 = vpop.f32.mrb[0].mxu0
  %513 = vmatprep.mubr.f32.mxu0 0.0
  %514 = vmatmul.mubr.f32.gmra.mrb[0].mxu0 %v58
  %v515 = vpop.f32.mrb[0].mxu0
  %v516 = vadd.f32 %v419, %v515
  %v517 = vpop.f32.mrb[0].mxu0
  %518 = vmatprep.mubr.f32.mxu0 0.0
  %519 = vmatmul.mubr.f32.gmra.mrb[0].mxu0 %v61
  %v520 = vpop.f32.mrb[0].mxu0
  %v521 = vadd.f32 %v419, %v520
  %v522 = vpop.f32.mrb[0].mxu0
  %523 = vmatprep.mubr.f32.mxu0 0.0
  %524 = vmatmul.mubr.f32.gmra.mrb[0].mxu0 %v64
  %v525 = vpop.f32.mrb[0].mxu0
  %v526 = vadd.f32 %v419, %v525
  %v527 = vpop.f32.mrb[0].mxu0
  %528 = vdwg.mxu0
  %v529 = vld [vmem:[%s3] sm:$0xff]
  %v530 = vld [vmem:[%s3 + $0x8] sm:$0xff]
  %s531 = scalar_lea.vmem %s3, 16
  %v532 = vld [vmem:[%s531] sm:$0xff]
  %v533 = vld [vmem:[%s531 + $0x8] sm:$0xff]
  %s534 = scalar_lea.vmem %s3, 32
  %v535 = vld [vmem:[%s534] sm:$0xff]
  %v536 = vld [vmem:[%s534 + $0x8] sm:$0xff]
  %s537 = scalar_lea.vmem %s3, 48
  %v538 = vld [vmem:[%s537] sm:$0xff]
  %v539 = vld [vmem:[%s537 + $0x8] sm:$0xff]
  %vm540 = vcmask 130048
  %v542 = vsel %vm540, 0.0, 0
  %544 = vmatprep.subr.mxu0 0.0
  %545 = vmatpush1.msra.mxu0 %v529
  %546 = vmatprep.subr.mxu0 0.0
  %547 = vmatpush1.msra.mxu0 %v530
  %548 = vmatprep.subr.mxu0 0.0
  %549 = vmatpush1.msra.mxu0 0.0
  %550 = vmatprep.subr.mxu0 0.0
  %551 = vmatpush1.msra.mxu0 0.0
  %552 = vmatprep.subr.mxu0 0.0
  %553 = vmatpush1.msra.mxu0 0.0
  %554 = vmatprep.subr.mxu0 0.0
  %555 = vmatpush1.msra.mxu0 0.0
  %556 = vmatprep.subr.mxu0 0.0
  %557 = vmatpush1.msra.mxu0 0.0
  %558 = vmatprep.subr.mxu0 0.0
  %559 = vmatpush1.msra.mxu0 0.0
  %560 = vmatprep.subr.mxu0 0.0
  %561 = vmatpush1.msra.mxu0 0.0
  %562 = vmatprep.subr.mxu0 0.0
  %563 = vmatpush1.msra.mxu0 0.0
  %564 = vmatprep.subr.mxu0 0.0
  %565 = vmatpush1.msra.mxu0 0.0
  %566 = vmatprep.subr.mxu0 0.0
  %567 = vmatpush1.msra.mxu0 0.0
  %568 = vmatprep.subr.mxu0 0.0
  %569 = vmatpush1.msra.mxu0 0.0
  %570 = vmatprep.subr.mxu0 0.0
  %571 = vmatpush1.msra.mxu0 0.0
  %572 = vmatprep.subr.mxu0 0.0
  %573 = vmatpush1.msra.mxu0 0.0
  %574 = vmatprep.subr.mxu0 0.0
  %575 = vmatpush1.msra.mxu0 0.0
  %576 = vmatprep.subr.mxu0 0.0
  %577 = vmatpush1.msra.mxu0 0.0
  %578 = vmatprep.subr.mxu0 0.0
  %579 = vmatpush1.msra.mxu0 0.0
  %580 = vmatprep.subr.mxu0 0.0
  %581 = vmatpush1.msra.mxu0 0.0
  %582 = vmatprep.subr.mxu0 0.0
  %583 = vmatpush1.msra.mxu0 0.0
  %584 = vmatprep.subr.mxu0 0.0
  %585 = vmatpush1.msra.mxu0 0.0
  %586 = vmatprep.subr.mxu0 0.0
  %587 = vmatpush1.msra.mxu0 0.0
  %588 = vmatprep.subr.mxu0 0.0
  %589 = vmatpush1.msra.mxu0 0.0
  %590 = vmatprep.subr.mxu0 0.0
  %591 = vmatpush1.msra.mxu0 0.0
  %592 = vmatprep.subr.mxu0 0.0
  %593 = vmatpush1.msra.mxu0 0.0
  %594 = vmatprep.subr.mxu0 0.0
  %595 = vmatpush1.msra.mxu0 0.0
  %596 = vmatprep.subr.mxu0 0.0
  %597 = vmatpush1.msra.mxu0 0.0
  %598 = vmatprep.subr.mxu0 0.0
  %599 = vmatpush1.msra.mxu0 0.0
  %600 = vmatprep.subr.mxu0 0.0
  %601 = vmatpush1.msra.mxu0 0.0
  %602 = vmatprep.subr.mxu0 0.0
  %603 = vmatpush1.msra.mxu0 0.0
  %604 = vmatprep.subr.mxu0 0.0
  %605 = vmatpush1.msra.mxu0 0.0
  %606 = vmatprep.subr.mxu0 0.0
  %607 = vmatpush1.msra.mxu0 0.0
  %608 = vmatprep.mubr.f32.mxu0 0.0
  %609 = vmatmul.mubr.f32.gmra.mrb[0].mxu0 %v542
  %v610 = vpop.f32.mrb[0].mxu0
  %v611 = vadd.f32 0.0, %v610
  %v612 = vpop.f32.mrb[0].mxu0
  %613 = vdwg.mxu0
  %v614 = vadd.f32 %v137, %v611
  %615 = vmatprep.subr.mxu0 0.0
  %616 = vmatpush1.msra.mxu0 %v532
  %617 = vmatprep.subr.mxu0 0.0
  %618 = vmatpush1.msra.mxu0 %v533
  %619 = vmatprep.subr.mxu0 0.0
  %620 = vmatpush1.msra.mxu0 0.0
  %621 = vmatprep.subr.mxu0 0.0
  %622 = vmatpush1.msra.mxu0 0.0
  %623 = vmatprep.subr.mxu0 0.0
  %624 = vmatpush1.msra.mxu0 0.0
  %625 = vmatprep.subr.mxu0 0.0
  %626 = vmatpush1.msra.mxu0 0.0
  %627 = vmatprep.subr.mxu0 0.0
  %628 = vmatpush1.msra.mxu0 0.0
  %629 = vmatprep.subr.mxu0 0.0
  %630 = vmatpush1.msra.mxu0 0.0
  %631 = vmatprep.subr.mxu0 0.0
  %632 = vmatpush1.msra.mxu0 0.0
  %633 = vmatprep.subr.mxu0 0.0
  %634 = vmatpush1.msra.mxu0 0.0
  %635 = vmatprep.subr.mxu0 0.0
  %636 = vmatpush1.msra.mxu0 0.0
  %637 = vmatprep.subr.mxu0 0.0
  %638 = vmatpush1.msra.mxu0 0.0
  %639 = vmatprep.subr.mxu0 0.0
  %640 = vmatpush1.msra.mxu0 0.0
  %641 = vmatprep.subr.mxu0 0.0
  %642 = vmatpush1.msra.mxu0 0.0
  %643 = vmatprep.subr.mxu0 0.0
  %644 = vmatpush1.msra.mxu0 0.0
  %645 = vmatprep.subr.mxu0 0.0
  %646 = vmatpush1.msra.mxu0 0.0
  %647 = vmatprep.subr.mxu0 0.0
  %648 = vmatpush1.msra.mxu0 0.0
  %649 = vmatprep.subr.mxu0 0.0
  %650 = vmatpush1.msra.mxu0 0.0
  %651 = vmatprep.subr.mxu0 0.0
  %652 = vmatpush1.msra.mxu0 0.0
  %653 = vmatprep.subr.mxu0 0.0
  %654 = vmatpush1.msra.mxu0 0.0
  %655 = vmatprep.subr.mxu0 0.0
  %656 = vmatpush1.msra.mxu0 0.0
  %657 = vmatprep.subr.mxu0 0.0
  %658 = vmatpush1.msra.mxu0 0.0
  %659 = vmatprep.subr.mxu0 0.0
  %660 = vmatpush1.msra.mxu0 0.0
  %661 = vmatprep.subr.mxu0 0.0
  %662 = vmatpush1.msra.mxu0 0.0
  %663 = vmatprep.subr.mxu0 0.0
  %664 = vmatpush1.msra.mxu0 0.0
  %665 = vmatprep.subr.mxu0 0.0
  %666 = vmatpush1.msra.mxu0 0.0
  %667 = vmatprep.subr.mxu0 0.0
  %668 = vmatpush1.msra.mxu0 0.0
  %669 = vmatprep.subr.mxu0 0.0
  %670 = vmatpush1.msra.mxu0 0.0
  %671 = vmatprep.subr.mxu0 0.0
  %672 = vmatpush1.msra.mxu0 0.0
  %673 = vmatprep.subr.mxu0 0.0
  %674 = vmatpush1.msra.mxu0 0.0
  %675 = vmatprep.subr.mxu0 0.0
  %676 = vmatpush1.msra.mxu0 0.0
  %677 = vmatprep.subr.mxu0 0.0
  %678 = vmatpush1.msra.mxu0 0.0
  %679 = vmatprep.mubr.f32.mxu0 0.0
  %680 = vmatmul.mubr.f32.gmra.mrb[0].mxu0 %v542
  %v681 = vpop.f32.mrb[0].mxu0
  %v682 = vadd.f32 0.0, %v681
  %v683 = vpop.f32.mrb[0].mxu0
  %684 = vdwg.mxu0
  %v685 = vadd.f32 %v255, %v682
  %686 = vmatprep.subr.mxu0 0.0
  %687 = vmatpush1.msra.mxu0 %v535
  %688 = vmatprep.subr.mxu0 0.0
  %689 = vmatpush1.msra.mxu0 %v536
  %690 = vmatprep.subr.mxu0 0.0
  %691 = vmatpush1.msra.mxu0 0.0
  %692 = vmatprep.subr.mxu0 0.0
  %693 = vmatpush1.msra.mxu0 0.0
  %694 = vmatprep.subr.mxu0 0.0
  %695 = vmatpush1.msra.mxu0 0.0
  %696 = vmatprep.subr.mxu0 0.0
  %697 = vmatpush1.msra.mxu0 0.0
  %698 = vmatprep.subr.mxu0 0.0
  %699 = vmatpush1.msra.mxu0 0.0
  %700 = vmatprep.subr.mxu0 0.0
  %701 = vmatpush1.msra.mxu0 0.0
  %702 = vmatprep.subr.mxu0 0.0
  %703 = vmatpush1.msra.mxu0 0.0
  %704 = vmatprep.subr.mxu0 0.0
  %705 = vmatpush1.msra.mxu0 0.0
  %706 = vmatprep.subr.mxu0 0.0
  %707 = vmatpush1.msra.mxu0 0.0
  %708 = vmatprep.subr.mxu0 0.0
  %709 = vmatpush1.msra.mxu0 0.0
  %710 = vmatprep.subr.mxu0 0.0
  %711 = vmatpush1.msra.mxu0 0.0
  %712 = vmatprep.subr.mxu0 0.0
  %713 = vmatpush1.msra.mxu0 0.0
  %714 = vmatprep.subr.mxu0 0.0
  %715 = vmatpush1.msra.mxu0 0.0
  %716 = vmatprep.subr.mxu0 0.0
  %717 = vmatpush1.msra.mxu0 0.0
  %718 = vmatprep.subr.mxu0 0.0
  %719 = vmatpush1.msra.mxu0 0.0
  %720 = vmatprep.subr.mxu0 0.0
  %721 = vmatpush1.msra.mxu0 0.0
  %722 = vmatprep.subr.mxu0 0.0
  %723 = vmatpush1.msra.mxu0 0.0
  %724 = vmatprep.subr.mxu0 0.0
  %725 = vmatpush1.msra.mxu0 0.0
  %726 = vmatprep.subr.mxu0 0.0
  %727 = vmatpush1.msra.mxu0 0.0
  %728 = vmatprep.subr.mxu0 0.0
  %729 = vmatpush1.msra.mxu0 0.0
  %730 = vmatprep.subr.mxu0 0.0
  %731 = vmatpush1.msra.mxu0 0.0
  %732 = vmatprep.subr.mxu0 0.0
  %733 = vmatpush1.msra.mxu0 0.0
  %734 = vmatprep.subr.mxu0 0.0
  %735 = vmatpush1.msra.mxu0 0.0
  %736 = vmatprep.subr.mxu0 0.0
  %737 = vmatpush1.msra.mxu0 0.0
  %738 = vmatprep.subr.mxu0 0.0
  %739 = vmatpush1.msra.mxu0 0.0
  %740 = vmatprep.subr.mxu0 0.0
  %741 = vmatpush1.msra.mxu0 0.0
  %742 = vmatprep.subr.mxu0 0.0
  %743 = vmatpush1.msra.mxu0 0.0
  %744 = vmatprep.subr.mxu0 0.0
  %745 = vmatpush1.msra.mxu0 0.0
  %746 = vmatprep.subr.mxu0 0.0
  %747 = vmatpush1.msra.mxu0 0.0
  %748 = vmatprep.subr.mxu0 0.0
  %749 = vmatpush1.msra.mxu0 0.0
  %750 = vmatprep.mubr.f32.mxu0 0.0
  %751 = vmatmul.mubr.f32.gmra.mrb[0].mxu0 %v542
  %v752 = vpop.f32.mrb[0].mxu0
  %v753 = vadd.f32 0.0, %v752
  %v754 = vpop.f32.mrb[0].mxu0
  %755 = vdwg.mxu0
  %v756 = vadd.f32 %v373, %v753
  %757 = vmatprep.subr.mxu0 0.0
  %758 = vmatpush1.msra.mxu0 %v538
  %759 = vmatprep.subr.mxu0 0.0
  %760 = vmatpush1.msra.mxu0 %v539
  %761 = vmatprep.subr.mxu0 0.0
  %762 = vmatpush1.msra.mxu0 0.0
  %763 = vmatprep.subr.mxu0 0.0
  %764 = vmatpush1.msra.mxu0 0.0
  %765 = vmatprep.subr.mxu0 0.0
  %766 = vmatpush1.msra.mxu0 0.0
  %767 = vmatprep.subr.mxu0 0.0
  %768 = vmatpush1.msra.mxu0 0.0
  %769 = vmatprep.subr.mxu0 0.0
  %770 = vmatpush1.msra.mxu0 0.0
  %771 = vmatprep.subr.mxu0 0.0
  %772 = vmatpush1.msra.mxu0 0.0
  %773 = vmatprep.subr.mxu0 0.0
  %774 = vmatpush1.msra.mxu0 0.0
  %775 = vmatprep.subr.mxu0 0.0
  %776 = vmatpush1.msra.mxu0 0.0
  %777 = vmatprep.subr.mxu0 0.0
  %778 = vmatpush1.msra.mxu0 0.0
  %779 = vmatprep.subr.mxu0 0.0
  %780 = vmatpush1.msra.mxu0 0.0
  %781 = vmatprep.subr.mxu0 0.0
  %782 = vmatpush1.msra.mxu0 0.0
  %783 = vmatprep.subr.mxu0 0.0
  %784 = vmatpush1.msra.mxu0 0.0
  %785 = vmatprep.subr.mxu0 0.0
  %786 = vmatpush1.msra.mxu0 0.0
  %787 = vmatprep.subr.mxu0 0.0
  %788 = vmatpush1.msra.mxu0 0.0
  %789 = vmatprep.subr.mxu0 0.0
  %790 = vmatpush1.msra.mxu0 0.0
  %791 = vmatprep.subr.mxu0 0.0
  %792 = vmatpush1.msra.mxu0 0.0
  %793 = vmatprep.subr.mxu0 0.0
  %794 = vmatpush1.msra.mxu0 0.0
  %795 = vmatprep.subr.mxu0 0.0
  %796 = vmatpush1.msra.mxu0 0.0
  %797 = vmatprep.subr.mxu0 0.0
  %798 = vmatpush1.msra.mxu0 0.0
  %799 = vmatprep.subr.mxu0 0.0
  %800 = vmatpush1.msra.mxu0 0.0
  %801 = vmatprep.subr.mxu0 0.0
  %802 = vmatpush1.msra.mxu0 0.0
  %803 = vmatprep.subr.mxu0 0.0
  %804 = vmatpush1.msra.mxu0 0.0
  %805 = vmatprep.subr.mxu0 0.0
  %806 = vmatpush1.msra.mxu0 0.0
  %807 = vmatprep.subr.mxu0 0.0
  %808 = vmatpush1.msra.mxu0 0.0
  %809 = vmatprep.subr.mxu0 0.0
  %810 = vmatpush1.msra.mxu0 0.0
  %811 = vmatprep.subr.mxu0 0.0
  %812 = vmatpush1.msra.mxu0 0.0
  %813 = vmatprep.subr.mxu0 0.0
  %814 = vmatpush1.msra.mxu0 0.0
  %815 = vmatprep.subr.mxu0 0.0
  %816 = vmatpush1.msra.mxu0 0.0
  %817 = vmatprep.subr.mxu0 0.0
  %818 = vmatpush1.msra.mxu0 0.0
  %819 = vmatprep.subr.mxu0 0.0
  %820 = vmatpush1.msra.mxu0 0.0
  %821 = vmatprep.mubr.f32.mxu0 0.0
  %822 = vmatmul.mubr.f32.gmra.mrb[0].mxu0 %v542
  %v823 = vpop.f32.mrb[0].mxu0
  %v824 = vadd.f32 0.0, %v823
  %v825 = vpop.f32.mrb[0].mxu0
  %826 = vdwg.mxu0
  %v827 = vadd.f32 %v491, %v824
  %v828 = vxor.u32 %v614, 2147483648
  %v829 = vmul.f32 %v828, 1.442695
  %v830 = vpow.pop %v829
  %v831 = vadd.f32 %v830, 1.0
  %v832 = vrcp.pop %v831
  %v833 = vmul.f32 1.0, %v832
  %v834 = vxor.u32 %v685, 2147483648
  %v835 = vmul.f32 %v834, 1.442695
  %v836 = vpow.pop %v835
  %v837 = vadd.f32 %v836, 1.0
  %v838 = vrcp.pop %v837
  %v839 = vmul.f32 1.0, %v838
  %v840 = vtanh.pop %v756
  %v841 = vxor.u32 %v827, 2147483648
  %v842 = vmul.f32 %v841, 1.442695
  %v843 = vpow.pop %v842
  %v844 = vadd.f32 %v843, 1.0
  %v845 = vrcp.pop %v844
  %v846 = vmul.f32 1.0, %v845
  %v847 = vmul.f32 %v839, 0.0
  %v848 = vmul.f32 %v833, %v840
  %v849 = vadd.f32 %v847, %v848
  %v850 = vtanh.pop %v849
  %v851 = vmul.f32 %v846, %v850
  %v853 = vsel %vm540, %v851, 0
  %855 = vmatprep.subr.mxu0 0.0
  %856 = vmatpush1.msra.mxu0 %v529
  %857 = vmatprep.subr.mxu0 0.0
  %858 = vmatpush1.msra.mxu0 %v530
  %859 = vmatprep.subr.mxu0 0.0
  %860 = vmatpush1.msra.mxu0 0.0
  %861 = vmatprep.subr.mxu0 0.0
  %862 = vmatpush1.msra.mxu0 0.0
  %863 = vmatprep.subr.mxu0 0.0
  %864 = vmatpush1.msra.mxu0 0.0
  %865 = vmatprep.subr.mxu0 0.0
  %866 = vmatpush1.msra.mxu0 0.0
  %867 = vmatprep.subr.mxu0 0.0
  %868 = vmatpush1.msra.mxu0 0.0
  %869 = vmatprep.subr.mxu0 0.0
  %870 = vmatpush1.msra.mxu0 0.0
  %871 = vmatprep.subr.mxu0 0.0
  %872 = vmatpush1.msra.mxu0 0.0
  %873 = vmatprep.subr.mxu0 0.0
  %874 = vmatpush1.msra.mxu0 0.0
  %875 = vmatprep.subr.mxu0 0.0
  %876 = vmatpush1.msra.mxu0 0.0
  %877 = vmatprep.subr.mxu0 0.0
  %878 = vmatpush1.msra.mxu0 0.0
  %879 = vmatprep.subr.mxu0 0.0
  %880 = vmatpush1.msra.mxu0 0.0
  %881 = vmatprep.subr.mxu0 0.0
  %882 = vmatpush1.msra.mxu0 0.0
  %883 = vmatprep.subr.mxu0 0.0
  %884 = vmatpush1.msra.mxu0 0.0
  %885 = vmatprep.subr.mxu0 0.0
  %886 = vmatpush1.msra.mxu0 0.0
  %887 = vmatprep.subr.mxu0 0.0
  %888 = vmatpush1.msra.mxu0 0.0
  %889 = vmatprep.subr.mxu0 0.0
  %890 = vmatpush1.msra.mxu0 0.0
  %891 = vmatprep.subr.mxu0 0.0
  %892 = vmatpush1.msra.mxu0 0.0
  %893 = vmatprep.subr.mxu0 0.0
  %894 = vmatpush1.msra.mxu0 0.0
  %895 = vmatprep.subr.mxu0 0.0
  %896 = vmatpush1.msra.mxu0 0.0
  %897 = vmatprep.subr.mxu0 0.0
  %898 = vmatpush1.msra.mxu0 0.0
  %899 = vmatprep.subr.mxu0 0.0
  %900 = vmatpush1.msra.mxu0 0.0
  %901 = vmatprep.subr.mxu0 0.0
  %902 = vmatpush1.msra.mxu0 0.0
  %903 = vmatprep.subr.mxu0 0.0
  %904 = vmatpush1.msra.mxu0 0.0
  %905 = vmatprep.subr.mxu0 0.0
  %906 = vmatpush1.msra.mxu0 0.0
  %907 = vmatprep.subr.mxu0 0.0
  %908 = vmatpush1.msra.mxu0 0.0
  %909 = vmatprep.subr.mxu0 0.0
  %910 = vmatpush1.msra.mxu0 0.0
  %911 = vmatprep.subr.mxu0 0.0
  %912 = vmatpush1.msra.mxu0 0.0
  %913 = vmatprep.subr.mxu0 0.0
  %914 = vmatpush1.msra.mxu0 0.0
  %915 = vmatprep.subr.mxu0 0.0
  %916 = vmatpush1.msra.mxu0 0.0
  %917 = vmatprep.subr.mxu0 0.0
  %918 = vmatpush1.msra.mxu0 0.0
  %919 = vmatprep.mubr.f32.mxu0 0.0
  %920 = vmatmul.mubr.f32.gmra.mrb[0].mxu0 %v853
  %v921 = vpop.f32.mrb[0].mxu0
  %v922 = vadd.f32 0.0, %v921
  %v923 = vpop.f32.mrb[0].mxu0
  %924 = vdwg.mxu0
  %v925 = vadd.f32 %v142, %v922
  %926 = vmatprep.subr.mxu0 0.0
  %927 = vmatpush1.msra.mxu0 %v532
  %928 = vmatprep.subr.mxu0 0.0
  %929 = vmatpush1.msra.mxu0 %v533
  %930 = vmatprep.subr.mxu0 0.0
  %931 = vmatpush1.msra.mxu0 0.0
  %932 = vmatprep.subr.mxu0 0.0
  %933 = vmatpush1.msra.mxu0 0.0
  %934 = vmatprep.subr.mxu0 0.0
  %935 = vmatpush1.msra.mxu0 0.0
  %936 = vmatprep.subr.mxu0 0.0
  %937 = vmatpush1.msra.mxu0 0.0
  %938 = vmatprep.subr.mxu0 0.0
  %939 = vmatpush1.msra.mxu0 0.0
  %940 = vmatprep.subr.mxu0 0.0
  %941 = vmatpush1.msra.mxu0 0.0
  %942 = vmatprep.subr.mxu0 0.0
  %943 = vmatpush1.msra.mxu0 0.0
  %944 = vmatprep.subr.mxu0 0.0
  %945 = vmatpush1.msra.mxu0 0.0
  %946 = vmatprep.subr.mxu0 0.0
  %947 = vmatpush1.msra.mxu0 0.0
  %948 = vmatprep.subr.mxu0 0.0
  %949 = vmatpush1.msra.mxu0 0.0
  %950 = vmatprep.subr.mxu0 0.0
  %951 = vmatpush1.msra.mxu0 0.0
  %952 = vmatprep.subr.mxu0 0.0
  %953 = vmatpush1.msra.mxu0 0.0
  %954 = vmatprep.subr.mxu0 0.0
  %955 = vmatpush1.msra.mxu0 0.0
  %956 = vmatprep.subr.mxu0 0.0
  %957 = vmatpush1.msra.mxu0 0.0
  %958 = vmatprep.subr.mxu0 0.0
  %959 = vmatpush1.msra.mxu0 0.0
  %960 = vmatprep.subr.mxu0 0.0
  %961 = vmatpush1.msra.mxu0 0.0
  %962 = vmatprep.subr.mxu0 0.0
  %963 = vmatpush1.msra.mxu0 0.0
  %964 = vmatprep.subr.mxu0 0.0
  %965 = vmatpush1.msra.mxu0 0.0
  %966 = vmatprep.subr.mxu0 0.0
  %967 = vmatpush1.msra.mxu0 0.0
  %968 = vmatprep.subr.mxu0 0.0
  %969 = vmatpush1.msra.mxu0 0.0
  %970 = vmatprep.subr.mxu0 0.0
  %971 = vmatpush1.msra.mxu0 0.0
  %972 = vmatprep.subr.mxu0 0.0
  %973 = vmatpush1.msra.mxu0 0.0
  %974 = vmatprep.subr.mxu0 0.0
  %975 = vmatpush1.msra.mxu0 0.0
  %976 = vmatprep.subr.mxu0 0.0
  %977 = vmatpush1.msra.mxu0 0.0
  %978 = vmatprep.subr.mxu0 0.0
  %979 = vmatpush1.msra.mxu0 0.0
  %980 = vmatprep.subr.mxu0 0.0
  %981 = vmatpush1.msra.mxu0 0.0
  %982 = vmatprep.subr.mxu0 0.0
  %983 = vmatpush1.msra.mxu0 0.0
  %984 = vmatprep.subr.mxu0 0.0
  %985 = vmatpush1.msra.mxu0 0.0
  %986 = vmatprep.subr.mxu0 0.0
  %987 = vmatpush1.msra.mxu0 0.0
  %988 = vmatprep.subr.mxu0 0.0
  %989 = vmatpush1.msra.mxu0 0.0
  %990 = vmatprep.mubr.f32.mxu0 0.0
  %991 = vmatmul.mubr.f32.gmra.mrb[0].mxu0 %v853
  %v992 = vpop.f32.mrb[0].mxu0
  %v993 = vadd.f32 0.0, %v992
  %v994 = vpop.f32.mrb[0].mxu0
  %995 = vdwg.mxu0
  %v996 = vadd.f32 %v260, %v993
  %997 = vmatprep.subr.mxu0 0.0
  %998 = vmatpush1.msra.mxu0 %v535
  %999 = vmatprep.subr.mxu0 0.0
  %1000 = vmatpush1.msra.mxu0 %v536
  %1001 = vmatprep.subr.mxu0 0.0
  %1002 = vmatpush1.msra.mxu0 0.0
  %1003 = vmatprep.subr.mxu0 0.0
  %1004 = vmatpush1.msra.mxu0 0.0
  %1005 = vmatprep.subr.mxu0 0.0
  %1006 = vmatpush1.msra.mxu0 0.0
  %1007 = vmatprep.subr.mxu0 0.0
  %1008 = vmatpush1.msra.mxu0 0.0
  %1009 = vmatprep.subr.mxu0 0.0
  %1010 = vmatpush1.msra.mxu0 0.0
  %1011 = vmatprep.subr.mxu0 0.0
  %1012 = vmatpush1.msra.mxu0 0.0
  %1013 = vmatprep.subr.mxu0 0.0
  %1014 = vmatpush1.msra.mxu0 0.0
  %1015 = vmatprep.subr.mxu0 0.0
  %1016 = vmatpush1.msra.mxu0 0.0
  %1017 = vmatprep.subr.mxu0 0.0
  %1018 = vmatpush1.msra.mxu0 0.0
  %1019 = vmatprep.subr.mxu0 0.0
  %1020 = vmatpush1.msra.mxu0 0.0
  %1021 = vmatprep.subr.mxu0 0.0
  %1022 = vmatpush1.msra.mxu0 0.0
  %1023 = vmatprep.subr.mxu0 0.0
  %1024 = vmatpush1.msra.mxu0 0.0
  %1025 = vmatprep.subr.mxu0 0.0
  %1026 = vmatpush1.msra.mxu0 0.0
  %1027 = vmatprep.subr.mxu0 0.0
  %1028 = vmatpush1.msra.mxu0 0.0
  %1029 = vmatprep.subr.mxu0 0.0
  %1030 = vmatpush1.msra.mxu0 0.0
  %1031 = vmatprep.subr.mxu0 0.0
  %1032 = vmatpush1.msra.mxu0 0.0
  %1033 = vmatprep.subr.mxu0 0.0
  %1034 = vmatpush1.msra.mxu0 0.0
  %1035 = vmatprep.subr.mxu0 0.0
  %1036 = vmatpush1.msra.mxu0 0.0
  %1037 = vmatprep.subr.mxu0 0.0
  %1038 = vmatpush1.msra.mxu0 0.0
  %1039 = vmatprep.subr.mxu0 0.0
  %1040 = vmatpush1.msra.mxu0 0.0
  %1041 = vmatprep.subr.mxu0 0.0
  %1042 = vmatpush1.msra.mxu0 0.0
  %1043 = vmatprep.subr.mxu0 0.0
  %1044 = vmatpush1.msra.mxu0 0.0
  %1045 = vmatprep.subr.mxu0 0.0
  %1046 = vmatpush1.msra.mxu0 0.0
  %1047 = vmatprep.subr.mxu0 0.0
  %1048 = vmatpush1.msra.mxu0 0.0
  %1049 = vmatprep.subr.mxu0 0.0
  %1050 = vmatpush1.msra.mxu0 0.0
  %1051 = vmatprep.subr.mxu0 0.0
  %1052 = vmatpush1.msra.mxu0 0.0
  %1053 = vmatprep.subr.mxu0 0.0
  %1054 = vmatpush1.msra.mxu0 0.0
  %1055 = vmatprep.subr.mxu0 0.0
  %1056 = vmatpush1.msra.mxu0 0.0
  %1057 = vmatprep.subr.mxu0 0.0
  %1058 = vmatpush1.msra.mxu0 0.0
  %1059 = vmatprep.subr.mxu0 0.0
  %1060 = vmatpush1.msra.mxu0 0.0
  %1061 = vmatprep.mubr.f32.mxu0 0.0
  %1062 = vmatmul.mubr.f32.gmra.mrb[0].mxu0 %v853
  %v1063 = vpop.f32.mrb[0].mxu0
  %v1064 = vadd.f32 0.0, %v1063
  %v1065 = vpop.f32.mrb[0].mxu0
  %1066 = vdwg.mxu0
  %v1067 = vadd.f32 %v378, %v1064
  %1068 = vmatprep.subr.mxu0 0.0
  %1069 = vmatpush1.msra.mxu0 %v538
  %1070 = vmatprep.subr.mxu0 0.0
  %1071 = vmatpush1.msra.mxu0 %v539
  %1072 = vmatprep.subr.mxu0 0.0
  %1073 = vmatpush1.msra.mxu0 0.0
  %1074 = vmatprep.subr.mxu0 0.0
  %1075 = vmatpush1.msra.mxu0 0.0
  %1076 = vmatprep.subr.mxu0 0.0
  %1077 = vmatpush1.msra.mxu0 0.0
  %1078 = vmatprep.subr.mxu0 0.0
  %1079 = vmatpush1.msra.mxu0 0.0
  %1080 = vmatprep.subr.mxu0 0.0
  %1081 = vmatpush1.msra.mxu0 0.0
  %1082 = vmatprep.subr.mxu0 0.0
  %1083 = vmatpush1.msra.mxu0 0.0
  %1084 = vmatprep.subr.mxu0 0.0
  %1085 = vmatpush1.msra.mxu0 0.0
  %1086 = vmatprep.subr.mxu0 0.0
  %1087 = vmatpush1.msra.mxu0 0.0
  %1088 = vmatprep.subr.mxu0 0.0
  %1089 = vmatpush1.msra.mxu0 0.0
  %1090 = vmatprep.subr.mxu0 0.0
  %1091 = vmatpush1.msra.mxu0 0.0
  %1092 = vmatprep.subr.mxu0 0.0
  %1093 = vmatpush1.msra.mxu0 0.0
  %1094 = vmatprep.subr.mxu0 0.0
  %1095 = vmatpush1.msra.mxu0 0.0
  %1096 = vmatprep.subr.mxu0 0.0
  %1097 = vmatpush1.msra.mxu0 0.0
  %1098 = vmatprep.subr.mxu0 0.0
  %1099 = vmatpush1.msra.mxu0 0.0
  %1100 = vmatprep.subr.mxu0 0.0
  %1101 = vmatpush1.msra.mxu0 0.0
  %1102 = vmatprep.subr.mxu0 0.0
  %1103 = vmatpush1.msra.mxu0 0.0
  %1104 = vmatprep.subr.mxu0 0.0
  %1105 = vmatpush1.msra.mxu0 0.0
  %1106 = vmatprep.subr.mxu0 0.0
  %1107 = vmatpush1.msra.mxu0 0.0
  %1108 = vmatprep.subr.mxu0 0.0
  %1109 = vmatpush1.msra.mxu0 0.0
  %1110 = vmatprep.subr.mxu0 0.0
  %1111 = vmatpush1.msra.mxu0 0.0
  %1112 = vmatprep.subr.mxu0 0.0
  %1113 = vmatpush1.msra.mxu0 0.0
  %1114 = vmatprep.subr.mxu0 0.0
  %1115 = vmatpush1.msra.mxu0 0.0
  %1116 = vmatprep.subr.mxu0 0.0
  %1117 = vmatpush1.msra.mxu0 0.0
  %1118 = vmatprep.subr.mxu0 0.0
  %1119 = vmatpush1.msra.mxu0 0.0
  %1120 = vmatprep.subr.mxu0 0.0
  %1121 = vmatpush1.msra.mxu0 0.0
  %1122 = vmatprep.subr.mxu0 0.0
  %1123 = vmatpush1.msra.mxu0 0.0
  %1124 = vmatprep.subr.mxu0 0.0
  %1125 = vmatpush1.msra.mxu0 0.0
  %1126 = vmatprep.subr.mxu0 0.0
  %1127 = vmatpush1.msra.mxu0 0.0
  %1128 = vmatprep.subr.mxu0 0.0
  %1129 = vmatpush1.msra.mxu0 0.0
  %1130 = vmatprep.subr.mxu0 0.0
  %1131 = vmatpush1.msra.mxu0 0.0
  %1132 = vmatprep.mubr.f32.mxu0 0.0
  %1133 = vmatmul.mubr.f32.gmra.mrb[0].mxu0 %v853
  %v1134 = vpop.f32.mrb[0].mxu0
  %v1135 = vadd.f32 0.0, %v1134
  %v1136 = vpop.f32.mrb[0].mxu0
  %1137 = vdwg.mxu0
  %v1138 = vadd.f32 %v496, %v1135
  %v1139 = vxor.u32 %v925, 2147483648
  %v1140 = vmul.f32 %v1139, 1.442695
  %v1141 = vpow.pop %v1140
  %v1142 = vadd.f32 %v1141, 1.0
  %v1143 = vrcp.pop %v1142
  %v1144 = vmul.f32 1.0, %v1143
  %v1145 = vxor.u32 %v996, 2147483648
  %v1146 = vmul.f32 %v1145, 1.442695
  %v1147 = vpow.pop %v1146
  %v1148 = vadd.f32 %v1147, 1.0
  %v1149 = vrcp.pop %v1148
  %v1150 = vmul.f32 1.0, %v1149
  %v1151 = vtanh.pop %v1067
  %v1152 = vxor.u32 %v1138, 2147483648
  %v1153 = vmul.f32 %v1152, 1.442695
  %v1154 = vpow.pop %v1153
  %v1155 = vadd.f32 %v1154, 1.0
  %v1156 = vrcp.pop %v1155
  %v1157 = vmul.f32 1.0, %v1156
  %v1158 = vmul.f32 %v1150, %v849
  %v1159 = vmul.f32 %v1144, %v1151
  %v1160 = vadd.f32 %v1158, %v1159
  %v1161 = vtanh.pop %v1160
  %v1162 = vmul.f32 %v1157, %v1161
  %v1164 = vsel %vm540, %v1162, 0
  %1166 = vmatprep.subr.mxu0 0.0
  %1167 = vmatpush1.msra.mxu0 %v529
  %1168 = vmatprep.subr.mxu0 0.0
  %1169 = vmatpush1.msra.mxu0 %v530
  %1170 = vmatprep.subr.mxu0 0.0
  %1171 = vmatpush1.msra.mxu0 0.0
  %1172 = vmatprep.subr.mxu0 0.0
  %1173 = vmatpush1.msra.mxu0 0.0
  %1174 = vmatprep.subr.mxu0 0.0
  %1175 = vmatpush1.msra.mxu0 0.0
  %1176 = vmatprep.subr.mxu0 0.0
  %1177 = vmatpush1.msra.mxu0 0.0
  %1178 = vmatprep.subr.mxu0 0.0
  %1179 = vmatpush1.msra.mxu0 0.0
  %1180 = vmatprep.subr.mxu0 0.0
  %1181 = vmatpush1.msra.mxu0 0.0
  %1182 = vmatprep.subr.mxu0 0.0
  %1183 = vmatpush1.msra.mxu0 0.0
  %1184 = vmatprep.subr.mxu0 0.0
  %1185 = vmatpush1.msra.mxu0 0.0
  %1186 = vmatprep.subr.mxu0 0.0
  %1187 = vmatpush1.msra.mxu0 0.0
  %1188 = vmatprep.subr.mxu0 0.0
  %1189 = vmatpush1.msra.mxu0 0.0
  %1190 = vmatprep.subr.mxu0 0.0
  %1191 = vmatpush1.msra.mxu0 0.0
  %1192 = vmatprep.subr.mxu0 0.0
  %1193 = vmatpush1.msra.mxu0 0.0
  %1194 = vmatprep.subr.mxu0 0.0
  %1195 = vmatpush1.msra.mxu0 0.0
  %1196 = vmatprep.subr.mxu0 0.0
  %1197 = vmatpush1.msra.mxu0 0.0
  %1198 = vmatprep.subr.mxu0 0.0
  %1199 = vmatpush1.msra.mxu0 0.0
  %1200 = vmatprep.subr.mxu0 0.0
  %1201 = vmatpush1.msra.mxu0 0.0
  %1202 = vmatprep.subr.mxu0 0.0
  %1203 = vmatpush1.msra.mxu0 0.0
  %1204 = vmatprep.subr.mxu0 0.0
  %1205 = vmatpush1.msra.mxu0 0.0
  %1206 = vmatprep.subr.mxu0 0.0
  %1207 = vmatpush1.msra.mxu0 0.0
  %1208 = vmatprep.subr.mxu0 0.0
  %1209 = vmatpush1.msra.mxu0 0.0
  %1210 = vmatprep.subr.mxu0 0.0
  %1211 = vmatpush1.msra.mxu0 0.0
  %1212 = vmatprep.subr.mxu0 0.0
  %1213 = vmatpush1.msra.mxu0 0.0
  %1214 = vmatprep.subr.mxu0 0.0
  %1215 = vmatpush1.msra.mxu0 0.0
  %1216 = vmatprep.subr.mxu0 0.0
  %1217 = vmatpush1.msra.mxu0 0.0
  %1218 = vmatprep.subr.mxu0 0.0
  %1219 = vmatpush1.msra.mxu0 0.0
  %1220 = vmatprep.subr.mxu0 0.0
  %1221 = vmatpush1.msra.mxu0 0.0
  %1222 = vmatprep.subr.mxu0 0.0
  %1223 = vmatpush1.msra.mxu0 0.0
  %1224 = vmatprep.subr.mxu0 0.0
  %1225 = vmatpush1.msra.mxu0 0.0
  %1226 = vmatprep.subr.mxu0 0.0
  %1227 = vmatpush1.msra.mxu0 0.0
  %1228 = vmatprep.subr.mxu0 0.0
  %1229 = vmatpush1.msra.mxu0 0.0
  %1230 = vmatprep.mubr.f32.mxu0 0.0
  %1231 = vmatmul.mubr.f32.gmra.mrb[0].mxu0 %v1164
  %v1232 = vpop.f32.mrb[0].mxu0
  %v1233 = vadd.f32 0.0, %v1232
  %v1234 = vpop.f32.mrb[0].mxu0
  %1235 = vdwg.mxu0
  %v1236 = vadd.f32 %v147, %v1233
  %1237 = vmatprep.subr.mxu0 0.0
  %1238 = vmatpush1.msra.mxu0 %v532
  %1239 = vmatprep.subr.mxu0 0.0
  %1240 = vmatpush1.msra.mxu0 %v533
  %1241 = vmatprep.subr.mxu0 0.0
  %1242 = vmatpush1.msra.mxu0 0.0
  %1243 = vmatprep.subr.mxu0 0.0
  %1244 = vmatpush1.msra.mxu0 0.0
  %1245 = vmatprep.subr.mxu0 0.0
  %1246 = vmatpush1.msra.mxu0 0.0
  %1247 = vmatprep.subr.mxu0 0.0
  %1248 = vmatpush1.msra.mxu0 0.0
  %1249 = vmatprep.subr.mxu0 0.0
  %1250 = vmatpush1.msra.mxu0 0.0
  %1251 = vmatprep.subr.mxu0 0.0
  %1252 = vmatpush1.msra.mxu0 0.0
  %1253 = vmatprep.subr.mxu0 0.0
  %1254 = vmatpush1.msra.mxu0 0.0
  %1255 = vmatprep.subr.mxu0 0.0
  %1256 = vmatpush1.msra.mxu0 0.0
  %1257 = vmatprep.subr.mxu0 0.0
  %1258 = vmatpush1.msra.mxu0 0.0
  %1259 = vmatprep.subr.mxu0 0.0
  %1260 = vmatpush1.msra.mxu0 0.0
  %1261 = vmatprep.subr.mxu0 0.0
  %1262 = vmatpush1.msra.mxu0 0.0
  %1263 = vmatprep.subr.mxu0 0.0
  %1264 = vmatpush1.msra.mxu0 0.0
  %1265 = vmatprep.subr.mxu0 0.0
  %1266 = vmatpush1.msra.mxu0 0.0
  %1267 = vmatprep.subr.mxu0 0.0
  %1268 = vmatpush1.msra.mxu0 0.0
  %1269 = vmatprep.subr.mxu0 0.0
  %1270 = vmatpush1.msra.mxu0 0.0
  %1271 = vmatprep.subr.mxu0 0.0
  %1272 = vmatpush1.msra.mxu0 0.0
  %1273 = vmatprep.subr.mxu0 0.0
  %1274 = vmatpush1.msra.mxu0 0.0
  %1275 = vmatprep.subr.mxu0 0.0
  %1276 = vmatpush1.msra.mxu0 0.0
  %1277 = vmatprep.subr.mxu0 0.0
  %1278 = vmatpush1.msra.mxu0 0.0
  %1279 = vmatprep.subr.mxu0 0.0
  %1280 = vmatpush1.msra.mxu0 0.0
  %1281 = vmatprep.subr.mxu0 0.0
  %1282 = vmatpush1.msra.mxu0 0.0
  %1283 = vmatprep.subr.mxu0 0.0
  %1284 = vmatpush1.msra.mxu0 0.0
  %1285 = vmatprep.subr.mxu0 0.0
  %1286 = vmatpush1.msra.mxu0 0.0
  %1287 = vmatprep.subr.mxu0 0.0
  %1288 = vmatpush1.msra.mxu0 0.0
  %1289 = vmatprep.subr.mxu0 0.0
  %1290 = vmatpush1.msra.mxu0 0.0
  %1291 = vmatprep.subr.mxu0 0.0
  %1292 = vmatpush1.msra.mxu0 0.0
  %1293 = vmatprep.subr.mxu0 0.0
  %1294 = vmatpush1.msra.mxu0 0.0
  %1295 = vmatprep.subr.mxu0 0.0
  %1296 = vmatpush1.msra.mxu0 0.0
  %1297 = vmatprep.subr.mxu0 0.0
  %1298 = vmatpush1.msra.mxu0 0.0
  %1299 = vmatprep.subr.mxu0 0.0
  %1300 = vmatpush1.msra.mxu0 0.0
  %1301 = vmatprep.mubr.f32.mxu0 0.0
  %1302 = vmatmul.mubr.f32.gmra.mrb[0].mxu0 %v1164
  %v1303 = vpop.f32.mrb[0].mxu0
  %v1304 = vadd.f32 0.0, %v1303
  %v1305 = vpop.f32.mrb[0].mxu0
  %1306 = vdwg.mxu0
  %v1307 = vadd.f32 %v265, %v1304
  %1308 = vmatprep.subr.mxu0 0.0
  %1309 = vmatpush1.msra.mxu0 %v535
  %1310 = vmatprep.subr.mxu0 0.0
  %1311 = vmatpush1.msra.mxu0 %v536
  %1312 = vmatprep.subr.mxu0 0.0
  %1313 = vmatpush1.msra.mxu0 0.0
  %1314 = vmatprep.subr.mxu0 0.0
  %1315 = vmatpush1.msra.mxu0 0.0
  %1316 = vmatprep.subr.mxu0 0.0
  %1317 = vmatpush1.msra.mxu0 0.0
  %1318 = vmatprep.subr.mxu0 0.0
  %1319 = vmatpush1.msra.mxu0 0.0
  %1320 = vmatprep.subr.mxu0 0.0
  %1321 = vmatpush1.msra.mxu0 0.0
  %1322 = vmatprep.subr.mxu0 0.0
  %1323 = vmatpush1.msra.mxu0 0.0
  %1324 = vmatprep.subr.mxu0 0.0
  %1325 = vmatpush1.msra.mxu0 0.0
  %1326 = vmatprep.subr.mxu0 0.0
  %1327 = vmatpush1.msra.mxu0 0.0
  %1328 = vmatprep.subr.mxu0 0.0
  %1329 = vmatpush1.msra.mxu0 0.0
  %1330 = vmatprep.subr.mxu0 0.0
  %1331 = vmatpush1.msra.mxu0 0.0
  %1332 = vmatprep.subr.mxu0 0.0
  %1333 = vmatpush1.msra.mxu0 0.0
  %1334 = vmatprep.subr.mxu0 0.0
  %1335 = vmatpush1.msra.mxu0 0.0
  %1336 = vmatprep.subr.mxu0 0.0
  %1337 = vmatpush1.msra.mxu0 0.0
  %1338 = vmatprep.subr.mxu0 0.0
  %1339 = vmatpush1.msra.mxu0 0.0
  %1340 = vmatprep.subr.mxu0 0.0
  %1341 = vmatpush1.msra.mxu0 0.0
  %1342 = vmatprep.subr.mxu0 0.0
  %1343 = vmatpush1.msra.mxu0 0.0
  %1344 = vmatprep.subr.mxu0 0.0
  %1345 = vmatpush1.msra.mxu0 0.0
  %1346 = vmatprep.subr.mxu0 0.0
  %1347 = vmatpush1.msra.mxu0 0.0
  %1348 = vmatprep.subr.mxu0 0.0
  %1349 = vmatpush1.msra.mxu0 0.0
  %1350 = vmatprep.subr.mxu0 0.0
  %1351 = vmatpush1.msra.mxu0 0.0
  %1352 = vmatprep.subr.mxu0 0.0
  %1353 = vmatpush1.msra.mxu0 0.0
  %1354 = vmatprep.subr.mxu0 0.0
  %1355 = vmatpush1.msra.mxu0 0.0
  %1356 = vmatprep.subr.mxu0 0.0
  %1357 = vmatpush1.msra.mxu0 0.0
  %1358 = vmatprep.subr.mxu0 0.0
  %1359 = vmatpush1.msra.mxu0 0.0
  %1360 = vmatprep.subr.mxu0 0.0
  %1361 = vmatpush1.msra.mxu0 0.0
  %1362 = vmatprep.subr.mxu0 0.0
  %1363 = vmatpush1.msra.mxu0 0.0
  %1364 = vmatprep.subr.mxu0 0.0
  %1365 = vmatpush1.msra.mxu0 0.0
  %1366 = vmatprep.subr.mxu0 0.0
  %1367 = vmatpush1.msra.mxu0 0.0
  %1368 = vmatprep.subr.mxu0 0.0
  %1369 = vmatpush1.msra.mxu0 0.0
  %1370 = vmatprep.subr.mxu0 0.0
  %1371 = vmatpush1.msra.mxu0 0.0
  %1372 = vmatprep.mubr.f32.mxu0 0.0
  %1373 = vmatmul.mubr.f32.gmra.mrb[0].mxu0 %v1164
  %v1374 = vpop.f32.mrb[0].mxu0
  %v1375 = vadd.f32 0.0, %v1374
  %v1376 = vpop.f32.mrb[0].mxu0
  %1377 = vdwg.mxu0
  %v1378 = vadd.f32 %v383, %v1375
  %1379 = vmatprep.subr.mxu0 0.0
  %1380 = vmatpush1.msra.mxu0 %v538
  %1381 = vmatprep.subr.mxu0 0.0
  %1382 = vmatpush1.msra.mxu0 %v539
  %1383 = vmatprep.subr.mxu0 0.0
  %1384 = vmatpush1.msra.mxu0 0.0
  %1385 = vmatprep.subr.mxu0 0.0
  %1386 = vmatpush1.msra.mxu0 0.0
  %1387 = vmatprep.subr.mxu0 0.0
  %1388 = vmatpush1.msra.mxu0 0.0
  %1389 = vmatprep.subr.mxu0 0.0
  %1390 = vmatpush1.msra.mxu0 0.0
  %1391 = vmatprep.subr.mxu0 0.0
  %1392 = vmatpush1.msra.mxu0 0.0
  %1393 = vmatprep.subr.mxu0 0.0
  %1394 = vmatpush1.msra.mxu0 0.0
  %1395 = vmatprep.subr.mxu0 0.0
  %1396 = vmatpush1.msra.mxu0 0.0
  %1397 = vmatprep.subr.mxu0 0.0
  %1398 = vmatpush1.msra.mxu0 0.0
  %1399 = vmatprep.subr.mxu0 0.0
  %1400 = vmatpush1.msra.mxu0 0.0
  %1401 = vmatprep.subr.mxu0 0.0
  %1402 = vmatpush1.msra.mxu0 0.0
  %1403 = vmatprep.subr.mxu0 0.0
  %1404 = vmatpush1.msra.mxu0 0.0
  %1405 = vmatprep.subr.mxu0 0.0
  %1406 = vmatpush1.msra.mxu0 0.0
  %1407 = vmatprep.subr.mxu0 0.0
  %1408 = vmatpush1.msra.mxu0 0.0
  %1409 = vmatprep.subr.mxu0 0.0
  %1410 = vmatpush1.msra.mxu0 0.0
  %1411 = vmatprep.subr.mxu0 0.0
  %1412 = vmatpush1.msra.mxu0 0.0
  %1413 = vmatprep.subr.mxu0 0.0
  %1414 = vmatpush1.msra.mxu0 0.0
  %1415 = vmatprep.subr.mxu0 0.0
  %1416 = vmatpush1.msra.mxu0 0.0
  %1417 = vmatprep.subr.mxu0 0.0
  %1418 = vmatpush1.msra.mxu0 0.0
  %1419 = vmatprep.subr.mxu0 0.0
  %1420 = vmatpush1.msra.mxu0 0.0
  %1421 = vmatprep.subr.mxu0 0.0
  %1422 = vmatpush1.msra.mxu0 0.0
  %1423 = vmatprep.subr.mxu0 0.0
  %1424 = vmatpush1.msra.mxu0 0.0
  %1425 = vmatprep.subr.mxu0 0.0
  %1426 = vmatpush1.msra.mxu0 0.0
  %1427 = vmatprep.subr.mxu0 0.0
  %1428 = vmatpush1.msra.mxu0 0.0
  %1429 = vmatprep.subr.mxu0 0.0
  %1430 = vmatpush1.msra.mxu0 0.0
  %1431 = vmatprep.subr.mxu0 0.0
  %1432 = vmatpush1.msra.mxu0 0.0
  %1433 = vmatprep.subr.mxu0 0.0
  %1434 = vmatpush1.msra.mxu0 0.0
  %1435 = vmatprep.subr.mxu0 0.0
  %1436 = vmatpush1.msra.mxu0 0.0
  %1437 = vmatprep.subr.mxu0 0.0
  %1438 = vmatpush1.msra.mxu0 0.0
  %1439 = vmatprep.subr.mxu0 0.0
  %1440 = vmatpush1.msra.mxu0 0.0
  %1441 = vmatprep.subr.mxu0 0.0
  %1442 = vmatpush1.msra.mxu0 0.0
  %1443 = vmatprep.mubr.f32.mxu0 0.0
  %1444 = vmatmul.mubr.f32.gmra.mrb[0].mxu0 %v1164
  %v1445 = vpop.f32.mrb[0].mxu0
  %v1446 = vadd.f32 0.0, %v1445
  %v1447 = vpop.f32.mrb[0].mxu0
  %1448 = vdwg.mxu0
  %v1449 = vadd.f32 %v501, %v1446
  %v1450 = vxor.u32 %v1236, 2147483648
  %v1451 = vmul.f32 %v1450, 1.442695
  %v1452 = vpow.pop %v1451
  %v1453 = vadd.f32 %v1452, 1.0
  %v1454 = vrcp.pop %v1453
  %v1455 = vmul.f32 1.0, %v1454
  %v1456 = vxor.u32 %v1307, 2147483648
  %v1457 = vmul.f32 %v1456, 1.442695
  %v1458 = vpow.pop %v1457
  %v1459 = vadd.f32 %v1458, 1.0
  %v1460 = vrcp.pop %v1459
  %v1461 = vmul.f32 1.0, %v1460
  %v1462 = vtanh.pop %v1378
  %v1463 = vxor.u32 %v1449, 2147483648
  %v1464 = vmul.f32 %v1463, 1.442695
  %v1465 = vpow.pop %v1464
  %v1466 = vadd.f32 %v1465, 1.0
  %v1467 = vrcp.pop %v1466
  %v1468 = vmul.f32 1.0, %v1467
  %v1469 = vmul.f32 %v1461, %v1160
  %v1470 = vmul.f32 %v1455, %v1462
  %v1471 = vadd.f32 %v1469, %v1470
  %v1472 = vtanh.pop %v1471
  %v1473 = vmul.f32 %v1468, %v1472
  %v1475 = vsel %vm540, %v1473, 0
  %1477 = vmatprep.subr.mxu0 0.0
  %1478 = vmatpush1.msra.mxu0 %v529
  %1479 = vmatprep.subr.mxu0 0.0
  %1480 = vmatpush1.msra.mxu0 %v530
  %1481 = vmatprep.subr.mxu0 0.0
  %1482 = vmatpush1.msra.mxu0 0.0
  %1483 = vmatprep.subr.mxu0 0.0
  %1484 = vmatpush1.msra.mxu0 0.0
  %1485 = vmatprep.subr.mxu0 0.0
  %1486 = vmatpush1.msra.mxu0 0.0
  %1487 = vmatprep.subr.mxu0 0.0
  %1488 = vmatpush1.msra.mxu0 0.0
  %1489 = vmatprep.subr.mxu0 0.0
  %1490 = vmatpush1.msra.mxu0 0.0
  %1491 = vmatprep.subr.mxu0 0.0
  %1492 = vmatpush1.msra.mxu0 0.0
  %1493 = vmatprep.subr.mxu0 0.0
  %1494 = vmatpush1.msra.mxu0 0.0
  %1495 = vmatprep.subr.mxu0 0.0
  %1496 = vmatpush1.msra.mxu0 0.0
  %1497 = vmatprep.subr.mxu0 0.0
  %1498 = vmatpush1.msra.mxu0 0.0
  %1499 = vmatprep.subr.mxu0 0.0
  %1500 = vmatpush1.msra.mxu0 0.0
  %1501 = vmatprep.subr.mxu0 0.0
  %1502 = vmatpush1.msra.mxu0 0.0
  %1503 = vmatprep.subr.mxu0 0.0
  %1504 = vmatpush1.msra.mxu0 0.0
  %1505 = vmatprep.subr.mxu0 0.0
  %1506 = vmatpush1.msra.mxu0 0.0
  %1507 = vmatprep.subr.mxu0 0.0
  %1508 = vmatpush1.msra.mxu0 0.0
  %1509 = vmatprep.subr.mxu0 0.0
  %1510 = vmatpush1.msra.mxu0 0.0
  %1511 = vmatprep.subr.mxu0 0.0
  %1512 = vmatpush1.msra.mxu0 0.0
  %1513 = vmatprep.subr.mxu0 0.0
  %1514 = vmatpush1.msra.mxu0 0.0
  %1515 = vmatprep.subr.mxu0 0.0
  %1516 = vmatpush1.msra.mxu0 0.0
  %1517 = vmatprep.subr.mxu0 0.0
  %1518 = vmatpush1.msra.mxu0 0.0
  %1519 = vmatprep.subr.mxu0 0.0
  %1520 = vmatpush1.msra.mxu0 0.0
  %1521 = vmatprep.subr.mxu0 0.0
  %1522 = vmatpush1.msra.mxu0 0.0
  %1523 = vmatprep.subr.mxu0 0.0
  %1524 = vmatpush1.msra.mxu0 0.0
  %1525 = vmatprep.subr.mxu0 0.0
  %1526 = vmatpush1.msra.mxu0 0.0
  %1527 = vmatprep.subr.mxu0 0.0
  %1528 = vmatpush1.msra.mxu0 0.0
  %1529 = vmatprep.subr.mxu0 0.0
  %1530 = vmatpush1.msra.mxu0 0.0
  %1531 = vmatprep.subr.mxu0 0.0
  %1532 = vmatpush1.msra.mxu0 0.0
  %1533 = vmatprep.subr.mxu0 0.0
  %1534 = vmatpush1.msra.mxu0 0.0
  %1535 = vmatprep.subr.mxu0 0.0
  %1536 = vmatpush1.msra.mxu0 0.0
  %1537 = vmatprep.subr.mxu0 0.0
  %1538 = vmatpush1.msra.mxu0 0.0
  %1539 = vmatprep.subr.mxu0 0.0
  %1540 = vmatpush1.msra.mxu0 0.0
  %1541 = vmatprep.mubr.f32.mxu0 0.0
  %1542 = vmatmul.mubr.f32.gmra.mrb[0].mxu0 %v1475
  %v1543 = vpop.f32.mrb[0].mxu0
  %v1544 = vadd.f32 0.0, %v1543
  %v1545 = vpop.f32.mrb[0].mxu0
  %1546 = vdwg.mxu0
  %v1547 = vadd.f32 %v152, %v1544
  %1548 = vmatprep.subr.mxu0 0.0
  %1549 = vmatpush1.msra.mxu0 %v532
  %1550 = vmatprep.subr.mxu0 0.0
  %1551 = vmatpush1.msra.mxu0 %v533
  %1552 = vmatprep.subr.mxu0 0.0
  %1553 = vmatpush1.msra.mxu0 0.0
  %1554 = vmatprep.subr.mxu0 0.0
  %1555 = vmatpush1.msra.mxu0 0.0
  %1556 = vmatprep.subr.mxu0 0.0
  %1557 = vmatpush1.msra.mxu0 0.0
  %1558 = vmatprep.subr.mxu0 0.0
  %1559 = vmatpush1.msra.mxu0 0.0
  %1560 = vmatprep.subr.mxu0 0.0
  %1561 = vmatpush1.msra.mxu0 0.0
  %1562 = vmatprep.subr.mxu0 0.0
  %1563 = vmatpush1.msra.mxu0 0.0
  %1564 = vmatprep.subr.mxu0 0.0
  %1565 = vmatpush1.msra.mxu0 0.0
  %1566 = vmatprep.subr.mxu0 0.0
  %1567 = vmatpush1.msra.mxu0 0.0
  %1568 = vmatprep.subr.mxu0 0.0
  %1569 = vmatpush1.msra.mxu0 0.0
  %1570 = vmatprep.subr.mxu0 0.0
  %1571 = vmatpush1.msra.mxu0 0.0
  %1572 = vmatprep.subr.mxu0 0.0
  %1573 = vmatpush1.msra.mxu0 0.0
  %1574 = vmatprep.subr.mxu0 0.0
  %1575 = vmatpush1.msra.mxu0 0.0
  %1576 = vmatprep.subr.mxu0 0.0
  %1577 = vmatpush1.msra.mxu0 0.0
  %1578 = vmatprep.subr.mxu0 0.0
  %1579 = vmatpush1.msra.mxu0 0.0
  %1580 = vmatprep.subr.mxu0 0.0
  %1581 = vmatpush1.msra.mxu0 0.0
  %1582 = vmatprep.subr.mxu0 0.0
  %1583 = vmatpush1.msra.mxu0 0.0
  %1584 = vmatprep.subr.mxu0 0.0
  %1585 = vmatpush1.msra.mxu0 0.0
  %1586 = vmatprep.subr.mxu0 0.0
  %1587 = vmatpush1.msra.mxu0 0.0
  %1588 = vmatprep.subr.mxu0 0.0
  %1589 = vmatpush1.msra.mxu0 0.0
  %1590 = vmatprep.subr.mxu0 0.0
  %1591 = vmatpush1.msra.mxu0 0.0
  %1592 = vmatprep.subr.mxu0 0.0
  %1593 = vmatpush1.msra.mxu0 0.0
  %1594 = vmatprep.subr.mxu0 0.0
  %1595 = vmatpush1.msra.mxu0 0.0
  %1596 = vmatprep.subr.mxu0 0.0
  %1597 = vmatpush1.msra.mxu0 0.0
  %1598 = vmatprep.subr.mxu0 0.0
  %1599 = vmatpush1.msra.mxu0 0.0
  %1600 = vmatprep.subr.mxu0 0.0
  %1601 = vmatpush1.msra.mxu0 0.0
  %1602 = vmatprep.subr.mxu0 0.0
  %1603 = vmatpush1.msra.mxu0 0.0
  %1604 = vmatprep.subr.mxu0 0.0
  %1605 = vmatpush1.msra.mxu0 0.0
  %1606 = vmatprep.subr.mxu0 0.0
  %1607 = vmatpush1.msra.mxu0 0.0
  %1608 = vmatprep.subr.mxu0 0.0
  %1609 = vmatpush1.msra.mxu0 0.0
  %1610 = vmatprep.subr.mxu0 0.0
  %1611 = vmatpush1.msra.mxu0 0.0
  %1612 = vmatprep.mubr.f32.mxu0 0.0
  %1613 = vmatmul.mubr.f32.gmra.mrb[0].mxu0 %v1475
  %v1614 = vpop.f32.mrb[0].mxu0
  %v1615 = vadd.f32 0.0, %v1614
  %v1616 = vpop.f32.mrb[0].mxu0
  %1617 = vdwg.mxu0
  %v1618 = vadd.f32 %v270, %v1615
  %1619 = vmatprep.subr.mxu0 0.0
  %1620 = vmatpush1.msra.mxu0 %v535
  %1621 = vmatprep.subr.mxu0 0.0
  %1622 = vmatpush1.msra.mxu0 %v536
  %1623 = vmatprep.subr.mxu0 0.0
  %1624 = vmatpush1.msra.mxu0 0.0
  %1625 = vmatprep.subr.mxu0 0.0
  %1626 = vmatpush1.msra.mxu0 0.0
  %1627 = vmatprep.subr.mxu0 0.0
  %1628 = vmatpush1.msra.mxu0 0.0
  %1629 = vmatprep.subr.mxu0 0.0
  %1630 = vmatpush1.msra.mxu0 0.0
  %1631 = vmatprep.subr.mxu0 0.0
  %1632 = vmatpush1.msra.mxu0 0.0
  %1633 = vmatprep.subr.mxu0 0.0
  %1634 = vmatpush1.msra.mxu0 0.0
  %1635 = vmatprep.subr.mxu0 0.0
  %1636 = vmatpush1.msra.mxu0 0.0
  %1637 = vmatprep.subr.mxu0 0.0
  %1638 = vmatpush1.msra.mxu0 0.0
  %1639 = vmatprep.subr.mxu0 0.0
  %1640 = vmatpush1.msra.mxu0 0.0
  %1641 = vmatprep.subr.mxu0 0.0
  %1642 = vmatpush1.msra.mxu0 0.0
  %1643 = vmatprep.subr.mxu0 0.0
  %1644 = vmatpush1.msra.mxu0 0.0
  %1645 = vmatprep.subr.mxu0 0.0
  %1646 = vmatpush1.msra.mxu0 0.0
  %1647 = vmatprep.subr.mxu0 0.0
  %1648 = vmatpush1.msra.mxu0 0.0
  %1649 = vmatprep.subr.mxu0 0.0
  %1650 = vmatpush1.msra.mxu0 0.0
  %1651 = vmatprep.subr.mxu0 0.0
  %1652 = vmatpush1.msra.mxu0 0.0
  %1653 = vmatprep.subr.mxu0 0.0
  %1654 = vmatpush1.msra.mxu0 0.0
  %1655 = vmatprep.subr.mxu0 0.0
  %1656 = vmatpush1.msra.mxu0 0.0
  %1657 = vmatprep.subr.mxu0 0.0
  %1658 = vmatpush1.msra.mxu0 0.0
  %1659 = vmatprep.subr.mxu0 0.0
  %1660 = vmatpush1.msra.mxu0 0.0
  %1661 = vmatprep.subr.mxu0 0.0
  %1662 = vmatpush1.msra.mxu0 0.0
  %1663 = vmatprep.subr.mxu0 0.0
  %1664 = vmatpush1.msra.mxu0 0.0
  %1665 = vmatprep.subr.mxu0 0.0
  %1666 = vmatpush1.msra.mxu0 0.0
  %1667 = vmatprep.subr.mxu0 0.0
  %1668 = vmatpush1.msra.mxu0 0.0
  %1669 = vmatprep.subr.mxu0 0.0
  %1670 = vmatpush1.msra.mxu0 0.0
  %1671 = vmatprep.subr.mxu0 0.0
  %1672 = vmatpush1.msra.mxu0 0.0
  %1673 = vmatprep.subr.mxu0 0.0
  %1674 = vmatpush1.msra.mxu0 0.0
  %1675 = vmatprep.subr.mxu0 0.0
  %1676 = vmatpush1.msra.mxu0 0.0
  %1677 = vmatprep.subr.mxu0 0.0
  %1678 = vmatpush1.msra.mxu0 0.0
  %1679 = vmatprep.subr.mxu0 0.0
  %1680 = vmatpush1.msra.mxu0 0.0
  %1681 = vmatprep.subr.mxu0 0.0
  %1682 = vmatpush1.msra.mxu0 0.0
  %1683 = vmatprep.mubr.f32.mxu0 0.0
  %1684 = vmatmul.mubr.f32.gmra.mrb[0].mxu0 %v1475
  %v1685 = vpop.f32.mrb[0].mxu0
  %v1686 = vadd.f32 0.0, %v1685
  %v1687 = vpop.f32.mrb[0].mxu0
  %1688 = vdwg.mxu0
  %v1689 = vadd.f32 %v388, %v1686
  %1690 = vmatprep.subr.mxu0 0.0
  %1691 = vmatpush1.msra.mxu0 %v538
  %1692 = vmatprep.subr.mxu0 0.0
  %1693 = vmatpush1.msra.mxu0 %v539
  %1694 = vmatprep.subr.mxu0 0.0
  %1695 = vmatpush1.msra.mxu0 0.0
  %1696 = vmatprep.subr.mxu0 0.0
  %1697 = vmatpush1.msra.mxu0 0.0
  %1698 = vmatprep.subr.mxu0 0.0
  %1699 = vmatpush1.msra.mxu0 0.0
  %1700 = vmatprep.subr.mxu0 0.0
  %1701 = vmatpush1.msra.mxu0 0.0
  %1702 = vmatprep.subr.mxu0 0.0
  %1703 = vmatpush1.msra.mxu0 0.0
  %1704 = vmatprep.subr.mxu0 0.0
  %1705 = vmatpush1.msra.mxu0 0.0
  %1706 = vmatprep.subr.mxu0 0.0
  %1707 = vmatpush1.msra.mxu0 0.0
  %1708 = vmatprep.subr.mxu0 0.0
  %1709 = vmatpush1.msra.mxu0 0.0
  %1710 = vmatprep.subr.mxu0 0.0
  %1711 = vmatpush1.msra.mxu0 0.0
  %1712 = vmatprep.subr.mxu0 0.0
  %1713 = vmatpush1.msra.mxu0 0.0
  %1714 = vmatprep.subr.mxu0 0.0
  %1715 = vmatpush1.msra.mxu0 0.0
  %1716 = vmatprep.subr.mxu0 0.0
  %1717 = vmatpush1.msra.mxu0 0.0
  %1718 = vmatprep.subr.mxu0 0.0
  %1719 = vmatpush1.msra.mxu0 0.0
  %1720 = vmatprep.subr.mxu0 0.0
  %1721 = vmatpush1.msra.mxu0 0.0
  %1722 = vmatprep.subr.mxu0 0.0
  %1723 = vmatpush1.msra.mxu0 0.0
  %1724 = vmatprep.subr.mxu0 0.0
  %1725 = vmatpush1.msra.mxu0 0.0
  %1726 = vmatprep.subr.mxu0 0.0
  %1727 = vmatpush1.msra.mxu0 0.0
  %1728 = vmatprep.subr.mxu0 0.0
  %1729 = vmatpush1.msra.mxu0 0.0
  %1730 = vmatprep.subr.mxu0 0.0
  %1731 = vmatpush1.msra.mxu0 0.0
  %1732 = vmatprep.subr.mxu0 0.0
  %1733 = vmatpush1.msra.mxu0 0.0
  %1734 = vmatprep.subr.mxu0 0.0
  %1735 = vmatpush1.msra.mxu0 0.0
  %1736 = vmatprep.subr.mxu0 0.0
  %1737 = vmatpush1.msra.mxu0 0.0
  %1738 = vmatprep.subr.mxu0 0.0
  %1739 = vmatpush1.msra.mxu0 0.0
  %1740 = vmatprep.subr.mxu0 0.0
  %1741 = vmatpush1.msra.mxu0 0.0
  %1742 = vmatprep.subr.mxu0 0.0
  %1743 = vmatpush1.msra.mxu0 0.0
  %1744 = vmatprep.subr.mxu0 0.0
  %1745 = vmatpush1.msra.mxu0 0.0
  %1746 = vmatprep.subr.mxu0 0.0
  %1747 = vmatpush1.msra.mxu0 0.0
  %1748 = vmatprep.subr.mxu0 0.0
  %1749 = vmatpush1.msra.mxu0 0.0
  %1750 = vmatprep.subr.mxu0 0.0
  %1751 = vmatpush1.msra.mxu0 0.0
  %1752 = vmatprep.subr.mxu0 0.0
  %1753 = vmatpush1.msra.mxu0 0.0
  %1754 = vmatprep.mubr.f32.mxu0 0.0
  %1755 = vmatmul.mubr.f32.gmra.mrb[0].mxu0 %v1475
  %v1756 = vpop.f32.mrb[0].mxu0
  %v1757 = vadd.f32 0.0, %v1756
  %v1758 = vpop.f32.mrb[0].mxu0
  %1759 = vdwg.mxu0
  %v1760 = vadd.f32 %v506, %v1757
  %v1761 = vxor.u32 %v1547, 2147483648
  %v1762 = vmul.f32 %v1761, 1.442695
  %v1763 = vpow.pop %v1762
  %v1764 = vadd.f32 %v1763, 1.0
  %v1765 = vrcp.pop %v1764
  %v1766 = vmul.f32 1.0, %v1765
  %v1767 = vxor.u32 %v1618, 2147483648
  %v1768 = vmul.f32 %v1767, 1.442695
  %v1769 = vpow.pop %v1768
  %v1770 = vadd.f32 %v1769, 1.0
  %v1771 = vrcp.pop %v1770
  %v1772 = vmul.f32 1.0, %v1771
  %v1773 = vtanh.pop %v1689
  %v1774 = vxor.u32 %v1760, 2147483648
  %v1775 = vmul.f32 %v1774, 1.442695
  %v1776 = vpow.pop %v1775
  %v1777 = vadd.f32 %v1776, 1.0
  %v1778 = vrcp.pop %v1777
  %v1779 = vmul.f32 1.0, %v1778
  %v1780 = vmul.f32 %v1772, %v1471
  %v1781 = vmul.f32 %v1766, %v1773
  %v1782 = vadd.f32 %v1780, %v1781
  %v1783 = vtanh.pop %v1782
  %v1784 = vmul.f32 %v1779, %v1783
  %v1786 = vsel %vm540, %v1784, 0
  %1788 = vmatprep.subr.mxu0 0.0
  %1789 = vmatpush1.msra.mxu0 %v529
  %1790 = vmatprep.subr.mxu0 0.0
  %1791 = vmatpush1.msra.mxu0 %v530
  %1792 = vmatprep.subr.mxu0 0.0
  %1793 = vmatpush1.msra.mxu0 0.0
  %1794 = vmatprep.subr.mxu0 0.0
  %1795 = vmatpush1.msra.mxu0 0.0
  %1796 = vmatprep.subr.mxu0 0.0
  %1797 = vmatpush1.msra.mxu0 0.0
  %1798 = vmatprep.subr.mxu0 0.0
  %1799 = vmatpush1.msra.mxu0 0.0
  %1800 = vmatprep.subr.mxu0 0.0
  %1801 = vmatpush1.msra.mxu0 0.0
  %1802 = vmatprep.subr.mxu0 0.0
  %1803 = vmatpush1.msra.mxu0 0.0
  %1804 = vmatprep.subr.mxu0 0.0
  %1805 = vmatpush1.msra.mxu0 0.0
  %1806 = vmatprep.subr.mxu0 0.0
  %1807 = vmatpush1.msra.mxu0 0.0
  %1808 = vmatprep.subr.mxu0 0.0
  %1809 = vmatpush1.msra.mxu0 0.0
  %1810 = vmatprep.subr.mxu0 0.0
  %1811 = vmatpush1.msra.mxu0 0.0
  %1812 = vmatprep.subr.mxu0 0.0
  %1813 = vmatpush1.msra.mxu0 0.0
  %1814 = vmatprep.subr.mxu0 0.0
  %1815 = vmatpush1.msra.mxu0 0.0
  %1816 = vmatprep.subr.mxu0 0.0
  %1817 = vmatpush1.msra.mxu0 0.0
  %1818 = vmatprep.subr.mxu0 0.0
  %1819 = vmatpush1.msra.mxu0 0.0
  %1820 = vmatprep.subr.mxu0 0.0
  %1821 = vmatpush1.msra.mxu0 0.0
  %1822 = vmatprep.subr.mxu0 0.0
  %1823 = vmatpush1.msra.mxu0 0.0
  %1824 = vmatprep.subr.mxu0 0.0
  %1825 = vmatpush1.msra.mxu0 0.0
  %1826 = vmatprep.subr.mxu0 0.0
  %1827 = vmatpush1.msra.mxu0 0.0
  %1828 = vmatprep.subr.mxu0 0.0
  %1829 = vmatpush1.msra.mxu0 0.0
  %1830 = vmatprep.subr.mxu0 0.0
  %1831 = vmatpush1.msra.mxu0 0.0
  %1832 = vmatprep.subr.mxu0 0.0
  %1833 = vmatpush1.msra.mxu0 0.0
  %1834 = vmatprep.subr.mxu0 0.0
  %1835 = vmatpush1.msra.mxu0 0.0
  %1836 = vmatprep.subr.mxu0 0.0
  %1837 = vmatpush1.msra.mxu0 0.0
  %1838 = vmatprep.subr.mxu0 0.0
  %1839 = vmatpush1.msra.mxu0 0.0
  %1840 = vmatprep.subr.mxu0 0.0
  %1841 = vmatpush1.msra.mxu0 0.0
  %1842 = vmatprep.subr.mxu0 0.0
  %1843 = vmatpush1.msra.mxu0 0.0
  %1844 = vmatprep.subr.mxu0 0.0
  %1845 = vmatpush1.msra.mxu0 0.0
  %1846 = vmatprep.subr.mxu0 0.0
  %1847 = vmatpush1.msra.mxu0 0.0
  %1848 = vmatprep.subr.mxu0 0.0
  %1849 = vmatpush1.msra.mxu0 0.0
  %1850 = vmatprep.subr.mxu0 0.0
  %1851 = vmatpush1.msra.mxu0 0.0
  %1852 = vmatprep.mubr.f32.mxu0 0.0
  %1853 = vmatmul.mubr.f32.gmra.mrb[0].mxu0 %v1786
  %v1854 = vpop.f32.mrb[0].mxu0
  %v1855 = vadd.f32 0.0, %v1854
  %v1856 = vpop.f32.mrb[0].mxu0
  %1857 = vdwg.mxu0
  %v1858 = vadd.f32 %v157, %v1855
  %1859 = vmatprep.subr.mxu0 0.0
  %1860 = vmatpush1.msra.mxu0 %v532
  %1861 = vmatprep.subr.mxu0 0.0
  %1862 = vmatpush1.msra.mxu0 %v533
  %1863 = vmatprep.subr.mxu0 0.0
  %1864 = vmatpush1.msra.mxu0 0.0
  %1865 = vmatprep.subr.mxu0 0.0
  %1866 = vmatpush1.msra.mxu0 0.0
  %1867 = vmatprep.subr.mxu0 0.0
  %1868 = vmatpush1.msra.mxu0 0.0
  %1869 = vmatprep.subr.mxu0 0.0
  %1870 = vmatpush1.msra.mxu0 0.0
  %1871 = vmatprep.subr.mxu0 0.0
  %1872 = vmatpush1.msra.mxu0 0.0
  %1873 = vmatprep.subr.mxu0 0.0
  %1874 = vmatpush1.msra.mxu0 0.0
  %1875 = vmatprep.subr.mxu0 0.0
  %1876 = vmatpush1.msra.mxu0 0.0
  %1877 = vmatprep.subr.mxu0 0.0
  %1878 = vmatpush1.msra.mxu0 0.0
  %1879 = vmatprep.subr.mxu0 0.0
  %1880 = vmatpush1.msra.mxu0 0.0
  %1881 = vmatprep.subr.mxu0 0.0
  %1882 = vmatpush1.msra.mxu0 0.0
  %1883 = vmatprep.subr.mxu0 0.0
  %1884 = vmatpush1.msra.mxu0 0.0
  %1885 = vmatprep.subr.mxu0 0.0
  %1886 = vmatpush1.msra.mxu0 0.0
  %1887 = vmatprep.subr.mxu0 0.0
  %1888 = vmatpush1.msra.mxu0 0.0
  %1889 = vmatprep.subr.mxu0 0.0
  %1890 = vmatpush1.msra.mxu0 0.0
  %1891 = vmatprep.subr.mxu0 0.0
  %1892 = vmatpush1.msra.mxu0 0.0
  %1893 = vmatprep.subr.mxu0 0.0
  %1894 = vmatpush1.msra.mxu0 0.0
  %1895 = vmatprep.subr.mxu0 0.0
  %1896 = vmatpush1.msra.mxu0 0.0
  %1897 = vmatprep.subr.mxu0 0.0
  %1898 = vmatpush1.msra.mxu0 0.0
  %1899 = vmatprep.subr.mxu0 0.0
  %1900 = vmatpush1.msra.mxu0 0.0
  %1901 = vmatprep.subr.mxu0 0.0
  %1902 = vmatpush1.msra.mxu0 0.0
  %1903 = vmatprep.subr.mxu0 0.0
  %1904 = vmatpush1.msra.mxu0 0.0
  %1905 = vmatprep.subr.mxu0 0.0
  %1906 = vmatpush1.msra.mxu0 0.0
  %1907 = vmatprep.subr.mxu0 0.0
  %1908 = vmatpush1.msra.mxu0 0.0
  %1909 = vmatprep.subr.mxu0 0.0
  %1910 = vmatpush1.msra.mxu0 0.0
  %1911 = vmatprep.subr.mxu0 0.0
  %1912 = vmatpush1.msra.mxu0 0.0
  %1913 = vmatprep.subr.mxu0 0.0
  %1914 = vmatpush1.msra.mxu0 0.0
  %1915 = vmatprep.subr.mxu0 0.0
  %1916 = vmatpush1.msra.mxu0 0.0
  %1917 = vmatprep.subr.mxu0 0.0
  %1918 = vmatpush1.msra.mxu0 0.0
  %1919 = vmatprep.subr.mxu0 0.0
  %1920 = vmatpush1.msra.mxu0 0.0
  %1921 = vmatprep.subr.mxu0 0.0
  %1922 = vmatpush1.msra.mxu0 0.0
  %1923 = vmatprep.mubr.f32.mxu0 0.0
  %1924 = vmatmul.mubr.f32.gmra.mrb[0].mxu0 %v1786
  %v1925 = vpop.f32.mrb[0].mxu0
  %v1926 = vadd.f32 0.0, %v1925
  %v1927 = vpop.f32.mrb[0].mxu0
  %1928 = vdwg.mxu0
  %v1929 = vadd.f32 %v275, %v1926
  %1930 = vmatprep.subr.mxu0 0.0
  %1931 = vmatpush1.msra.mxu0 %v535
  %1932 = vmatprep.subr.mxu0 0.0
  %1933 = vmatpush1.msra.mxu0 %v536
  %1934 = vmatprep.subr.mxu0 0.0
  %1935 = vmatpush1.msra.mxu0 0.0
  %1936 = vmatprep.subr.mxu0 0.0
  %1937 = vmatpush1.msra.mxu0 0.0
  %1938 = vmatprep.subr.mxu0 0.0
  %1939 = vmatpush1.msra.mxu0 0.0
  %1940 = vmatprep.subr.mxu0 0.0
  %1941 = vmatpush1.msra.mxu0 0.0
  %1942 = vmatprep.subr.mxu0 0.0
  %1943 = vmatpush1.msra.mxu0 0.0
  %1944 = vmatprep.subr.mxu0 0.0
  %1945 = vmatpush1.msra.mxu0 0.0
  %1946 = vmatprep.subr.mxu0 0.0
  %1947 = vmatpush1.msra.mxu0 0.0
  %1948 = vmatprep.subr.mxu0 0.0
  %1949 = vmatpush1.msra.mxu0 0.0
  %1950 = vmatprep.subr.mxu0 0.0
  %1951 = vmatpush1.msra.mxu0 0.0
  %1952 = vmatprep.subr.mxu0 0.0
  %1953 = vmatpush1.msra.mxu0 0.0
  %1954 = vmatprep.subr.mxu0 0.0
  %1955 = vmatpush1.msra.mxu0 0.0
  %1956 = vmatprep.subr.mxu0 0.0
  %1957 = vmatpush1.msra.mxu0 0.0
  %1958 = vmatprep.subr.mxu0 0.0
  %1959 = vmatpush1.msra.mxu0 0.0
  %1960 = vmatprep.subr.mxu0 0.0
  %1961 = vmatpush1.msra.mxu0 0.0
  %1962 = vmatprep.subr.mxu0 0.0
  %1963 = vmatpush1.msra.mxu0 0.0
  %1964 = vmatprep.subr.mxu0 0.0
  %1965 = vmatpush1.msra.mxu0 0.0
  %1966 = vmatprep.subr.mxu0 0.0
  %1967 = vmatpush1.msra.mxu0 0.0
  %1968 = vmatprep.subr.mxu0 0.0
  %1969 = vmatpush1.msra.mxu0 0.0
  %1970 = vmatprep.subr.mxu0 0.0
  %1971 = vmatpush1.msra.mxu0 0.0
  %1972 = vmatprep.subr.mxu0 0.0
  %1973 = vmatpush1.msra.mxu0 0.0
  %1974 = vmatprep.subr.mxu0 0.0
  %1975 = vmatpush1.msra.mxu0 0.0
  %1976 = vmatprep.subr.mxu0 0.0
  %1977 = vmatpush1.msra.mxu0 0.0
  %1978 = vmatprep.subr.mxu0 0.0
  %1979 = vmatpush1.msra.mxu0 0.0
  %1980 = vmatprep.subr.mxu0 0.0
  %1981 = vmatpush1.msra.mxu0 0.0
  %1982 = vmatprep.subr.mxu0 0.0
  %1983 = vmatpush1.msra.mxu0 0.0
  %1984 = vmatprep.subr.mxu0 0.0
  %1985 = vmatpush1.msra.mxu0 0.0
  %1986 = vmatprep.subr.mxu0 0.0
  %1987 = vmatpush1.msra.mxu0 0.0
  %1988 = vmatprep.subr.mxu0 0.0
  %1989 = vmatpush1.msra.mxu0 0.0
  %1990 = vmatprep.subr.mxu0 0.0
  %1991 = vmatpush1.msra.mxu0 0.0
  %1992 = vmatprep.subr.mxu0 0.0
  %1993 = vmatpush1.msra.mxu0 0.0
  %1994 = vmatprep.mubr.f32.mxu0 0.0
  %1995 = vmatmul.mubr.f32.gmra.mrb[0].mxu0 %v1786
  %v1996 = vpop.f32.mrb[0].mxu0
  %v1997 = vadd.f32 0.0, %v1996
  %v1998 = vpop.f32.mrb[0].mxu0
  %1999 = vdwg.mxu0
  %v2000 = vadd.f32 %v393, %v1997
  %2001 = vmatprep.subr.mxu0 0.0
  %2002 = vmatpush1.msra.mxu0 %v538
  %2003 = vmatprep.subr.mxu0 0.0
  %2004 = vmatpush1.msra.mxu0 %v539
  %2005 = vmatprep.subr.mxu0 0.0
  %2006 = vmatpush1.msra.mxu0 0.0
  %2007 = vmatprep.subr.mxu0 0.0
  %2008 = vmatpush1.msra.mxu0 0.0
  %2009 = vmatprep.subr.mxu0 0.0
  %2010 = vmatpush1.msra.mxu0 0.0
  %2011 = vmatprep.subr.mxu0 0.0
  %2012 = vmatpush1.msra.mxu0 0.0
  %2013 = vmatprep.subr.mxu0 0.0
  %2014 = vmatpush1.msra.mxu0 0.0
  %2015 = vmatprep.subr.mxu0 0.0
  %2016 = vmatpush1.msra.mxu0 0.0
  %2017 = vmatprep.subr.mxu0 0.0
  %2018 = vmatpush1.msra.mxu0 0.0
  %2019 = vmatprep.subr.mxu0 0.0
  %2020 = vmatpush1.msra.mxu0 0.0
  %2021 = vmatprep.subr.mxu0 0.0
  %2022 = vmatpush1.msra.mxu0 0.0
  %2023 = vmatprep.subr.mxu0 0.0
  %2024 = vmatpush1.msra.mxu0 0.0
  %2025 = vmatprep.subr.mxu0 0.0
  %2026 = vmatpush1.msra.mxu0 0.0
  %2027 = vmatprep.subr.mxu0 0.0
  %2028 = vmatpush1.msra.mxu0 0.0
  %2029 = vmatprep.subr.mxu0 0.0
  %2030 = vmatpush1.msra.mxu0 0.0
  %2031 = vmatprep.subr.mxu0 0.0
  %2032 = vmatpush1.msra.mxu0 0.0
  %2033 = vmatprep.subr.mxu0 0.0
  %2034 = vmatpush1.msra.mxu0 0.0
  %2035 = vmatprep.subr.mxu0 0.0
  %2036 = vmatpush1.msra.mxu0 0.0
  %2037 = vmatprep.subr.mxu0 0.0
  %2038 = vmatpush1.msra.mxu0 0.0
  %2039 = vmatprep.subr.mxu0 0.0
  %2040 = vmatpush1.msra.mxu0 0.0
  %2041 = vmatprep.subr.mxu0 0.0
  %2042 = vmatpush1.msra.mxu0 0.0
  %2043 = vmatprep.subr.mxu0 0.0
  %2044 = vmatpush1.msra.mxu0 0.0
  %2045 = vmatprep.subr.mxu0 0.0
  %2046 = vmatpush1.msra.mxu0 0.0
  %2047 = vmatprep.subr.mxu0 0.0
  %2048 = vmatpush1.msra.mxu0 0.0
  %2049 = vmatprep.subr.mxu0 0.0
  %2050 = vmatpush1.msra.mxu0 0.0
  %2051 = vmatprep.subr.mxu0 0.0
  %2052 = vmatpush1.msra.mxu0 0.0
  %2053 = vmatprep.subr.mxu0 0.0
  %2054 = vmatpush1.msra.mxu0 0.0
  %2055 = vmatprep.subr.mxu0 0.0
  %2056 = vmatpush1.msra.mxu0 0.0
  %2057 = vmatprep.subr.mxu0 0.0
  %2058 = vmatpush1.msra.mxu0 0.0
  %2059 = vmatprep.subr.mxu0 0.0
  %2060 = vmatpush1.msra.mxu0 0.0
  %2061 = vmatprep.subr.mxu0 0.0
  %2062 = vmatpush1.msra.mxu0 0.0
  %2063 = vmatprep.subr.mxu0 0.0
  %2064 = vmatpush1.msra.mxu0 0.0
  %2065 = vmatprep.mubr.f32.mxu0 0.0
  %2066 = vmatmul.mubr.f32.gmra.mrb[0].mxu0 %v1786
  %v2067 = vpop.f32.mrb[0].mxu0
  %v2068 = vadd.f32 0.0, %v2067
  %v2069 = vpop.f32.mrb[0].mxu0
  %2070 = vdwg.mxu0
  %v2071 = vadd.f32 %v511, %v2068
  %v2072 = vxor.u32 %v1858, 2147483648
  %v2073 = vmul.f32 %v2072, 1.442695
  %v2074 = vpow.pop %v2073
  %v2075 = vadd.f32 %v2074, 1.0
  %v2076 = vrcp.pop %v2075
  %v2077 = vmul.f32 1.0, %v2076
  %v2078 = vxor.u32 %v1929, 2147483648
  %v2079 = vmul.f32 %v2078, 1.442695
  %v2080 = vpow.pop %v2079
  %v2081 = vadd.f32 %v2080, 1.0
  %v2082 = vrcp.pop %v2081
  %v2083 = vmul.f32 1.0, %v2082
  %v2084 = vtanh.pop %v2000
  %v2085 = vxor.u32 %v2071, 2147483648
  %v2086 = vmul.f32 %v2085, 1.442695
  %v2087 = vpow.pop %v2086
  %v2088 = vadd.f32 %v2087, 1.0
  %v2089 = vrcp.pop %v2088
  %v2090 = vmul.f32 1.0, %v2089
  %v2091 = vmul.f32 %v2083, %v1782
  %v2092 = vmul.f32 %v2077, %v2084
  %v2093 = vadd.f32 %v2091, %v2092
  %v2094 = vtanh.pop %v2093
  %v2095 = vmul.f32 %v2090, %v2094
  %v2097 = vsel %vm540, %v2095, 0
  %2099 = vmatprep.subr.mxu0 0.0
  %2100 = vmatpush1.msra.mxu0 %v529
  %2101 = vmatprep.subr.mxu0 0.0
  %2102 = vmatpush1.msra.mxu0 %v530
  %2103 = vmatprep.subr.mxu0 0.0
  %2104 = vmatpush1.msra.mxu0 0.0
  %2105 = vmatprep.subr.mxu0 0.0
  %2106 = vmatpush1.msra.mxu0 0.0
  %2107 = vmatprep.subr.mxu0 0.0
  %2108 = vmatpush1.msra.mxu0 0.0
  %2109 = vmatprep.subr.mxu0 0.0
  %2110 = vmatpush1.msra.mxu0 0.0
  %2111 = vmatprep.subr.mxu0 0.0
  %2112 = vmatpush1.msra.mxu0 0.0
  %2113 = vmatprep.subr.mxu0 0.0
  %2114 = vmatpush1.msra.mxu0 0.0
  %2115 = vmatprep.subr.mxu0 0.0
  %2116 = vmatpush1.msra.mxu0 0.0
  %2117 = vmatprep.subr.mxu0 0.0
  %2118 = vmatpush1.msra.mxu0 0.0
  %2119 = vmatprep.subr.mxu0 0.0
  %2120 = vmatpush1.msra.mxu0 0.0
  %2121 = vmatprep.subr.mxu0 0.0
  %2122 = vmatpush1.msra.mxu0 0.0
  %2123 = vmatprep.subr.mxu0 0.0
  %2124 = vmatpush1.msra.mxu0 0.0
  %2125 = vmatprep.subr.mxu0 0.0
  %2126 = vmatpush1.msra.mxu0 0.0
  %2127 = vmatprep.subr.mxu0 0.0
  %2128 = vmatpush1.msra.mxu0 0.0
  %2129 = vmatprep.subr.mxu0 0.0
  %2130 = vmatpush1.msra.mxu0 0.0
  %2131 = vmatprep.subr.mxu0 0.0
  %2132 = vmatpush1.msra.mxu0 0.0
  %2133 = vmatprep.subr.mxu0 0.0
  %2134 = vmatpush1.msra.mxu0 0.0
  %2135 = vmatprep.subr.mxu0 0.0
  %2136 = vmatpush1.msra.mxu0 0.0
  %2137 = vmatprep.subr.mxu0 0.0
  %2138 = vmatpush1.msra.mxu0 0.0
  %2139 = vmatprep.subr.mxu0 0.0
  %2140 = vmatpush1.msra.mxu0 0.0
  %2141 = vmatprep.subr.mxu0 0.0
  %2142 = vmatpush1.msra.mxu0 0.0
  %2143 = vmatprep.subr.mxu0 0.0
  %2144 = vmatpush1.msra.mxu0 0.0
  %2145 = vmatprep.subr.mxu0 0.0
  %2146 = vmatpush1.msra.mxu0 0.0
  %2147 = vmatprep.subr.mxu0 0.0
  %2148 = vmatpush1.msra.mxu0 0.0
  %2149 = vmatprep.subr.mxu0 0.0
  %2150 = vmatpush1.msra.mxu0 0.0
  %2151 = vmatprep.subr.mxu0 0.0
  %2152 = vmatpush1.msra.mxu0 0.0
  %2153 = vmatprep.subr.mxu0 0.0
  %2154 = vmatpush1.msra.mxu0 0.0
  %2155 = vmatprep.subr.mxu0 0.0
  %2156 = vmatpush1.msra.mxu0 0.0
  %2157 = vmatprep.subr.mxu0 0.0
  %2158 = vmatpush1.msra.mxu0 0.0
  %2159 = vmatprep.subr.mxu0 0.0
  %2160 = vmatpush1.msra.mxu0 0.0
  %2161 = vmatprep.subr.mxu0 0.0
  %2162 = vmatpush1.msra.mxu0 0.0
  %2163 = vmatprep.mubr.f32.mxu0 0.0
  %2164 = vmatmul.mubr.f32.gmra.mrb[0].mxu0 %v2097
  %v2165 = vpop.f32.mrb[0].mxu0
  %v2166 = vadd.f32 0.0, %v2165
  %v2167 = vpop.f32.mrb[0].mxu0
  %2168 = vdwg.mxu0
  %v2169 = vadd.f32 %v162, %v2166
  %2170 = vmatprep.subr.mxu0 0.0
  %2171 = vmatpush1.msra.mxu0 %v532
  %2172 = vmatprep.subr.mxu0 0.0
  %2173 = vmatpush1.msra.mxu0 %v533
  %2174 = vmatprep.subr.mxu0 0.0
  %2175 = vmatpush1.msra.mxu0 0.0
  %2176 = vmatprep.subr.mxu0 0.0
  %2177 = vmatpush1.msra.mxu0 0.0
  %2178 = vmatprep.subr.mxu0 0.0
  %2179 = vmatpush1.msra.mxu0 0.0
  %2180 = vmatprep.subr.mxu0 0.0
  %2181 = vmatpush1.msra.mxu0 0.0
  %2182 = vmatprep.subr.mxu0 0.0
  %2183 = vmatpush1.msra.mxu0 0.0
  %2184 = vmatprep.subr.mxu0 0.0
  %2185 = vmatpush1.msra.mxu0 0.0
  %2186 = vmatprep.subr.mxu0 0.0
  %2187 = vmatpush1.msra.mxu0 0.0
  %2188 = vmatprep.subr.mxu0 0.0
  %2189 = vmatpush1.msra.mxu0 0.0
  %2190 = vmatprep.subr.mxu0 0.0
  %2191 = vmatpush1.msra.mxu0 0.0
  %2192 = vmatprep.subr.mxu0 0.0
  %2193 = vmatpush1.msra.mxu0 0.0
  %2194 = vmatprep.subr.mxu0 0.0
  %2195 = vmatpush1.msra.mxu0 0.0
  %2196 = vmatprep.subr.mxu0 0.0
  %2197 = vmatpush1.msra.mxu0 0.0
  %2198 = vmatprep.subr.mxu0 0.0
  %2199 = vmatpush1.msra.mxu0 0.0
  %2200 = vmatprep.subr.mxu0 0.0
  %2201 = vmatpush1.msra.mxu0 0.0
  %2202 = vmatprep.subr.mxu0 0.0
  %2203 = vmatpush1.msra.mxu0 0.0
  %2204 = vmatprep.subr.mxu0 0.0
  %2205 = vmatpush1.msra.mxu0 0.0
  %2206 = vmatprep.subr.mxu0 0.0
  %2207 = vmatpush1.msra.mxu0 0.0
  %2208 = vmatprep.subr.mxu0 0.0
  %2209 = vmatpush1.msra.mxu0 0.0
  %2210 = vmatprep.subr.mxu0 0.0
  %2211 = vmatpush1.msra.mxu0 0.0
  %2212 = vmatprep.subr.mxu0 0.0
  %2213 = vmatpush1.msra.mxu0 0.0
  %2214 = vmatprep.subr.mxu0 0.0
  %2215 = vmatpush1.msra.mxu0 0.0
  %2216 = vmatprep.subr.mxu0 0.0
  %2217 = vmatpush1.msra.mxu0 0.0
  %2218 = vmatprep.subr.mxu0 0.0
  %2219 = vmatpush1.msra.mxu0 0.0
  %2220 = vmatprep.subr.mxu0 0.0
  %2221 = vmatpush1.msra.mxu0 0.0
  %2222 = vmatprep.subr.mxu0 0.0
  %2223 = vmatpush1.msra.mxu0 0.0
  %2224 = vmatprep.subr.mxu0 0.0
  %2225 = vmatpush1.msra.mxu0 0.0
  %2226 = vmatprep.subr.mxu0 0.0
  %2227 = vmatpush1.msra.mxu0 0.0
  %2228 = vmatprep.subr.mxu0 0.0
  %2229 = vmatpush1.msra.mxu0 0.0
  %2230 = vmatprep.subr.mxu0 0.0
  %2231 = vmatpush1.msra.mxu0 0.0
  %2232 = vmatprep.subr.mxu0 0.0
  %2233 = vmatpush1.msra.mxu0 0.0
  %2234 = vmatprep.mubr.f32.mxu0 0.0
  %2235 = vmatmul.mubr.f32.gmra.mrb[0].mxu0 %v2097
  %v2236 = vpop.f32.mrb[0].mxu0
  %v2237 = vadd.f32 0.0, %v2236
  %v2238 = vpop.f32.mrb[0].mxu0
  %2239 = vdwg.mxu0
  %v2240 = vadd.f32 %v280, %v2237
  %2241 = vmatprep.subr.mxu0 0.0
  %2242 = vmatpush1.msra.mxu0 %v535
  %2243 = vmatprep.subr.mxu0 0.0
  %2244 = vmatpush1.msra.mxu0 %v536
  %2245 = vmatprep.subr.mxu0 0.0
  %2246 = vmatpush1.msra.mxu0 0.0
  %2247 = vmatprep.subr.mxu0 0.0
  %2248 = vmatpush1.msra.mxu0 0.0
  %2249 = vmatprep.subr.mxu0 0.0
  %2250 = vmatpush1.msra.mxu0 0.0
  %2251 = vmatprep.subr.mxu0 0.0
  %2252 = vmatpush1.msra.mxu0 0.0
  %2253 = vmatprep.subr.mxu0 0.0
  %2254 = vmatpush1.msra.mxu0 0.0
  %2255 = vmatprep.subr.mxu0 0.0
  %2256 = vmatpush1.msra.mxu0 0.0
  %2257 = vmatprep.subr.mxu0 0.0
  %2258 = vmatpush1.msra.mxu0 0.0
  %2259 = vmatprep.subr.mxu0 0.0
  %2260 = vmatpush1.msra.mxu0 0.0
  %2261 = vmatprep.subr.mxu0 0.0
  %2262 = vmatpush1.msra.mxu0 0.0
  %2263 = vmatprep.subr.mxu0 0.0
  %2264 = vmatpush1.msra.mxu0 0.0
  %2265 = vmatprep.subr.mxu0 0.0
  %2266 = vmatpush1.msra.mxu0 0.0
  %2267 = vmatprep.subr.mxu0 0.0
  %2268 = vmatpush1.msra.mxu0 0.0
  %2269 = vmatprep.subr.mxu0 0.0
  %2270 = vmatpush1.msra.mxu0 0.0
  %2271 = vmatprep.subr.mxu0 0.0
  %2272 = vmatpush1.msra.mxu0 0.0
  %2273 = vmatprep.subr.mxu0 0.0
  %2274 = vmatpush1.msra.mxu0 0.0
  %2275 = vmatprep.subr.mxu0 0.0
  %2276 = vmatpush1.msra.mxu0 0.0
  %2277 = vmatprep.subr.mxu0 0.0
  %2278 = vmatpush1.msra.mxu0 0.0
  %2279 = vmatprep.subr.mxu0 0.0
  %2280 = vmatpush1.msra.mxu0 0.0
  %2281 = vmatprep.subr.mxu0 0.0
  %2282 = vmatpush1.msra.mxu0 0.0
  %2283 = vmatprep.subr.mxu0 0.0
  %2284 = vmatpush1.msra.mxu0 0.0
  %2285 = vmatprep.subr.mxu0 0.0
  %2286 = vmatpush1.msra.mxu0 0.0
  %2287 = vmatprep.subr.mxu0 0.0
  %2288 = vmatpush1.msra.mxu0 0.0
  %2289 = vmatprep.subr.mxu0 0.0
  %2290 = vmatpush1.msra.mxu0 0.0
  %2291 = vmatprep.subr.mxu0 0.0
  %2292 = vmatpush1.msra.mxu0 0.0
  %2293 = vmatprep.subr.mxu0 0.0
  %2294 = vmatpush1.msra.mxu0 0.0
  %2295 = vmatprep.subr.mxu0 0.0
  %2296 = vmatpush1.msra.mxu0 0.0
  %2297 = vmatprep.subr.mxu0 0.0
  %2298 = vmatpush1.msra.mxu0 0.0
  %2299 = vmatprep.subr.mxu0 0.0
  %2300 = vmatpush1.msra.mxu0 0.0
  %2301 = vmatprep.subr.mxu0 0.0
  %2302 = vmatpush1.msra.mxu0 0.0
  %2303 = vmatprep.subr.mxu0 0.0
  %2304 = vmatpush1.msra.mxu0 0.0
  %2305 = vmatprep.mubr.f32.mxu0 0.0
  %2306 = vmatmul.mubr.f32.gmra.mrb[0].mxu0 %v2097
  %v2307 = vpop.f32.mrb[0].mxu0
  %v2308 = vadd.f32 0.0, %v2307
  %v2309 = vpop.f32.mrb[0].mxu0
  %2310 = vdwg.mxu0
  %v2311 = vadd.f32 %v398, %v2308
  %2312 = vmatprep.subr.mxu0 0.0
  %2313 = vmatpush1.msra.mxu0 %v538
  %2314 = vmatprep.subr.mxu0 0.0
  %2315 = vmatpush1.msra.mxu0 %v539
  %2316 = vmatprep.subr.mxu0 0.0
  %2317 = vmatpush1.msra.mxu0 0.0
  %2318 = vmatprep.subr.mxu0 0.0
  %2319 = vmatpush1.msra.mxu0 0.0
  %2320 = vmatprep.subr.mxu0 0.0
  %2321 = vmatpush1.msra.mxu0 0.0
  %2322 = vmatprep.subr.mxu0 0.0
  %2323 = vmatpush1.msra.mxu0 0.0
  %2324 = vmatprep.subr.mxu0 0.0
  %2325 = vmatpush1.msra.mxu0 0.0
  %2326 = vmatprep.subr.mxu0 0.0
  %2327 = vmatpush1.msra.mxu0 0.0
  %2328 = vmatprep.subr.mxu0 0.0
  %2329 = vmatpush1.msra.mxu0 0.0
  %2330 = vmatprep.subr.mxu0 0.0
  %2331 = vmatpush1.msra.mxu0 0.0
  %2332 = vmatprep.subr.mxu0 0.0
  %2333 = vmatpush1.msra.mxu0 0.0
  %2334 = vmatprep.subr.mxu0 0.0
  %2335 = vmatpush1.msra.mxu0 0.0
  %2336 = vmatprep.subr.mxu0 0.0
  %2337 = vmatpush1.msra.mxu0 0.0
  %2338 = vmatprep.subr.mxu0 0.0
  %2339 = vmatpush1.msra.mxu0 0.0
  %2340 = vmatprep.subr.mxu0 0.0
  %2341 = vmatpush1.msra.mxu0 0.0
  %2342 = vmatprep.subr.mxu0 0.0
  %2343 = vmatpush1.msra.mxu0 0.0
  %2344 = vmatprep.subr.mxu0 0.0
  %2345 = vmatpush1.msra.mxu0 0.0
  %2346 = vmatprep.subr.mxu0 0.0
  %2347 = vmatpush1.msra.mxu0 0.0
  %2348 = vmatprep.subr.mxu0 0.0
  %2349 = vmatpush1.msra.mxu0 0.0
  %2350 = vmatprep.subr.mxu0 0.0
  %2351 = vmatpush1.msra.mxu0 0.0
  %2352 = vmatprep.subr.mxu0 0.0
  %2353 = vmatpush1.msra.mxu0 0.0
  %2354 = vmatprep.subr.mxu0 0.0
  %2355 = vmatpush1.msra.mxu0 0.0
  %2356 = vmatprep.subr.mxu0 0.0
  %2357 = vmatpush1.msra.mxu0 0.0
  %2358 = vmatprep.subr.mxu0 0.0
  %2359 = vmatpush1.msra.mxu0 0.0
  %2360 = vmatprep.subr.mxu0 0.0
  %2361 = vmatpush1.msra.mxu0 0.0
  %2362 = vmatprep.subr.mxu0 0.0
  %2363 = vmatpush1.msra.mxu0 0.0
  %2364 = vmatprep.subr.mxu0 0.0
  %2365 = vmatpush1.msra.mxu0 0.0
  %2366 = vmatprep.subr.mxu0 0.0
  %2367 = vmatpush1.msra.mxu0 0.0
  %2368 = vmatprep.subr.mxu0 0.0
  %2369 = vmatpush1.msra.mxu0 0.0
  %2370 = vmatprep.subr.mxu0 0.0
  %2371 = vmatpush1.msra.mxu0 0.0
  %2372 = vmatprep.subr.mxu0 0.0
  %2373 = vmatpush1.msra.mxu0 0.0
  %2374 = vmatprep.subr.mxu0 0.0
  %2375 = vmatpush1.msra.mxu0 0.0
  %2376 = vmatprep.mubr.f32.mxu0 0.0
  %2377 = vmatmul.mubr.f32.gmra.mrb[0].mxu0 %v2097
  %v2378 = vpop.f32.mrb[0].mxu0
  %v2379 = vadd.f32 0.0, %v2378
  %v2380 = vpop.f32.mrb[0].mxu0
  %2381 = vdwg.mxu0
  %v2382 = vadd.f32 %v516, %v2379
  %v2383 = vxor.u32 %v2169, 2147483648
  %v2384 = vmul.f32 %v2383, 1.442695
  %v2385 = vpow.pop %v2384
  %v2386 = vadd.f32 %v2385, 1.0
  %v2387 = vrcp.pop %v2386
  %v2388 = vmul.f32 1.0, %v2387
  %v2389 = vxor.u32 %v2240, 2147483648
  %v2390 = vmul.f32 %v2389, 1.442695
  %v2391 = vpow.pop %v2390
  %v2392 = vadd.f32 %v2391, 1.0
  %v2393 = vrcp.pop %v2392
  %v2394 = vmul.f32 1.0, %v2393
  %v2395 = vtanh.pop %v2311
  %v2396 = vxor.u32 %v2382, 2147483648
  %v2397 = vmul.f32 %v2396, 1.442695
  %v2398 = vpow.pop %v2397
  %v2399 = vadd.f32 %v2398, 1.0
  %v2400 = vrcp.pop %v2399
  %v2401 = vmul.f32 1.0, %v2400
  %v2402 = vmul.f32 %v2394, %v2093
  %v2403 = vmul.f32 %v2388, %v2395
  %v2404 = vadd.f32 %v2402, %v2403
  %v2405 = vtanh.pop %v2404
  %v2406 = vmul.f32 %v2401, %v2405
  %v2408 = vsel %vm540, %v2406, 0
  %2410 = vmatprep.subr.mxu0 0.0
  %2411 = vmatpush1.msra.mxu0 %v529
  %2412 = vmatprep.subr.mxu0 0.0
  %2413 = vmatpush1.msra.mxu0 %v530
  %2414 = vmatprep.subr.mxu0 0.0
  %2415 = vmatpush1.msra.mxu0 0.0
  %2416 = vmatprep.subr.mxu0 0.0
  %2417 = vmatpush1.msra.mxu0 0.0
  %2418 = vmatprep.subr.mxu0 0.0
  %2419 = vmatpush1.msra.mxu0 0.0
  %2420 = vmatprep.subr.mxu0 0.0
  %2421 = vmatpush1.msra.mxu0 0.0
  %2422 = vmatprep.subr.mxu0 0.0
  %2423 = vmatpush1.msra.mxu0 0.0
  %2424 = vmatprep.subr.mxu0 0.0
  %2425 = vmatpush1.msra.mxu0 0.0
  %2426 = vmatprep.subr.mxu0 0.0
  %2427 = vmatpush1.msra.mxu0 0.0
  %2428 = vmatprep.subr.mxu0 0.0
  %2429 = vmatpush1.msra.mxu0 0.0
  %2430 = vmatprep.subr.mxu0 0.0
  %2431 = vmatpush1.msra.mxu0 0.0
  %2432 = vmatprep.subr.mxu0 0.0
  %2433 = vmatpush1.msra.mxu0 0.0
  %2434 = vmatprep.subr.mxu0 0.0
  %2435 = vmatpush1.msra.mxu0 0.0
  %2436 = vmatprep.subr.mxu0 0.0
  %2437 = vmatpush1.msra.mxu0 0.0
  %2438 = vmatprep.subr.mxu0 0.0
  %2439 = vmatpush1.msra.mxu0 0.0
  %2440 = vmatprep.subr.mxu0 0.0
  %2441 = vmatpush1.msra.mxu0 0.0
  %2442 = vmatprep.subr.mxu0 0.0
  %2443 = vmatpush1.msra.mxu0 0.0
  %2444 = vmatprep.subr.mxu0 0.0
  %2445 = vmatpush1.msra.mxu0 0.0
  %2446 = vmatprep.subr.mxu0 0.0
  %2447 = vmatpush1.msra.mxu0 0.0
  %2448 = vmatprep.subr.mxu0 0.0
  %2449 = vmatpush1.msra.mxu0 0.0
  %2450 = vmatprep.subr.mxu0 0.0
  %2451 = vmatpush1.msra.mxu0 0.0
  %2452 = vmatprep.subr.mxu0 0.0
  %2453 = vmatpush1.msra.mxu0 0.0
  %2454 = vmatprep.subr.mxu0 0.0
  %2455 = vmatpush1.msra.mxu0 0.0
  %2456 = vmatprep.subr.mxu0 0.0
  %2457 = vmatpush1.msra.mxu0 0.0
  %2458 = vmatprep.subr.mxu0 0.0
  %2459 = vmatpush1.msra.mxu0 0.0
  %2460 = vmatprep.subr.mxu0 0.0
  %2461 = vmatpush1.msra.mxu0 0.0
  %2462 = vmatprep.subr.mxu0 0.0
  %2463 = vmatpush1.msra.mxu0 0.0
  %2464 = vmatprep.subr.mxu0 0.0
  %2465 = vmatpush1.msra.mxu0 0.0
  %2466 = vmatprep.subr.mxu0 0.0
  %2467 = vmatpush1.msra.mxu0 0.0
  %2468 = vmatprep.subr.mxu0 0.0
  %2469 = vmatpush1.msra.mxu0 0.0
  %2470 = vmatprep.subr.mxu0 0.0
  %2471 = vmatpush1.msra.mxu0 0.0
  %2472 = vmatprep.subr.mxu0 0.0
  %2473 = vmatpush1.msra.mxu0 0.0
  %2474 = vmatprep.mubr.f32.mxu0 0.0
  %2475 = vmatmul.mubr.f32.gmra.mrb[0].mxu0 %v2408
  %v2476 = vpop.f32.mrb[0].mxu0
  %v2477 = vadd.f32 0.0, %v2476
  %v2478 = vpop.f32.mrb[0].mxu0
  %2479 = vdwg.mxu0
  %v2480 = vadd.f32 %v167, %v2477
  %2481 = vmatprep.subr.mxu0 0.0
  %2482 = vmatpush1.msra.mxu0 %v532
  %2483 = vmatprep.subr.mxu0 0.0
  %2484 = vmatpush1.msra.mxu0 %v533
  %2485 = vmatprep.subr.mxu0 0.0
  %2486 = vmatpush1.msra.mxu0 0.0
  %2487 = vmatprep.subr.mxu0 0.0
  %2488 = vmatpush1.msra.mxu0 0.0
  %2489 = vmatprep.subr.mxu0 0.0
  %2490 = vmatpush1.msra.mxu0 0.0
  %2491 = vmatprep.subr.mxu0 0.0
  %2492 = vmatpush1.msra.mxu0 0.0
  %2493 = vmatprep.subr.mxu0 0.0
  %2494 = vmatpush1.msra.mxu0 0.0
  %2495 = vmatprep.subr.mxu0 0.0
  %2496 = vmatpush1.msra.mxu0 0.0
  %2497 = vmatprep.subr.mxu0 0.0
  %2498 = vmatpush1.msra.mxu0 0.0
  %2499 = vmatprep.subr.mxu0 0.0
  %2500 = vmatpush1.msra.mxu0 0.0
  %2501 = vmatprep.subr.mxu0 0.0
  %2502 = vmatpush1.msra.mxu0 0.0
  %2503 = vmatprep.subr.mxu0 0.0
  %2504 = vmatpush1.msra.mxu0 0.0
  %2505 = vmatprep.subr.mxu0 0.0
  %2506 = vmatpush1.msra.mxu0 0.0
  %2507 = vmatprep.subr.mxu0 0.0
  %2508 = vmatpush1.msra.mxu0 0.0
  %2509 = vmatprep.subr.mxu0 0.0
  %2510 = vmatpush1.msra.mxu0 0.0
  %2511 = vmatprep.subr.mxu0 0.0
  %2512 = vmatpush1.msra.mxu0 0.0
  %2513 = vmatprep.subr.mxu0 0.0
  %2514 = vmatpush1.msra.mxu0 0.0
  %2515 = vmatprep.subr.mxu0 0.0
  %2516 = vmatpush1.msra.mxu0 0.0
  %2517 = vmatprep.subr.mxu0 0.0
  %2518 = vmatpush1.msra.mxu0 0.0
  %2519 = vmatprep.subr.mxu0 0.0
  %2520 = vmatpush1.msra.mxu0 0.0
  %2521 = vmatprep.subr.mxu0 0.0
  %2522 = vmatpush1.msra.mxu0 0.0
  %2523 = vmatprep.subr.mxu0 0.0
  %2524 = vmatpush1.msra.mxu0 0.0
  %2525 = vmatprep.subr.mxu0 0.0
  %2526 = vmatpush1.msra.mxu0 0.0
  %2527 = vmatprep.subr.mxu0 0.0
  %2528 = vmatpush1.msra.mxu0 0.0
  %2529 = vmatprep.subr.mxu0 0.0
  %2530 = vmatpush1.msra.mxu0 0.0
  %2531 = vmatprep.subr.mxu0 0.0
  %2532 = vmatpush1.msra.mxu0 0.0
  %2533 = vmatprep.subr.mxu0 0.0
  %2534 = vmatpush1.msra.mxu0 0.0
  %2535 = vmatprep.subr.mxu0 0.0
  %2536 = vmatpush1.msra.mxu0 0.0
  %2537 = vmatprep.subr.mxu0 0.0
  %2538 = vmatpush1.msra.mxu0 0.0
  %2539 = vmatprep.subr.mxu0 0.0
  %2540 = vmatpush1.msra.mxu0 0.0
  %2541 = vmatprep.subr.mxu0 0.0
  %2542 = vmatpush1.msra.mxu0 0.0
  %2543 = vmatprep.subr.mxu0 0.0
  %2544 = vmatpush1.msra.mxu0 0.0
  %2545 = vmatprep.mubr.f32.mxu0 0.0
  %2546 = vmatmul.mubr.f32.gmra.mrb[0].mxu0 %v2408
  %v2547 = vpop.f32.mrb[0].mxu0
  %v2548 = vadd.f32 0.0, %v2547
  %v2549 = vpop.f32.mrb[0].mxu0
  %2550 = vdwg.mxu0
  %v2551 = vadd.f32 %v285, %v2548
  %2552 = vmatprep.subr.mxu0 0.0
  %2553 = vmatpush1.msra.mxu0 %v535
  %2554 = vmatprep.subr.mxu0 0.0
  %2555 = vmatpush1.msra.mxu0 %v536
  %2556 = vmatprep.subr.mxu0 0.0
  %2557 = vmatpush1.msra.mxu0 0.0
  %2558 = vmatprep.subr.mxu0 0.0
  %2559 = vmatpush1.msra.mxu0 0.0
  %2560 = vmatprep.subr.mxu0 0.0
  %2561 = vmatpush1.msra.mxu0 0.0
  %2562 = vmatprep.subr.mxu0 0.0
  %2563 = vmatpush1.msra.mxu0 0.0
  %2564 = vmatprep.subr.mxu0 0.0
  %2565 = vmatpush1.msra.mxu0 0.0
  %2566 = vmatprep.subr.mxu0 0.0
  %2567 = vmatpush1.msra.mxu0 0.0
  %2568 = vmatprep.subr.mxu0 0.0
  %2569 = vmatpush1.msra.mxu0 0.0
  %2570 = vmatprep.subr.mxu0 0.0
  %2571 = vmatpush1.msra.mxu0 0.0
  %2572 = vmatprep.subr.mxu0 0.0
  %2573 = vmatpush1.msra.mxu0 0.0
  %2574 = vmatprep.subr.mxu0 0.0
  %2575 = vmatpush1.msra.mxu0 0.0
  %2576 = vmatprep.subr.mxu0 0.0
  %2577 = vmatpush1.msra.mxu0 0.0
  %2578 = vmatprep.subr.mxu0 0.0
  %2579 = vmatpush1.msra.mxu0 0.0
  %2580 = vmatprep.subr.mxu0 0.0
  %2581 = vmatpush1.msra.mxu0 0.0
  %2582 = vmatprep.subr.mxu0 0.0
  %2583 = vmatpush1.msra.mxu0 0.0
  %2584 = vmatprep.subr.mxu0 0.0
  %2585 = vmatpush1.msra.mxu0 0.0
  %2586 = vmatprep.subr.mxu0 0.0
  %2587 = vmatpush1.msra.mxu0 0.0
  %2588 = vmatprep.subr.mxu0 0.0
  %2589 = vmatpush1.msra.mxu0 0.0
  %2590 = vmatprep.subr.mxu0 0.0
  %2591 = vmatpush1.msra.mxu0 0.0
  %2592 = vmatprep.subr.mxu0 0.0
  %2593 = vmatpush1.msra.mxu0 0.0
  %2594 = vmatprep.subr.mxu0 0.0
  %2595 = vmatpush1.msra.mxu0 0.0
  %2596 = vmatprep.subr.mxu0 0.0
  %2597 = vmatpush1.msra.mxu0 0.0
  %2598 = vmatprep.subr.mxu0 0.0
  %2599 = vmatpush1.msra.mxu0 0.0
  %2600 = vmatprep.subr.mxu0 0.0
  %2601 = vmatpush1.msra.mxu0 0.0
  %2602 = vmatprep.subr.mxu0 0.0
  %2603 = vmatpush1.msra.mxu0 0.0
  %2604 = vmatprep.subr.mxu0 0.0
  %2605 = vmatpush1.msra.mxu0 0.0
  %2606 = vmatprep.subr.mxu0 0.0
  %2607 = vmatpush1.msra.mxu0 0.0
  %2608 = vmatprep.subr.mxu0 0.0
  %2609 = vmatpush1.msra.mxu0 0.0
  %2610 = vmatprep.subr.mxu0 0.0
  %2611 = vmatpush1.msra.mxu0 0.0
  %2612 = vmatprep.subr.mxu0 0.0
  %2613 = vmatpush1.msra.mxu0 0.0
  %2614 = vmatprep.subr.mxu0 0.0
  %2615 = vmatpush1.msra.mxu0 0.0
  %2616 = vmatprep.mubr.f32.mxu0 0.0
  %2617 = vmatmul.mubr.f32.gmra.mrb[0].mxu0 %v2408
  %v2618 = vpop.f32.mrb[0].mxu0
  %v2619 = vadd.f32 0.0, %v2618
  %v2620 = vpop.f32.mrb[0].mxu0
  %2621 = vdwg.mxu0
  %v2622 = vadd.f32 %v403, %v2619
  %2623 = vmatprep.subr.mxu0 0.0
  %2624 = vmatpush1.msra.mxu0 %v538
  %2625 = vmatprep.subr.mxu0 0.0
  %2626 = vmatpush1.msra.mxu0 %v539
  %2627 = vmatprep.subr.mxu0 0.0
  %2628 = vmatpush1.msra.mxu0 0.0
  %2629 = vmatprep.subr.mxu0 0.0
  %2630 = vmatpush1.msra.mxu0 0.0
  %2631 = vmatprep.subr.mxu0 0.0
  %2632 = vmatpush1.msra.mxu0 0.0
  %2633 = vmatprep.subr.mxu0 0.0
  %2634 = vmatpush1.msra.mxu0 0.0
  %2635 = vmatprep.subr.mxu0 0.0
  %2636 = vmatpush1.msra.mxu0 0.0
  %2637 = vmatprep.subr.mxu0 0.0
  %2638 = vmatpush1.msra.mxu0 0.0
  %2639 = vmatprep.subr.mxu0 0.0
  %2640 = vmatpush1.msra.mxu0 0.0
  %2641 = vmatprep.subr.mxu0 0.0
  %2642 = vmatpush1.msra.mxu0 0.0
  %2643 = vmatprep.subr.mxu0 0.0
  %2644 = vmatpush1.msra.mxu0 0.0
  %2645 = vmatprep.subr.mxu0 0.0
  %2646 = vmatpush1.msra.mxu0 0.0
  %2647 = vmatprep.subr.mxu0 0.0
  %2648 = vmatpush1.msra.mxu0 0.0
  %2649 = vmatprep.subr.mxu0 0.0
  %2650 = vmatpush1.msra.mxu0 0.0
  %2651 = vmatprep.subr.mxu0 0.0
  %2652 = vmatpush1.msra.mxu0 0.0
  %2653 = vmatprep.subr.mxu0 0.0
  %2654 = vmatpush1.msra.mxu0 0.0
  %2655 = vmatprep.subr.mxu0 0.0
  %2656 = vmatpush1.msra.mxu0 0.0
  %2657 = vmatprep.subr.mxu0 0.0
  %2658 = vmatpush1.msra.mxu0 0.0
  %2659 = vmatprep.subr.mxu0 0.0
  %2660 = vmatpush1.msra.mxu0 0.0
  %2661 = vmatprep.subr.mxu0 0.0
  %2662 = vmatpush1.msra.mxu0 0.0
  %2663 = vmatprep.subr.mxu0 0.0
  %2664 = vmatpush1.msra.mxu0 0.0
  %2665 = vmatprep.subr.mxu0 0.0
  %2666 = vmatpush1.msra.mxu0 0.0
  %2667 = vmatprep.subr.mxu0 0.0
  %2668 = vmatpush1.msra.mxu0 0.0
  %2669 = vmatprep.subr.mxu0 0.0
  %2670 = vmatpush1.msra.mxu0 0.0
  %2671 = vmatprep.subr.mxu0 0.0
  %2672 = vmatpush1.msra.mxu0 0.0
  %2673 = vmatprep.subr.mxu0 0.0
  %2674 = vmatpush1.msra.mxu0 0.0
  %2675 = vmatprep.subr.mxu0 0.0
  %2676 = vmatpush1.msra.mxu0 0.0
  %2677 = vmatprep.subr.mxu0 0.0
  %2678 = vmatpush1.msra.mxu0 0.0
  %2679 = vmatprep.subr.mxu0 0.0
  %2680 = vmatpush1.msra.mxu0 0.0
  %2681 = vmatprep.subr.mxu0 0.0
  %2682 = vmatpush1.msra.mxu0 0.0
  %2683 = vmatprep.subr.mxu0 0.0
  %2684 = vmatpush1.msra.mxu0 0.0
  %2685 = vmatprep.subr.mxu0 0.0
  %2686 = vmatpush1.msra.mxu0 0.0
  %2687 = vmatprep.mubr.f32.mxu0 0.0
  %2688 = vmatmul.mubr.f32.gmra.mrb[0].mxu0 %v2408
  %v2689 = vpop.f32.mrb[0].mxu0
  %v2690 = vadd.f32 0.0, %v2689
  %v2691 = vpop.f32.mrb[0].mxu0
  %2692 = vdwg.mxu0
  %v2693 = vadd.f32 %v521, %v2690
  %v2694 = vxor.u32 %v2480, 2147483648
  %v2695 = vmul.f32 %v2694, 1.442695
  %v2696 = vpow.pop %v2695
  %v2697 = vadd.f32 %v2696, 1.0
  %v2698 = vrcp.pop %v2697
  %v2699 = vmul.f32 1.0, %v2698
  %v2700 = vxor.u32 %v2551, 2147483648
  %v2701 = vmul.f32 %v2700, 1.442695
  %v2702 = vpow.pop %v2701
  %v2703 = vadd.f32 %v2702, 1.0
  %v2704 = vrcp.pop %v2703
  %v2705 = vmul.f32 1.0, %v2704
  %v2706 = vtanh.pop %v2622
  %v2707 = vxor.u32 %v2693, 2147483648
  %v2708 = vmul.f32 %v2707, 1.442695
  %v2709 = vpow.pop %v2708
  %v2710 = vadd.f32 %v2709, 1.0
  %v2711 = vrcp.pop %v2710
  %v2712 = vmul.f32 1.0, %v2711
  %v2713 = vmul.f32 %v2705, %v2404
  %v2714 = vmul.f32 %v2699, %v2706
  %v2715 = vadd.f32 %v2713, %v2714
  %v2716 = vtanh.pop %v2715
  %v2717 = vmul.f32 %v2712, %v2716
  %v2719 = vsel %vm540, %v2717, 0
  %2721 = vmatprep.subr.mxu0 0.0
  %2722 = vmatpush1.msra.mxu0 %v529
  %2723 = vmatprep.subr.mxu0 0.0
  %2724 = vmatpush1.msra.mxu0 %v530
  %2725 = vmatprep.subr.mxu0 0.0
  %2726 = vmatpush1.msra.mxu0 0.0
  %2727 = vmatprep.subr.mxu0 0.0
  %2728 = vmatpush1.msra.mxu0 0.0
  %2729 = vmatprep.subr.mxu0 0.0
  %2730 = vmatpush1.msra.mxu0 0.0
  %2731 = vmatprep.subr.mxu0 0.0
  %2732 = vmatpush1.msra.mxu0 0.0
  %2733 = vmatprep.subr.mxu0 0.0
  %2734 = vmatpush1.msra.mxu0 0.0
  %2735 = vmatprep.subr.mxu0 0.0
  %2736 = vmatpush1.msra.mxu0 0.0
  %2737 = vmatprep.subr.mxu0 0.0
  %2738 = vmatpush1.msra.mxu0 0.0
  %2739 = vmatprep.subr.mxu0 0.0
  %2740 = vmatpush1.msra.mxu0 0.0
  %2741 = vmatprep.subr.mxu0 0.0
  %2742 = vmatpush1.msra.mxu0 0.0
  %2743 = vmatprep.subr.mxu0 0.0
  %2744 = vmatpush1.msra.mxu0 0.0
  %2745 = vmatprep.subr.mxu0 0.0
  %2746 = vmatpush1.msra.mxu0 0.0
  %2747 = vmatprep.subr.mxu0 0.0
  %2748 = vmatpush1.msra.mxu0 0.0
  %2749 = vmatprep.subr.mxu0 0.0
  %2750 = vmatpush1.msra.mxu0 0.0
  %2751 = vmatprep.subr.mxu0 0.0
  %2752 = vmatpush1.msra.mxu0 0.0
  %2753 = vmatprep.subr.mxu0 0.0
  %2754 = vmatpush1.msra.mxu0 0.0
  %2755 = vmatprep.subr.mxu0 0.0
  %2756 = vmatpush1.msra.mxu0 0.0
  %2757 = vmatprep.subr.mxu0 0.0
  %2758 = vmatpush1.msra.mxu0 0.0
  %2759 = vmatprep.subr.mxu0 0.0
  %2760 = vmatpush1.msra.mxu0 0.0
  %2761 = vmatprep.subr.mxu0 0.0
  %2762 = vmatpush1.msra.mxu0 0.0
  %2763 = vmatprep.subr.mxu0 0.0
  %2764 = vmatpush1.msra.mxu0 0.0
  %2765 = vmatprep.subr.mxu0 0.0
  %2766 = vmatpush1.msra.mxu0 0.0
  %2767 = vmatprep.subr.mxu0 0.0
  %2768 = vmatpush1.msra.mxu0 0.0
  %2769 = vmatprep.subr.mxu0 0.0
  %2770 = vmatpush1.msra.mxu0 0.0
  %2771 = vmatprep.subr.mxu0 0.0
  %2772 = vmatpush1.msra.mxu0 0.0
  %2773 = vmatprep.subr.mxu0 0.0
  %2774 = vmatpush1.msra.mxu0 0.0
  %2775 = vmatprep.subr.mxu0 0.0
  %2776 = vmatpush1.msra.mxu0 0.0
  %2777 = vmatprep.subr.mxu0 0.0
  %2778 = vmatpush1.msra.mxu0 0.0
  %2779 = vmatprep.subr.mxu0 0.0
  %2780 = vmatpush1.msra.mxu0 0.0
  %2781 = vmatprep.subr.mxu0 0.0
  %2782 = vmatpush1.msra.mxu0 0.0
  %2783 = vmatprep.subr.mxu0 0.0
  %2784 = vmatpush1.msra.mxu0 0.0
  %2785 = vmatprep.mubr.f32.mxu0 0.0
  %2786 = vmatmul.mubr.f32.gmra.mrb[0].mxu0 %v2719
  %v2787 = vpop.f32.mrb[0].mxu0
  %v2788 = vadd.f32 0.0, %v2787
  %v2789 = vpop.f32.mrb[0].mxu0
  %2790 = vdwg.mxu0
  %v2791 = vadd.f32 %v172, %v2788
  %2792 = vmatprep.subr.mxu0 0.0
  %2793 = vmatpush1.msra.mxu0 %v532
  %2794 = vmatprep.subr.mxu0 0.0
  %2795 = vmatpush1.msra.mxu0 %v533
  %2796 = vmatprep.subr.mxu0 0.0
  %2797 = vmatpush1.msra.mxu0 0.0
  %2798 = vmatprep.subr.mxu0 0.0
  %2799 = vmatpush1.msra.mxu0 0.0
  %2800 = vmatprep.subr.mxu0 0.0
  %2801 = vmatpush1.msra.mxu0 0.0
  %2802 = vmatprep.subr.mxu0 0.0
  %2803 = vmatpush1.msra.mxu0 0.0
  %2804 = vmatprep.subr.mxu0 0.0
  %2805 = vmatpush1.msra.mxu0 0.0
  %2806 = vmatprep.subr.mxu0 0.0
  %2807 = vmatpush1.msra.mxu0 0.0
  %2808 = vmatprep.subr.mxu0 0.0
  %2809 = vmatpush1.msra.mxu0 0.0
  %2810 = vmatprep.subr.mxu0 0.0
  %2811 = vmatpush1.msra.mxu0 0.0
  %2812 = vmatprep.subr.mxu0 0.0
  %2813 = vmatpush1.msra.mxu0 0.0
  %2814 = vmatprep.subr.mxu0 0.0
  %2815 = vmatpush1.msra.mxu0 0.0
  %2816 = vmatprep.subr.mxu0 0.0
  %2817 = vmatpush1.msra.mxu0 0.0
  %2818 = vmatprep.subr.mxu0 0.0
  %2819 = vmatpush1.msra.mxu0 0.0
  %2820 = vmatprep.subr.mxu0 0.0
  %2821 = vmatpush1.msra.mxu0 0.0
  %2822 = vmatprep.subr.mxu0 0.0
  %2823 = vmatpush1.msra.mxu0 0.0
  %2824 = vmatprep.subr.mxu0 0.0
  %2825 = vmatpush1.msra.mxu0 0.0
  %2826 = vmatprep.subr.mxu0 0.0
  %2827 = vmatpush1.msra.mxu0 0.0
  %2828 = vmatprep.subr.mxu0 0.0
  %2829 = vmatpush1.msra.mxu0 0.0
  %2830 = vmatprep.subr.mxu0 0.0
  %2831 = vmatpush1.msra.mxu0 0.0
  %2832 = vmatprep.subr.mxu0 0.0
  %2833 = vmatpush1.msra.mxu0 0.0
  %2834 = vmatprep.subr.mxu0 0.0
  %2835 = vmatpush1.msra.mxu0 0.0
  %2836 = vmatprep.subr.mxu0 0.0
  %2837 = vmatpush1.msra.mxu0 0.0
  %2838 = vmatprep.subr.mxu0 0.0
  %2839 = vmatpush1.msra.mxu0 0.0
  %2840 = vmatprep.subr.mxu0 0.0
  %2841 = vmatpush1.msra.mxu0 0.0
  %2842 = vmatprep.subr.mxu0 0.0
  %2843 = vmatpush1.msra.mxu0 0.0
  %2844 = vmatprep.subr.mxu0 0.0
  %2845 = vmatpush1.msra.mxu0 0.0
  %2846 = vmatprep.subr.mxu0 0.0
  %2847 = vmatpush1.msra.mxu0 0.0
  %2848 = vmatprep.subr.mxu0 0.0
  %2849 = vmatpush1.msra.mxu0 0.0
  %2850 = vmatprep.subr.mxu0 0.0
  %2851 = vmatpush1.msra.mxu0 0.0
  %2852 = vmatprep.subr.mxu0 0.0
  %2853 = vmatpush1.msra.mxu0 0.0
  %2854 = vmatprep.subr.mxu0 0.0
  %2855 = vmatpush1.msra.mxu0 0.0
  %2856 = vmatprep.mubr.f32.mxu0 0.0
  %2857 = vmatmul.mubr.f32.gmra.mrb[0].mxu0 %v2719
  %v2858 = vpop.f32.mrb[0].mxu0
  %v2859 = vadd.f32 0.0, %v2858
  %v2860 = vpop.f32.mrb[0].mxu0
  %2861 = vdwg.mxu0
  %v2862 = vadd.f32 %v290, %v2859
  %2863 = vmatprep.subr.mxu0 0.0
  %2864 = vmatpush1.msra.mxu0 %v535
  %2865 = vmatprep.subr.mxu0 0.0
  %2866 = vmatpush1.msra.mxu0 %v536
  %2867 = vmatprep.subr.mxu0 0.0
  %2868 = vmatpush1.msra.mxu0 0.0
  %2869 = vmatprep.subr.mxu0 0.0
  %2870 = vmatpush1.msra.mxu0 0.0
  %2871 = vmatprep.subr.mxu0 0.0
  %2872 = vmatpush1.msra.mxu0 0.0
  %2873 = vmatprep.subr.mxu0 0.0
  %2874 = vmatpush1.msra.mxu0 0.0
  %2875 = vmatprep.subr.mxu0 0.0
  %2876 = vmatpush1.msra.mxu0 0.0
  %2877 = vmatprep.subr.mxu0 0.0
  %2878 = vmatpush1.msra.mxu0 0.0
  %2879 = vmatprep.subr.mxu0 0.0
  %2880 = vmatpush1.msra.mxu0 0.0
  %2881 = vmatprep.subr.mxu0 0.0
  %2882 = vmatpush1.msra.mxu0 0.0
  %2883 = vmatprep.subr.mxu0 0.0
  %2884 = vmatpush1.msra.mxu0 0.0
  %2885 = vmatprep.subr.mxu0 0.0
  %2886 = vmatpush1.msra.mxu0 0.0
  %2887 = vmatprep.subr.mxu0 0.0
  %2888 = vmatpush1.msra.mxu0 0.0
  %2889 = vmatprep.subr.mxu0 0.0
  %2890 = vmatpush1.msra.mxu0 0.0
  %2891 = vmatprep.subr.mxu0 0.0
  %2892 = vmatpush1.msra.mxu0 0.0
  %2893 = vmatprep.subr.mxu0 0.0
  %2894 = vmatpush1.msra.mxu0 0.0
  %2895 = vmatprep.subr.mxu0 0.0
  %2896 = vmatpush1.msra.mxu0 0.0
  %2897 = vmatprep.subr.mxu0 0.0
  %2898 = vmatpush1.msra.mxu0 0.0
  %2899 = vmatprep.subr.mxu0 0.0
  %2900 = vmatpush1.msra.mxu0 0.0
  %2901 = vmatprep.subr.mxu0 0.0
  %2902 = vmatpush1.msra.mxu0 0.0
  %2903 = vmatprep.subr.mxu0 0.0
  %2904 = vmatpush1.msra.mxu0 0.0
  %2905 = vmatprep.subr.mxu0 0.0
  %2906 = vmatpush1.msra.mxu0 0.0
  %2907 = vmatprep.subr.mxu0 0.0
  %2908 = vmatpush1.msra.mxu0 0.0
  %2909 = vmatprep.subr.mxu0 0.0
  %2910 = vmatpush1.msra.mxu0 0.0
  %2911 = vmatprep.subr.mxu0 0.0
  %2912 = vmatpush1.msra.mxu0 0.0
  %2913 = vmatprep.subr.mxu0 0.0
  %2914 = vmatpush1.msra.mxu0 0.0
  %2915 = vmatprep.subr.mxu0 0.0
  %2916 = vmatpush1.msra.mxu0 0.0
  %2917 = vmatprep.subr.mxu0 0.0
  %2918 = vmatpush1.msra.mxu0 0.0
  %2919 = vmatprep.subr.mxu0 0.0
  %2920 = vmatpush1.msra.mxu0 0.0
  %2921 = vmatprep.subr.mxu0 0.0
  %2922 = vmatpush1.msra.mxu0 0.0
  %2923 = vmatprep.subr.mxu0 0.0
  %2924 = vmatpush1.msra.mxu0 0.0
  %2925 = vmatprep.subr.mxu0 0.0
  %2926 = vmatpush1.msra.mxu0 0.0
  %2927 = vmatprep.mubr.f32.mxu0 0.0
  %2928 = vmatmul.mubr.f32.gmra.mrb[0].mxu0 %v2719
  %v2929 = vpop.f32.mrb[0].mxu0
  %v2930 = vadd.f32 0.0, %v2929
  %v2931 = vpop.f32.mrb[0].mxu0
  %2932 = vdwg.mxu0
  %v2933 = vadd.f32 %v408, %v2930
  %2934 = vmatprep.subr.mxu0 0.0
  %2935 = vmatpush1.msra.mxu0 %v538
  %2936 = vmatprep.subr.mxu0 0.0
  %2937 = vmatpush1.msra.mxu0 %v539
  %2938 = vmatprep.subr.mxu0 0.0
  %2939 = vmatpush1.msra.mxu0 0.0
  %2940 = vmatprep.subr.mxu0 0.0
  %2941 = vmatpush1.msra.mxu0 0.0
  %2942 = vmatprep.subr.mxu0 0.0
  %2943 = vmatpush1.msra.mxu0 0.0
  %2944 = vmatprep.subr.mxu0 0.0
  %2945 = vmatpush1.msra.mxu0 0.0
  %2946 = vmatprep.subr.mxu0 0.0
  %2947 = vmatpush1.msra.mxu0 0.0
  %2948 = vmatprep.subr.mxu0 0.0
  %2949 = vmatpush1.msra.mxu0 0.0
  %2950 = vmatprep.subr.mxu0 0.0
  %2951 = vmatpush1.msra.mxu0 0.0
  %2952 = vmatprep.subr.mxu0 0.0
  %2953 = vmatpush1.msra.mxu0 0.0
  %2954 = vmatprep.subr.mxu0 0.0
  %2955 = vmatpush1.msra.mxu0 0.0
  %2956 = vmatprep.subr.mxu0 0.0
  %2957 = vmatpush1.msra.mxu0 0.0
  %2958 = vmatprep.subr.mxu0 0.0
  %2959 = vmatpush1.msra.mxu0 0.0
  %2960 = vmatprep.subr.mxu0 0.0
  %2961 = vmatpush1.msra.mxu0 0.0
  %2962 = vmatprep.subr.mxu0 0.0
  %2963 = vmatpush1.msra.mxu0 0.0
  %2964 = vmatprep.subr.mxu0 0.0
  %2965 = vmatpush1.msra.mxu0 0.0
  %2966 = vmatprep.subr.mxu0 0.0
  %2967 = vmatpush1.msra.mxu0 0.0
  %2968 = vmatprep.subr.mxu0 0.0
  %2969 = vmatpush1.msra.mxu0 0.0
  %2970 = vmatprep.subr.mxu0 0.0
  %2971 = vmatpush1.msra.mxu0 0.0
  %2972 = vmatprep.subr.mxu0 0.0
  %2973 = vmatpush1.msra.mxu0 0.0
  %2974 = vmatprep.subr.mxu0 0.0
  %2975 = vmatpush1.msra.mxu0 0.0
  %2976 = vmatprep.subr.mxu0 0.0
  %2977 = vmatpush1.msra.mxu0 0.0
  %2978 = vmatprep.subr.mxu0 0.0
  %2979 = vmatpush1.msra.mxu0 0.0
  %2980 = vmatprep.subr.mxu0 0.0
  %2981 = vmatpush1.msra.mxu0 0.0
  %2982 = vmatprep.subr.mxu0 0.0
  %2983 = vmatpush1.msra.mxu0 0.0
  %2984 = vmatprep.subr.mxu0 0.0
  %2985 = vmatpush1.msra.mxu0 0.0
  %2986 = vmatprep.subr.mxu0 0.0
  %2987 = vmatpush1.msra.mxu0 0.0
  %2988 = vmatprep.subr.mxu0 0.0
  %2989 = vmatpush1.msra.mxu0 0.0
  %2990 = vmatprep.subr.mxu0 0.0
  %2991 = vmatpush1.msra.mxu0 0.0
  %2992 = vmatprep.subr.mxu0 0.0
  %2993 = vmatpush1.msra.mxu0 0.0
  %2994 = vmatprep.subr.mxu0 0.0
  %2995 = vmatpush1.msra.mxu0 0.0
  %2996 = vmatprep.subr.mxu0 0.0
  %2997 = vmatpush1.msra.mxu0 0.0
  %2998 = vmatprep.mubr.f32.mxu0 0.0
  %2999 = vmatmul.mubr.f32.gmra.mrb[0].mxu0 %v2719
  %v3000 = vpop.f32.mrb[0].mxu0
  %v3001 = vadd.f32 0.0, %v3000
  %v3002 = vpop.f32.mrb[0].mxu0
  %3003 = vdwg.mxu0
  %v3004 = vadd.f32 %v526, %v3001
  %v3005 = vxor.u32 %v2791, 2147483648
  %v3006 = vmul.f32 %v3005, 1.442695
  %v3007 = vpow.pop %v3006
  %v3008 = vadd.f32 %v3007, 1.0
  %v3009 = vrcp.pop %v3008
  %v3010 = vmul.f32 1.0, %v3009
  %v3011 = vxor.u32 %v2862, 2147483648
  %v3012 = vmul.f32 %v3011, 1.442695
  %v3013 = vpow.pop %v3012
  %v3014 = vadd.f32 %v3013, 1.0
  %v3015 = vrcp.pop %v3014
  %v3016 = vmul.f32 1.0, %v3015
  %v3017 = vtanh.pop %v2933
  %v3018 = vxor.u32 %v3004, 2147483648
  %v3019 = vmul.f32 %v3018, 1.442695
  %v3020 = vpow.pop %v3019
  %v3021 = vadd.f32 %v3020, 1.0
  %v3022 = vrcp.pop %v3021
  %v3023 = vmul.f32 1.0, %v3022
  %v3024 = vmul.f32 %v3016, %v2715
  %v3025 = vmul.f32 %v3010, %v3017
  %v3026 = vadd.f32 %v3024, %v3025
  %v3027 = vtanh.pop %v3026
  %v3028 = vmul.f32 %v3023, %v3027
  %v3029 = vld [vmem:[%s4] sm:$0xff]
  %v3030 = vld [vmem:[%s4 + $0x8] sm:$0xff]
  %v3031 = vld [vmem:[#allocation2] sm:$0x1]
  %v3033 = vlaneseq
  %v3034 = vshrl.u32 %v3033, 7
  %v3035 = vsub.s32 0, %v3034
  %v3036 = vrot.slane %v3031, %v3035
  %3037 = vset.pattern.permute.xlu0 0
  %3038 = vperm.xlu0 %3037, %v3036
  %v3039 = vpop.permute.xlu0 %3038
  %v3042 = vsel %vm540, %v3028, 0
  %3044 = vmatprep.subr.mxu0 0.0
  %3045 = vmatpush1.msra.mxu0 %v3029
  %3046 = vmatprep.subr.mxu0 0.0
  %3047 = vmatpush1.msra.mxu0 %v3030
  %3048 = vmatprep.subr.mxu0 0.0
  %3049 = vmatpush1.msra.mxu0 0.0
  %3050 = vmatprep.subr.mxu0 0.0
  %3051 = vmatpush1.msra.mxu0 0.0
  %3052 = vmatprep.subr.mxu0 0.0
  %3053 = vmatpush1.msra.mxu0 0.0
  %3054 = vmatprep.subr.mxu0 0.0
  %3055 = vmatpush1.msra.mxu0 0.0
  %3056 = vmatprep.subr.mxu0 0.0
  %3057 = vmatpush1.msra.mxu0 0.0
  %3058 = vmatprep.subr.mxu0 0.0
  %3059 = vmatpush1.msra.mxu0 0.0
  %3060 = vmatprep.subr.mxu0 0.0
  %3061 = vmatpush1.msra.mxu0 0.0
  %3062 = vmatprep.subr.mxu0 0.0
  %3063 = vmatpush1.msra.mxu0 0.0
  %3064 = vmatprep.subr.mxu0 0.0
  %3065 = vmatpush1.msra.mxu0 0.0
  %3066 = vmatprep.subr.mxu0 0.0
  %3067 = vmatpush1.msra.mxu0 0.0
  %3068 = vmatprep.subr.mxu0 0.0
  %3069 = vmatpush1.msra.mxu0 0.0
  %3070 = vmatprep.subr.mxu0 0.0
  %3071 = vmatpush1.msra.mxu0 0.0
  %3072 = vmatprep.subr.mxu0 0.0
  %3073 = vmatpush1.msra.mxu0 0.0
  %3074 = vmatprep.subr.mxu0 0.0
  %3075 = vmatpush1.msra.mxu0 0.0
  %3076 = vmatprep.subr.mxu0 0.0
  %3077 = vmatpush1.msra.mxu0 0.0
  %3078 = vmatprep.subr.mxu0 0.0
  %3079 = vmatpush1.msra.mxu0 0.0
  %3080 = vmatprep.subr.mxu0 0.0
  %3081 = vmatpush1.msra.mxu0 0.0
  %3082 = vmatprep.subr.mxu0 0.0
  %3083 = vmatpush1.msra.mxu0 0.0
  %3084 = vmatprep.subr.mxu0 0.0
  %3085 = vmatpush1.msra.mxu0 0.0
  %3086 = vmatprep.subr.mxu0 0.0
  %3087 = vmatpush1.msra.mxu0 0.0
  %3088 = vmatprep.subr.mxu0 0.0
  %3089 = vmatpush1.msra.mxu0 0.0
  %3090 = vmatprep.subr.mxu0 0.0
  %3091 = vmatpush1.msra.mxu0 0.0
  %3092 = vmatprep.subr.mxu0 0.0
  %3093 = vmatpush1.msra.mxu0 0.0
  %3094 = vmatprep.subr.mxu0 0.0
  %3095 = vmatpush1.msra.mxu0 0.0
  %3096 = vmatprep.subr.mxu0 0.0
  %3097 = vmatpush1.msra.mxu0 0.0
  %3098 = vmatprep.subr.mxu0 0.0
  %3099 = vmatpush1.msra.mxu0 0.0
  %3100 = vmatprep.subr.mxu0 0.0
  %3101 = vmatpush1.msra.mxu0 0.0
  %3102 = vmatprep.subr.mxu0 0.0
  %3103 = vmatpush1.msra.mxu0 0.0
  %3104 = vmatprep.subr.mxu0 0.0
  %3105 = vmatpush1.msra.mxu0 0.0
  %3106 = vmatprep.subr.mxu0 0.0
  %3107 = vmatpush1.msra.mxu0 0.0
  %3108 = vmatprep.mubr.f32.mxu0 0.0
  %3109 = vmatmul.mubr.f32.gmra.mrb[0].mxu0 %v3042
  %v3110 = vpop.f32.mrb[0].mxu0
  %v3111 = vadd.f32 %v3039, %v3110
  %v3112 = vpop.f32.mrb[0].mxu0
  %3113 = vdwg.mxu0
  %3114 = vst [vmem:[%s6] sm:$0xff] %v3111
  // Predicated region
  $region26: #{multi_feature_lstm_forward.1} parent=0 // pred_check
    _
  $region27: #{multi_feature_lstm_forward.1} parent=0 // pred_check_branch
    %3116 = sbr.rel (0) target = $region29
  $region28: #{multi_feature_lstm_forward.1} parent=0 // pred_region
    _
  $region29: #{multi_feature_lstm_forward.1} parent=0 // pred_fallthru
    _
  // Predicated region
  $region30: #{multi_feature_lstm_forward.1} parent=0 // pred_check
    _
  $region31: #{multi_feature_lstm_forward.1} parent=0 // pred_check_branch
    %3118 = sbr.rel (0) target = $region33
  $region32: #{multi_feature_lstm_forward.1} parent=0 // pred_region
    _
  $region33: #{multi_feature_lstm_forward.1} parent=0 // pred_fallthru
    _

</llo_original>
